<compile_context>
chip_gen: v7x
topology: tpu7x:2x2x1
jax: 0.10.0
libtpu: 0.0.40
codegen_flags: <defaults>
</compile_context>

<pallas_src>
import numpy as np

import jax
import jax.numpy as jnp
from jax.experimental import pallas as pl
from jax.experimental.pallas import tpu as pltpu


# ----------------------------------------------------------------------------
# LeNet-5 geometry (28x28x1 input, as implied by the PyTorch module)
# ----------------------------------------------------------------------------
_H0, _W0 = 28, 28
_K1, _C1 = 5, 6       # conv1: 1 -> 6,   5x5 -> 24x24, pool -> 12x12
_K3, _C3 = 5, 16      # conv3: 6 -> 16,  5x5 -> 8x8,   pool -> 4x4
_K5, _C5 = 4, 120     # conv5: 16 -> 120, 4x4 -> 1x1

_H1, _W1 = _H0 - _K1 + 1, _W0 - _K1 + 1      # 24, 24
_H2, _W2 = _H1 // 2, _W1 // 2                # 12, 12
_H3, _W3 = _H2 - _K3 + 1, _W2 - _K3 + 1      # 8, 8
_H4, _W4 = _H3 // 2, _W3 // 2                # 4, 4

# Per-image flattened (row-major) activation lengths, zero-padded so that a
# conv tap slice [off, off + Ho*W) with off up to (k-1)*W + (k-1) stays in
# bounds.
_L0 = _H0 * _W0 + (_K1 - 1) * _W0 + (_K1 - 1)    # 788
_L2 = _H2 * _W2 + (_K3 - 1) * _W2 + (_K3 - 1)    # 196
_L4 = 32                                         # >= 16 + 15

_S1 = _H1 * _W0    # 672 columns of flattened conv1 output (valid x < 24)
_S3 = _H3 * _W2    # 96  columns of flattened conv3 output (valid x < 8)
_S5 = _W4          # 4   columns of flattened conv5 output (valid x < 1)


def _pool_matrix(ho, wo, w_in, l_out):
    """Constant (ho*w_in, l_out) matrix performing 2x2/stride-2 average
    pooling of a flattened conv output (row width w_in, valid width wo),
    emitting the pooled map row-major with width wo//2, zero-padded to
    l_out columns (= next conv's padded input layout)."""
    q = np.zeros((ho * w_in, l_out), np.float32)
    h2, w2 = ho // 2, wo // 2
    for y2 in range(h2):
        for x2 in range(w2):
            col = y2 * w2 + x2
            for i in range(2):
                for j in range(2):
                    q[(2 * y2 + i) * w_in + (2 * x2 + j), col] = 0.25
    return q


_Q1 = _pool_matrix(_H1, _W1, _W0, _L2)   # (672, 196)
_Q2 = _pool_matrix(_H3, _W3, _W2, _L4)   # (96, 32)


# ----------------------------------------------------------------------------
# Fused Pallas kernel: conv1+tanh+pool -> conv3+tanh+pool -> conv5+tanh
#                      -> fc6+tanh -> fc7
# ----------------------------------------------------------------------------
def _lenet5_kernel(x_ref, w1_ref, b1_ref, q1_ref, w3_ref, b3_ref, q2_ref,
                   w5_ref, b5_ref, w6_ref, b6_ref, w7_ref, b7_ref, out_ref):
    f32 = jnp.float32
    x = x_ref[...]                       # (B, 788) zero-padded flat images
    q1 = q1_ref[...]                     # (672, 196) pool-after-conv1
    q2 = q2_ref[...]                     # (96, 32)   pool-after-conv3
    w1, b1 = w1_ref[...], b1_ref[...]    # (6, 25),    (6, 1)
    w3, b3 = w3_ref[...], b3_ref[...]    # (16, 150),  (16, 1)
    w5, b5 = w5_ref[...], b5_ref[...]    # (120, 256), (120, 1)
    w6, b6 = w6_ref[...], b6_ref[...]    # (84, 120),  (84, 1)
    w7, b7 = w7_ref[...], b7_ref[...]    # (10, 84),   (10, 1)

    def conv_tanh(a, w, bias, k, w_in, n_cols):
        # a: (Cin, L) flattened padded activation.  Build the tap matrix with
        # static lane slices (in-kernel im2col) and do one lane-dense GEMM.
        taps = jnp.concatenate(
            [a[:, dy * w_in + dx: dy * w_in + dx + n_cols]
             for dy in range(k) for dx in range(k)],
            axis=0)                                            # (Cin*k*k, n_cols)
        return jnp.tanh(jnp.dot(w, taps, preferred_element_type=f32) + bias)

    feats = []
    for b in range(x.shape[0]):          # tiny batch: statically unrolled
        a0 = x[b:b + 1, :]                                     # (1, 788)
        t1 = conv_tanh(a0, w1, b1, _K1, _W0, _S1)              # (6, 672)
        p1 = jnp.dot(t1, q1, preferred_element_type=f32)       # (6, 196)
        t3 = conv_tanh(p1, w3, b3, _K3, _W2, _S3)              # (16, 96)
        p3 = jnp.dot(t3, q2, preferred_element_type=f32)       # (16, 32)
        t5 = conv_tanh(p3, w5, b5, _K5, _W4, _S5)              # (120, 4)
        feats.append(t5[:, 0:1])                               # 1x1 spatial -> (120, 1)

    f = feats[0] if len(feats) == 1 else jnp.concatenate(feats, axis=1)  # (120, B)
    h6 = jnp.tanh(jnp.dot(w6, f, preferred_element_type=f32) + b6)       # (84, B)
    logits = jnp.dot(w7, h6, preferred_element_type=f32) + b7            # (10, B)
    out_ref[...] = logits.astype(out_ref.dtype)


# ----------------------------------------------------------------------------
# Wrapper
# ----------------------------------------------------------------------------
def lenet5_forward(params, x):
    # x: (B, 1, 28, 28) float32, NCHW (matching the PyTorch module).
    B = x.shape[0]
    # Layout plumbing only: flatten + zero-pad the input, reshape the weights
    # tap-major (kh, kw, cin) to match the in-kernel tap-matrix row order,
    # biases as column vectors.
    xf = jnp.pad(x.reshape(B, _H0 * _W0), ((0, 0), (0, _L0 - _H0 * _W0)))
    w1 = params["conv1_w"].reshape(_C1, _K1 * _K1)
    w3 = params["conv3_w"].transpose(0, 2, 3, 1).reshape(_C3, _K3 * _K3 * _C1)
    w5 = params["conv5_w"].transpose(0, 2, 3, 1).reshape(_C5, _K5 * _K5 * _C3)
    col = lambda v: v.reshape(-1, 1)

    args = (xf,
            w1, col(params["conv1_b"]), jnp.asarray(_Q1),
            w3, col(params["conv3_b"]), jnp.asarray(_Q2),
            w5, col(params["conv5_b"]),
            params["fc6_w"], col(params["fc6_b"]),
            params["fc7_w"], col(params["fc7_b"]))

    out = pl.pallas_call(
        _lenet5_kernel,
        out_shape=jax.ShapeDtypeStruct((10, B), jnp.float32),
        in_specs=[pl.BlockSpec(memory_space=pltpu.MemorySpace.VMEM)] * len(args),
        out_specs=pl.BlockSpec(memory_space=pltpu.MemorySpace.VMEM),
    )(*args)
    return out.T                         # (B, 10)


# ----------------------------------------------------------------------------
# Parameters (deterministic, PyTorch-default-style uniform init)
# ----------------------------------------------------------------------------
def init_params(key):
    ks = jax.random.split(key, 10)

    def u(k, shape, fan_in):
        bound = 1.0 / jnp.sqrt(jnp.float32(fan_in))
        return jax.random.uniform(k, shape, jnp.float32, -bound, bound)

    return {
        "conv1_w": u(ks[0], (6, 1, 5, 5), 1 * 5 * 5),
        "conv1_b": u(ks[1], (6,), 1 * 5 * 5),
        "conv3_w": u(ks[2], (16, 6, 5, 5), 6 * 5 * 5),
        "conv3_b": u(ks[3], (16,), 6 * 5 * 5),
        "conv5_w": u(ks[4], (120, 16, 4, 4), 16 * 4 * 4),
        "conv5_b": u(ks[5], (120,), 16 * 4 * 4),
        "fc6_w": u(ks[6], (84, 120), 120),
        "fc6_b": u(ks[7], (84,), 120),
        "fc7_w": u(ks[8], (10, 84), 84),
        "fc7_b": u(ks[9], (10,), 84),
    }


# Pure-JAX reference (for a loose numerical sanity check only)
def _reference_forward(params, x):
    dn = ("NCHW", "OIHW", "NCHW")

    def conv(v, w, b):
        y = jax.lax.conv_general_dilated(v, w, (1, 1), "VALID",
                                         dimension_numbers=dn)
        return jnp.tanh(y + b.reshape(1, -1, 1, 1))

    def pool(v):
        B, C, H, W = v.shape
        return v.reshape(B, C, H // 2, 2, W // 2, 2).mean(axis=(3, 5))

    v = pool(conv(x, params["conv1_w"], params["conv1_b"]))
    v = pool(conv(v, params["conv3_w"], params["conv3_b"]))
    v = conv(v, params["conv5_w"], params["conv5_b"]).reshape(x.shape[0], -1)
    v = jnp.tanh(v @ params["fc6_w"].T + params["fc6_b"])
    return v @ params["fc7_w"].T + params["fc7_b"]


if __name__ == "__main__":
    key = jax.random.PRNGKey(0)
    k_x, k_p = jax.random.split(key)
    # LeNet-5 geometry requires 28x28 single-channel input (conv5 -> 1x1).
    x = jax.random.normal(k_x, (2, 1, 28, 28), dtype=jnp.float32)
    params = init_params(k_p)

    fwd = jax.jit(lenet5_forward)
    out = fwd(params, x)
    jax.block_until_ready(out)
    assert out.shape == (2, 10), out.shape

    ref = _reference_forward(params, x)
    max_err = float(jnp.max(jnp.abs(out - ref)))
    # Loose tolerance: MXU matmul passes vs XLA conv may differ slightly.
    assert max_err < 2e-2, f"kernel/reference mismatch, max abs err {max_err}"
    print("KERNEL_OK")
</pallas_src>

<mosaic_0001>
module attributes {stable_mosaic.version = 11 : i64} {
  func.func @_lenet5_kernel(%arg0: memref<2x900xf32, #tpu.memory_space<vmem>>, %arg1: memref<6x25xf32, #tpu.memory_space<vmem>>, %arg2: memref<6x1xf32, #tpu.memory_space<vmem>>, %arg3: memref<672x196xf32, #tpu.memory_space<vmem>>, %arg4: memref<16x150xf32, #tpu.memory_space<vmem>>, %arg5: memref<16x1xf32, #tpu.memory_space<vmem>>, %arg6: memref<96x32xf32, #tpu.memory_space<vmem>>, %arg7: memref<120x256xf32, #tpu.memory_space<vmem>>, %arg8: memref<120x1xf32, #tpu.memory_space<vmem>>, %arg9: memref<84x120xf32, #tpu.memory_space<vmem>>, %arg10: memref<84x1xf32, #tpu.memory_space<vmem>>, %arg11: memref<10x84xf32, #tpu.memory_space<vmem>>, %arg12: memref<10x1xf32, #tpu.memory_space<vmem>>, %arg13: memref<10x2xf32, #tpu.memory_space<vmem>>) attributes {dimension_semantics = [], scalar_prefetch = 0 : i64, scratch_operands = 0 : i64, tpu.core_type = #tpu.core_type<tc>} {
    %c0 = arith.constant 0 : index
    %c0_0 = arith.constant 0 : index
    %0 = vector.load %arg0[%c0, %c0_0] : memref<2x900xf32, #tpu.memory_space<vmem>>, vector<2x900xf32>
    %c0_1 = arith.constant 0 : index
    %c0_2 = arith.constant 0 : index
    %1 = vector.load %arg3[%c0_1, %c0_2] : memref<672x196xf32, #tpu.memory_space<vmem>>, vector<672x196xf32>
    %c0_3 = arith.constant 0 : index
    %c0_4 = arith.constant 0 : index
    %2 = vector.load %arg6[%c0_3, %c0_4] : memref<96x32xf32, #tpu.memory_space<vmem>>, vector<96x32xf32>
    %c0_5 = arith.constant 0 : index
    %c0_6 = arith.constant 0 : index
    %3 = vector.load %arg1[%c0_5, %c0_6] : memref<6x25xf32, #tpu.memory_space<vmem>>, vector<6x25xf32>
    %c0_7 = arith.constant 0 : index
    %c0_8 = arith.constant 0 : index
    %4 = vector.load %arg2[%c0_7, %c0_8] : memref<6x1xf32, #tpu.memory_space<vmem>>, vector<6x1xf32>
    %c0_9 = arith.constant 0 : index
    %c0_10 = arith.constant 0 : index
    %5 = vector.load %arg4[%c0_9, %c0_10] : memref<16x150xf32, #tpu.memory_space<vmem>>, vector<16x150xf32>
    %c0_11 = arith.constant 0 : index
    %c0_12 = arith.constant 0 : index
    %6 = vector.load %arg5[%c0_11, %c0_12] : memref<16x1xf32, #tpu.memory_space<vmem>>, vector<16x1xf32>
    %c0_13 = arith.constant 0 : index
    %c0_14 = arith.constant 0 : index
    %7 = vector.load %arg7[%c0_13, %c0_14] : memref<120x256xf32, #tpu.memory_space<vmem>>, vector<120x256xf32>
    %c0_15 = arith.constant 0 : index
    %c0_16 = arith.constant 0 : index
    %8 = vector.load %arg8[%c0_15, %c0_16] : memref<120x1xf32, #tpu.memory_space<vmem>>, vector<120x1xf32>
    %c0_17 = arith.constant 0 : index
    %c0_18 = arith.constant 0 : index
    %9 = vector.load %arg9[%c0_17, %c0_18] : memref<84x120xf32, #tpu.memory_space<vmem>>, vector<84x120xf32>
    %c0_19 = arith.constant 0 : index
    %c0_20 = arith.constant 0 : index
    %10 = vector.load %arg10[%c0_19, %c0_20] : memref<84x1xf32, #tpu.memory_space<vmem>>, vector<84x1xf32>
    %c0_21 = arith.constant 0 : index
    %c0_22 = arith.constant 0 : index
    %11 = vector.load %arg11[%c0_21, %c0_22] : memref<10x84xf32, #tpu.memory_space<vmem>>, vector<10x84xf32>
    %c0_23 = arith.constant 0 : index
    %c0_24 = arith.constant 0 : index
    %12 = vector.load %arg12[%c0_23, %c0_24] : memref<10x1xf32, #tpu.memory_space<vmem>>, vector<10x1xf32>
    %13 = vector.extract_strided_slice %0 {offsets = [0, 0], sizes = [1, 900], strides = [1, 1]} : vector<2x900xf32> to vector<1x900xf32>
    %14 = vector.extract_strided_slice %13 {offsets = [0, 0], sizes = [1, 672], strides = [1, 1]} : vector<1x900xf32> to vector<1x672xf32>
    %15 = vector.extract_strided_slice %13 {offsets = [0, 1], sizes = [1, 672], strides = [1, 1]} : vector<1x900xf32> to vector<1x672xf32>
    %16 = vector.extract_strided_slice %13 {offsets = [0, 2], sizes = [1, 672], strides = [1, 1]} : vector<1x900xf32> to vector<1x672xf32>
    %17 = vector.extract_strided_slice %13 {offsets = [0, 3], sizes = [1, 672], strides = [1, 1]} : vector<1x900xf32> to vector<1x672xf32>
    %18 = vector.extract_strided_slice %13 {offsets = [0, 4], sizes = [1, 672], strides = [1, 1]} : vector<1x900xf32> to vector<1x672xf32>
    %19 = vector.extract_strided_slice %13 {offsets = [0, 28], sizes = [1, 672], strides = [1, 1]} : vector<1x900xf32> to vector<1x672xf32>
    %20 = vector.extract_strided_slice %13 {offsets = [0, 29], sizes = [1, 672], strides = [1, 1]} : vector<1x900xf32> to vector<1x672xf32>
    %21 = vector.extract_strided_slice %13 {offsets = [0, 30], sizes = [1, 672], strides = [1, 1]} : vector<1x900xf32> to vector<1x672xf32>
    %22 = vector.extract_strided_slice %13 {offsets = [0, 31], sizes = [1, 672], strides = [1, 1]} : vector<1x900xf32> to vector<1x672xf32>
    %23 = vector.extract_strided_slice %13 {offsets = [0, 32], sizes = [1, 672], strides = [1, 1]} : vector<1x900xf32> to vector<1x672xf32>
    %24 = vector.extract_strided_slice %13 {offsets = [0, 56], sizes = [1, 672], strides = [1, 1]} : vector<1x900xf32> to vector<1x672xf32>
    %25 = vector.extract_strided_slice %13 {offsets = [0, 57], sizes = [1, 672], strides = [1, 1]} : vector<1x900xf32> to vector<1x672xf32>
    %26 = vector.extract_strided_slice %13 {offsets = [0, 58], sizes = [1, 672], strides = [1, 1]} : vector<1x900xf32> to vector<1x672xf32>
    %27 = vector.extract_strided_slice %13 {offsets = [0, 59], sizes = [1, 672], strides = [1, 1]} : vector<1x900xf32> to vector<1x672xf32>
    %28 = vector.extract_strided_slice %13 {offsets = [0, 60], sizes = [1, 672], strides = [1, 1]} : vector<1x900xf32> to vector<1x672xf32>
    %29 = vector.extract_strided_slice %13 {offsets = [0, 84], sizes = [1, 672], strides = [1, 1]} : vector<1x900xf32> to vector<1x672xf32>
    %30 = vector.extract_strided_slice %13 {offsets = [0, 85], sizes = [1, 672], strides = [1, 1]} : vector<1x900xf32> to vector<1x672xf32>
    %31 = vector.extract_strided_slice %13 {offsets = [0, 86], sizes = [1, 672], strides = [1, 1]} : vector<1x900xf32> to vector<1x672xf32>
    %32 = vector.extract_strided_slice %13 {offsets = [0, 87], sizes = [1, 672], strides = [1, 1]} : vector<1x900xf32> to vector<1x672xf32>
    %33 = vector.extract_strided_slice %13 {offsets = [0, 88], sizes = [1, 672], strides = [1, 1]} : vector<1x900xf32> to vector<1x672xf32>
    %34 = vector.extract_strided_slice %13 {offsets = [0, 112], sizes = [1, 672], strides = [1, 1]} : vector<1x900xf32> to vector<1x672xf32>
    %35 = vector.extract_strided_slice %13 {offsets = [0, 113], sizes = [1, 672], strides = [1, 1]} : vector<1x900xf32> to vector<1x672xf32>
    %36 = vector.extract_strided_slice %13 {offsets = [0, 114], sizes = [1, 672], strides = [1, 1]} : vector<1x900xf32> to vector<1x672xf32>
    %37 = vector.extract_strided_slice %13 {offsets = [0, 115], sizes = [1, 672], strides = [1, 1]} : vector<1x900xf32> to vector<1x672xf32>
    %38 = vector.extract_strided_slice %13 {offsets = [0, 116], sizes = [1, 672], strides = [1, 1]} : vector<1x900xf32> to vector<1x672xf32>
    %39 = tpu.concatenate %14, %15, %16, %17, %18, %19, %20, %21, %22, %23, %24, %25, %26, %27, %28, %29 in 0 : vector<1x672xf32>, vector<1x672xf32>, vector<1x672xf32>, vector<1x672xf32>, vector<1x672xf32>, vector<1x672xf32>, vector<1x672xf32>, vector<1x672xf32>, vector<1x672xf32>, vector<1x672xf32>, vector<1x672xf32>, vector<1x672xf32>, vector<1x672xf32>, vector<1x672xf32>, vector<1x672xf32>, vector<1x672xf32> -> vector<16x672xf32>
    %40 = tpu.concatenate %30, %31, %32, %33, %34, %35, %36, %37, %38 in 0 : vector<1x672xf32>, vector<1x672xf32>, vector<1x672xf32>, vector<1x672xf32>, vector<1x672xf32>, vector<1x672xf32>, vector<1x672xf32>, vector<1x672xf32>, vector<1x672xf32> -> vector<9x672xf32>
    %41 = tpu.concatenate %39, %40 in 0 : vector<16x672xf32>, vector<9x672xf32> -> vector<25x672xf32>
    %cst = arith.constant dense<0.000000e+00> : vector<6x672xf32>
    %42 = tpu.matmul %3, %41, %cst {dimension_numbers = #tpu.dot_dimension_numbers<[1], [0], [0], [1], [0, 0, 1, 1], [], []>} : vector<6x25xf32>, vector<25x672xf32>, vector<6x672xf32> -> vector<6x672xf32>
    %43 = vector.broadcast %4 : vector<6x1xf32> to vector<6x672xf32>
    %44 = arith.addf %42, %43 : vector<6x672xf32>
    %45 = math.tanh %44 : vector<6x672xf32>
    %cst_25 = arith.constant dense<0.000000e+00> : vector<6x196xf32>
    %46 = tpu.matmul %45, %1, %cst_25 {dimension_numbers = #tpu.dot_dimension_numbers<[1], [0], [0], [1], [0, 0, 1, 1], [], []>} : vector<6x672xf32>, vector<672x196xf32>, vector<6x196xf32> -> vector<6x196xf32>
    %47 = vector.extract_strided_slice %46 {offsets = [0, 0], sizes = [6, 96], strides = [1, 1]} : vector<6x196xf32> to vector<6x96xf32>
    %48 = vector.extract_strided_slice %46 {offsets = [0, 1], sizes = [6, 96], strides = [1, 1]} : vector<6x196xf32> to vector<6x96xf32>
    %49 = vector.extract_strided_slice %46 {offsets = [0, 2], sizes = [6, 96], strides = [1, 1]} : vector<6x196xf32> to vector<6x96xf32>
    %50 = vector.extract_strided_slice %46 {offsets = [0, 3], sizes = [6, 96], strides = [1, 1]} : vector<6x196xf32> to vector<6x96xf32>
    %51 = vector.extract_strided_slice %46 {offsets = [0, 4], sizes = [6, 96], strides = [1, 1]} : vector<6x196xf32> to vector<6x96xf32>
    %52 = vector.extract_strided_slice %46 {offsets = [0, 12], sizes = [6, 96], strides = [1, 1]} : vector<6x196xf32> to vector<6x96xf32>
    %53 = vector.extract_strided_slice %46 {offsets = [0, 13], sizes = [6, 96], strides = [1, 1]} : vector<6x196xf32> to vector<6x96xf32>
    %54 = vector.extract_strided_slice %46 {offsets = [0, 14], sizes = [6, 96], strides = [1, 1]} : vector<6x196xf32> to vector<6x96xf32>
    %55 = vector.extract_strided_slice %46 {offsets = [0, 15], sizes = [6, 96], strides = [1, 1]} : vector<6x196xf32> to vector<6x96xf32>
    %56 = vector.extract_strided_slice %46 {offsets = [0, 16], sizes = [6, 96], strides = [1, 1]} : vector<6x196xf32> to vector<6x96xf32>
    %57 = vector.extract_strided_slice %46 {offsets = [0, 24], sizes = [6, 96], strides = [1, 1]} : vector<6x196xf32> to vector<6x96xf32>
    %58 = vector.extract_strided_slice %46 {offsets = [0, 25], sizes = [6, 96], strides = [1, 1]} : vector<6x196xf32> to vector<6x96xf32>
    %59 = vector.extract_strided_slice %46 {offsets = [0, 26], sizes = [6, 96], strides = [1, 1]} : vector<6x196xf32> to vector<6x96xf32>
    %60 = vector.extract_strided_slice %46 {offsets = [0, 27], sizes = [6, 96], strides = [1, 1]} : vector<6x196xf32> to vector<6x96xf32>
    %61 = vector.extract_strided_slice %46 {offsets = [0, 28], sizes = [6, 96], strides = [1, 1]} : vector<6x196xf32> to vector<6x96xf32>
    %62 = vector.extract_strided_slice %46 {offsets = [0, 36], sizes = [6, 96], strides = [1, 1]} : vector<6x196xf32> to vector<6x96xf32>
    %63 = vector.extract_strided_slice %46 {offsets = [0, 37], sizes = [6, 96], strides = [1, 1]} : vector<6x196xf32> to vector<6x96xf32>
    %64 = vector.extract_strided_slice %46 {offsets = [0, 38], sizes = [6, 96], strides = [1, 1]} : vector<6x196xf32> to vector<6x96xf32>
    %65 = vector.extract_strided_slice %46 {offsets = [0, 39], sizes = [6, 96], strides = [1, 1]} : vector<6x196xf32> to vector<6x96xf32>
    %66 = vector.extract_strided_slice %46 {offsets = [0, 40], sizes = [6, 96], strides = [1, 1]} : vector<6x196xf32> to vector<6x96xf32>
    %67 = vector.extract_strided_slice %46 {offsets = [0, 48], sizes = [6, 96], strides = [1, 1]} : vector<6x196xf32> to vector<6x96xf32>
    %68 = vector.extract_strided_slice %46 {offsets = [0, 49], sizes = [6, 96], strides = [1, 1]} : vector<6x196xf32> to vector<6x96xf32>
    %69 = vector.extract_strided_slice %46 {offsets = [0, 50], sizes = [6, 96], strides = [1, 1]} : vector<6x196xf32> to vector<6x96xf32>
    %70 = vector.extract_strided_slice %46 {offsets = [0, 51], sizes = [6, 96], strides = [1, 1]} : vector<6x196xf32> to vector<6x96xf32>
    %71 = vector.extract_strided_slice %46 {offsets = [0, 52], sizes = [6, 96], strides = [1, 1]} : vector<6x196xf32> to vector<6x96xf32>
    %72 = tpu.concatenate %47, %48, %49, %50, %51, %52, %53, %54, %55, %56, %57, %58, %59, %60, %61, %62 in 0 : vector<6x96xf32>, vector<6x96xf32>, vector<6x96xf32>, vector<6x96xf32>, vector<6x96xf32>, vector<6x96xf32>, vector<6x96xf32>, vector<6x96xf32>, vector<6x96xf32>, vector<6x96xf32>, vector<6x96xf32>, vector<6x96xf32>, vector<6x96xf32>, vector<6x96xf32>, vector<6x96xf32>, vector<6x96xf32> -> vector<96x96xf32>
    %73 = tpu.concatenate %63, %64, %65, %66, %67, %68, %69, %70, %71 in 0 : vector<6x96xf32>, vector<6x96xf32>, vector<6x96xf32>, vector<6x96xf32>, vector<6x96xf32>, vector<6x96xf32>, vector<6x96xf32>, vector<6x96xf32>, vector<6x96xf32> -> vector<54x96xf32>
    %74 = tpu.concatenate %72, %73 in 0 : vector<96x96xf32>, vector<54x96xf32> -> vector<150x96xf32>
    %cst_26 = arith.constant dense<0.000000e+00> : vector<16x96xf32>
    %75 = tpu.matmul %5, %74, %cst_26 {dimension_numbers = #tpu.dot_dimension_numbers<[1], [0], [0], [1], [0, 0, 1, 1], [], []>} : vector<16x150xf32>, vector<150x96xf32>, vector<16x96xf32> -> vector<16x96xf32>
    %76 = vector.broadcast %6 : vector<16x1xf32> to vector<16x96xf32>
    %77 = arith.addf %75, %76 : vector<16x96xf32>
    %78 = math.tanh %77 : vector<16x96xf32>
    %cst_27 = arith.constant dense<0.000000e+00> : vector<16x32xf32>
    %79 = tpu.matmul %78, %2, %cst_27 {dimension_numbers = #tpu.dot_dimension_numbers<[1], [0], [0], [1], [0, 0, 1, 1], [], []>} : vector<16x96xf32>, vector<96x32xf32>, vector<16x32xf32> -> vector<16x32xf32>
    %80 = vector.extract_strided_slice %79 {offsets = [0, 0], sizes = [16, 4], strides = [1, 1]} : vector<16x32xf32> to vector<16x4xf32>
    %81 = vector.extract_strided_slice %79 {offsets = [0, 1], sizes = [16, 4], strides = [1, 1]} : vector<16x32xf32> to vector<16x4xf32>
    %82 = vector.extract_strided_slice %79 {offsets = [0, 2], sizes = [16, 4], strides = [1, 1]} : vector<16x32xf32> to vector<16x4xf32>
    %83 = vector.extract_strided_slice %79 {offsets = [0, 3], sizes = [16, 4], strides = [1, 1]} : vector<16x32xf32> to vector<16x4xf32>
    %84 = vector.extract_strided_slice %79 {offsets = [0, 4], sizes = [16, 4], strides = [1, 1]} : vector<16x32xf32> to vector<16x4xf32>
    %85 = vector.extract_strided_slice %79 {offsets = [0, 5], sizes = [16, 4], strides = [1, 1]} : vector<16x32xf32> to vector<16x4xf32>
    %86 = vector.extract_strided_slice %79 {offsets = [0, 6], sizes = [16, 4], strides = [1, 1]} : vector<16x32xf32> to vector<16x4xf32>
    %87 = vector.extract_strided_slice %79 {offsets = [0, 7], sizes = [16, 4], strides = [1, 1]} : vector<16x32xf32> to vector<16x4xf32>
    %88 = vector.extract_strided_slice %79 {offsets = [0, 8], sizes = [16, 4], strides = [1, 1]} : vector<16x32xf32> to vector<16x4xf32>
    %89 = vector.extract_strided_slice %79 {offsets = [0, 9], sizes = [16, 4], strides = [1, 1]} : vector<16x32xf32> to vector<16x4xf32>
    %90 = vector.extract_strided_slice %79 {offsets = [0, 10], sizes = [16, 4], strides = [1, 1]} : vector<16x32xf32> to vector<16x4xf32>
    %91 = vector.extract_strided_slice %79 {offsets = [0, 11], sizes = [16, 4], strides = [1, 1]} : vector<16x32xf32> to vector<16x4xf32>
    %92 = vector.extract_strided_slice %79 {offsets = [0, 12], sizes = [16, 4], strides = [1, 1]} : vector<16x32xf32> to vector<16x4xf32>
    %93 = vector.extract_strided_slice %79 {offsets = [0, 13], sizes = [16, 4], strides = [1, 1]} : vector<16x32xf32> to vector<16x4xf32>
    %94 = vector.extract_strided_slice %79 {offsets = [0, 14], sizes = [16, 4], strides = [1, 1]} : vector<16x32xf32> to vector<16x4xf32>
    %95 = vector.extract_strided_slice %79 {offsets = [0, 15], sizes = [16, 4], strides = [1, 1]} : vector<16x32xf32> to vector<16x4xf32>
    %96 = tpu.concatenate %80, %81, %82, %83, %84, %85, %86, %87, %88, %89, %90, %91, %92, %93, %94, %95 in 0 : vector<16x4xf32>, vector<16x4xf32>, vector<16x4xf32>, vector<16x4xf32>, vector<16x4xf32>, vector<16x4xf32>, vector<16x4xf32>, vector<16x4xf32>, vector<16x4xf32>, vector<16x4xf32>, vector<16x4xf32>, vector<16x4xf32>, vector<16x4xf32>, vector<16x4xf32>, vector<16x4xf32>, vector<16x4xf32> -> vector<256x4xf32>
    %cst_28 = arith.constant dense<0.000000e+00> : vector<120x4xf32>
    %97 = tpu.matmul %7, %96, %cst_28 {dimension_numbers = #tpu.dot_dimension_numbers<[1], [0], [0], [1], [0, 0, 1, 1], [], []>} : vector<120x256xf32>, vector<256x4xf32>, vector<120x4xf32> -> vector<120x4xf32>
    %98 = vector.broadcast %8 : vector<120x1xf32> to vector<120x4xf32>
    %99 = arith.addf %97, %98 : vector<120x4xf32>
    %100 = math.tanh %99 : vector<120x4xf32>
    %101 = vector.extract_strided_slice %100 {offsets = [0, 0], sizes = [120, 1], strides = [1, 1]} : vector<120x4xf32> to vector<120x1xf32>
    %102 = vector.extract_strided_slice %0 {offsets = [1, 0], sizes = [1, 900], strides = [1, 1]} : vector<2x900xf32> to vector<1x900xf32>
    %103 = vector.extract_strided_slice %102 {offsets = [0, 0], sizes = [1, 672], strides = [1, 1]} : vector<1x900xf32> to vector<1x672xf32>
    %104 = vector.extract_strided_slice %102 {offsets = [0, 1], sizes = [1, 672], strides = [1, 1]} : vector<1x900xf32> to vector<1x672xf32>
    %105 = vector.extract_strided_slice %102 {offsets = [0, 2], sizes = [1, 672], strides = [1, 1]} : vector<1x900xf32> to vector<1x672xf32>
    %106 = vector.extract_strided_slice %102 {offsets = [0, 3], sizes = [1, 672], strides = [1, 1]} : vector<1x900xf32> to vector<1x672xf32>
    %107 = vector.extract_strided_slice %102 {offsets = [0, 4], sizes = [1, 672], strides = [1, 1]} : vector<1x900xf32> to vector<1x672xf32>
    %108 = vector.extract_strided_slice %102 {offsets = [0, 28], sizes = [1, 672], strides = [1, 1]} : vector<1x900xf32> to vector<1x672xf32>
    %109 = vector.extract_strided_slice %102 {offsets = [0, 29], sizes = [1, 672], strides = [1, 1]} : vector<1x900xf32> to vector<1x672xf32>
    %110 = vector.extract_strided_slice %102 {offsets = [0, 30], sizes = [1, 672], strides = [1, 1]} : vector<1x900xf32> to vector<1x672xf32>
    %111 = vector.extract_strided_slice %102 {offsets = [0, 31], sizes = [1, 672], strides = [1, 1]} : vector<1x900xf32> to vector<1x672xf32>
    %112 = vector.extract_strided_slice %102 {offsets = [0, 32], sizes = [1, 672], strides = [1, 1]} : vector<1x900xf32> to vector<1x672xf32>
    %113 = vector.extract_strided_slice %102 {offsets = [0, 56], sizes = [1, 672], strides = [1, 1]} : vector<1x900xf32> to vector<1x672xf32>
    %114 = vector.extract_strided_slice %102 {offsets = [0, 57], sizes = [1, 672], strides = [1, 1]} : vector<1x900xf32> to vector<1x672xf32>
    %115 = vector.extract_strided_slice %102 {offsets = [0, 58], sizes = [1, 672], strides = [1, 1]} : vector<1x900xf32> to vector<1x672xf32>
    %116 = vector.extract_strided_slice %102 {offsets = [0, 59], sizes = [1, 672], strides = [1, 1]} : vector<1x900xf32> to vector<1x672xf32>
    %117 = vector.extract_strided_slice %102 {offsets = [0, 60], sizes = [1, 672], strides = [1, 1]} : vector<1x900xf32> to vector<1x672xf32>
    %118 = vector.extract_strided_slice %102 {offsets = [0, 84], sizes = [1, 672], strides = [1, 1]} : vector<1x900xf32> to vector<1x672xf32>
    %119 = vector.extract_strided_slice %102 {offsets = [0, 85], sizes = [1, 672], strides = [1, 1]} : vector<1x900xf32> to vector<1x672xf32>
    %120 = vector.extract_strided_slice %102 {offsets = [0, 86], sizes = [1, 672], strides = [1, 1]} : vector<1x900xf32> to vector<1x672xf32>
    %121 = vector.extract_strided_slice %102 {offsets = [0, 87], sizes = [1, 672], strides = [1, 1]} : vector<1x900xf32> to vector<1x672xf32>
    %122 = vector.extract_strided_slice %102 {offsets = [0, 88], sizes = [1, 672], strides = [1, 1]} : vector<1x900xf32> to vector<1x672xf32>
    %123 = vector.extract_strided_slice %102 {offsets = [0, 112], sizes = [1, 672], strides = [1, 1]} : vector<1x900xf32> to vector<1x672xf32>
    %124 = vector.extract_strided_slice %102 {offsets = [0, 113], sizes = [1, 672], strides = [1, 1]} : vector<1x900xf32> to vector<1x672xf32>
    %125 = vector.extract_strided_slice %102 {offsets = [0, 114], sizes = [1, 672], strides = [1, 1]} : vector<1x900xf32> to vector<1x672xf32>
    %126 = vector.extract_strided_slice %102 {offsets = [0, 115], sizes = [1, 672], strides = [1, 1]} : vector<1x900xf32> to vector<1x672xf32>
    %127 = vector.extract_strided_slice %102 {offsets = [0, 116], sizes = [1, 672], strides = [1, 1]} : vector<1x900xf32> to vector<1x672xf32>
    %128 = tpu.concatenate %103, %104, %105, %106, %107, %108, %109, %110, %111, %112, %113, %114, %115, %116, %117, %118 in 0 : vector<1x672xf32>, vector<1x672xf32>, vector<1x672xf32>, vector<1x672xf32>, vector<1x672xf32>, vector<1x672xf32>, vector<1x672xf32>, vector<1x672xf32>, vector<1x672xf32>, vector<1x672xf32>, vector<1x672xf32>, vector<1x672xf32>, vector<1x672xf32>, vector<1x672xf32>, vector<1x672xf32>, vector<1x672xf32> -> vector<16x672xf32>
    %129 = tpu.concatenate %119, %120, %121, %122, %123, %124, %125, %126, %127 in 0 : vector<1x672xf32>, vector<1x672xf32>, vector<1x672xf32>, vector<1x672xf32>, vector<1x672xf32>, vector<1x672xf32>, vector<1x672xf32>, vector<1x672xf32>, vector<1x672xf32> -> vector<9x672xf32>
    %130 = tpu.concatenate %128, %129 in 0 : vector<16x672xf32>, vector<9x672xf32> -> vector<25x672xf32>
    %cst_29 = arith.constant dense<0.000000e+00> : vector<6x672xf32>
    %131 = tpu.matmul %3, %130, %cst_29 {dimension_numbers = #tpu.dot_dimension_numbers<[1], [0], [0], [1], [0, 0, 1, 1], [], []>} : vector<6x25xf32>, vector<25x672xf32>, vector<6x672xf32> -> vector<6x672xf32>
    %132 = vector.broadcast %4 : vector<6x1xf32> to vector<6x672xf32>
    %133 = arith.addf %131, %132 : vector<6x672xf32>
    %134 = math.tanh %133 : vector<6x672xf32>
    %cst_30 = arith.constant dense<0.000000e+00> : vector<6x196xf32>
    %135 = tpu.matmul %134, %1, %cst_30 {dimension_numbers = #tpu.dot_dimension_numbers<[1], [0], [0], [1], [0, 0, 1, 1], [], []>} : vector<6x672xf32>, vector<672x196xf32>, vector<6x196xf32> -> vector<6x196xf32>
    %136 = vector.extract_strided_slice %135 {offsets = [0, 0], sizes = [6, 96], strides = [1, 1]} : vector<6x196xf32> to vector<6x96xf32>
    %137 = vector.extract_strided_slice %135 {offsets = [0, 1], sizes = [6, 96], strides = [1, 1]} : vector<6x196xf32> to vector<6x96xf32>
    %138 = vector.extract_strided_slice %135 {offsets = [0, 2], sizes = [6, 96], strides = [1, 1]} : vector<6x196xf32> to vector<6x96xf32>
    %139 = vector.extract_strided_slice %135 {offsets = [0, 3], sizes = [6, 96], strides = [1, 1]} : vector<6x196xf32> to vector<6x96xf32>
    %140 = vector.extract_strided_slice %135 {offsets = [0, 4], sizes = [6, 96], strides = [1, 1]} : vector<6x196xf32> to vector<6x96xf32>
    %141 = vector.extract_strided_slice %135 {offsets = [0, 12], sizes = [6, 96], strides = [1, 1]} : vector<6x196xf32> to vector<6x96xf32>
    %142 = vector.extract_strided_slice %135 {offsets = [0, 13], sizes = [6, 96], strides = [1, 1]} : vector<6x196xf32> to vector<6x96xf32>
    %143 = vector.extract_strided_slice %135 {offsets = [0, 14], sizes = [6, 96], strides = [1, 1]} : vector<6x196xf32> to vector<6x96xf32>
    %144 = vector.extract_strided_slice %135 {offsets = [0, 15], sizes = [6, 96], strides = [1, 1]} : vector<6x196xf32> to vector<6x96xf32>
    %145 = vector.extract_strided_slice %135 {offsets = [0, 16], sizes = [6, 96], strides = [1, 1]} : vector<6x196xf32> to vector<6x96xf32>
    %146 = vector.extract_strided_slice %135 {offsets = [0, 24], sizes = [6, 96], strides = [1, 1]} : vector<6x196xf32> to vector<6x96xf32>
    %147 = vector.extract_strided_slice %135 {offsets = [0, 25], sizes = [6, 96], strides = [1, 1]} : vector<6x196xf32> to vector<6x96xf32>
    %148 = vector.extract_strided_slice %135 {offsets = [0, 26], sizes = [6, 96], strides = [1, 1]} : vector<6x196xf32> to vector<6x96xf32>
    %149 = vector.extract_strided_slice %135 {offsets = [0, 27], sizes = [6, 96], strides = [1, 1]} : vector<6x196xf32> to vector<6x96xf32>
    %150 = vector.extract_strided_slice %135 {offsets = [0, 28], sizes = [6, 96], strides = [1, 1]} : vector<6x196xf32> to vector<6x96xf32>
    %151 = vector.extract_strided_slice %135 {offsets = [0, 36], sizes = [6, 96], strides = [1, 1]} : vector<6x196xf32> to vector<6x96xf32>
    %152 = vector.extract_strided_slice %135 {offsets = [0, 37], sizes = [6, 96], strides = [1, 1]} : vector<6x196xf32> to vector<6x96xf32>
    %153 = vector.extract_strided_slice %135 {offsets = [0, 38], sizes = [6, 96], strides = [1, 1]} : vector<6x196xf32> to vector<6x96xf32>
    %154 = vector.extract_strided_slice %135 {offsets = [0, 39], sizes = [6, 96], strides = [1, 1]} : vector<6x196xf32> to vector<6x96xf32>
    %155 = vector.extract_strided_slice %135 {offsets = [0, 40], sizes = [6, 96], strides = [1, 1]} : vector<6x196xf32> to vector<6x96xf32>
    %156 = vector.extract_strided_slice %135 {offsets = [0, 48], sizes = [6, 96], strides = [1, 1]} : vector<6x196xf32> to vector<6x96xf32>
    %157 = vector.extract_strided_slice %135 {offsets = [0, 49], sizes = [6, 96], strides = [1, 1]} : vector<6x196xf32> to vector<6x96xf32>
    %158 = vector.extract_strided_slice %135 {offsets = [0, 50], sizes = [6, 96], strides = [1, 1]} : vector<6x196xf32> to vector<6x96xf32>
    %159 = vector.extract_strided_slice %135 {offsets = [0, 51], sizes = [6, 96], strides = [1, 1]} : vector<6x196xf32> to vector<6x96xf32>
    %160 = vector.extract_strided_slice %135 {offsets = [0, 52], sizes = [6, 96], strides = [1, 1]} : vector<6x196xf32> to vector<6x96xf32>
    %161 = tpu.concatenate %136, %137, %138, %139, %140, %141, %142, %143, %144, %145, %146, %147, %148, %149, %150, %151 in 0 : vector<6x96xf32>, vector<6x96xf32>, vector<6x96xf32>, vector<6x96xf32>, vector<6x96xf32>, vector<6x96xf32>, vector<6x96xf32>, vector<6x96xf32>, vector<6x96xf32>, vector<6x96xf32>, vector<6x96xf32>, vector<6x96xf32>, vector<6x96xf32>, vector<6x96xf32>, vector<6x96xf32>, vector<6x96xf32> -> vector<96x96xf32>
    %162 = tpu.concatenate %152, %153, %154, %155, %156, %157, %158, %159, %160 in 0 : vector<6x96xf32>, vector<6x96xf32>, vector<6x96xf32>, vector<6x96xf32>, vector<6x96xf32>, vector<6x96xf32>, vector<6x96xf32>, vector<6x96xf32>, vector<6x96xf32> -> vector<54x96xf32>
    %163 = tpu.concatenate %161, %162 in 0 : vector<96x96xf32>, vector<54x96xf32> -> vector<150x96xf32>
    %cst_31 = arith.constant dense<0.000000e+00> : vector<16x96xf32>
    %164 = tpu.matmul %5, %163, %cst_31 {dimension_numbers = #tpu.dot_dimension_numbers<[1], [0], [0], [1], [0, 0, 1, 1], [], []>} : vector<16x150xf32>, vector<150x96xf32>, vector<16x96xf32> -> vector<16x96xf32>
    %165 = vector.broadcast %6 : vector<16x1xf32> to vector<16x96xf32>
    %166 = arith.addf %164, %165 : vector<16x96xf32>
    %167 = math.tanh %166 : vector<16x96xf32>
    %cst_32 = arith.constant dense<0.000000e+00> : vector<16x32xf32>
    %168 = tpu.matmul %167, %2, %cst_32 {dimension_numbers = #tpu.dot_dimension_numbers<[1], [0], [0], [1], [0, 0, 1, 1], [], []>} : vector<16x96xf32>, vector<96x32xf32>, vector<16x32xf32> -> vector<16x32xf32>
    %169 = vector.extract_strided_slice %168 {offsets = [0, 0], sizes = [16, 4], strides = [1, 1]} : vector<16x32xf32> to vector<16x4xf32>
    %170 = vector.extract_strided_slice %168 {offsets = [0, 1], sizes = [16, 4], strides = [1, 1]} : vector<16x32xf32> to vector<16x4xf32>
    %171 = vector.extract_strided_slice %168 {offsets = [0, 2], sizes = [16, 4], strides = [1, 1]} : vector<16x32xf32> to vector<16x4xf32>
    %172 = vector.extract_strided_slice %168 {offsets = [0, 3], sizes = [16, 4], strides = [1, 1]} : vector<16x32xf32> to vector<16x4xf32>
    %173 = vector.extract_strided_slice %168 {offsets = [0, 4], sizes = [16, 4], strides = [1, 1]} : vector<16x32xf32> to vector<16x4xf32>
    %174 = vector.extract_strided_slice %168 {offsets = [0, 5], sizes = [16, 4], strides = [1, 1]} : vector<16x32xf32> to vector<16x4xf32>
    %175 = vector.extract_strided_slice %168 {offsets = [0, 6], sizes = [16, 4], strides = [1, 1]} : vector<16x32xf32> to vector<16x4xf32>
    %176 = vector.extract_strided_slice %168 {offsets = [0, 7], sizes = [16, 4], strides = [1, 1]} : vector<16x32xf32> to vector<16x4xf32>
    %177 = vector.extract_strided_slice %168 {offsets = [0, 8], sizes = [16, 4], strides = [1, 1]} : vector<16x32xf32> to vector<16x4xf32>
    %178 = vector.extract_strided_slice %168 {offsets = [0, 9], sizes = [16, 4], strides = [1, 1]} : vector<16x32xf32> to vector<16x4xf32>
    %179 = vector.extract_strided_slice %168 {offsets = [0, 10], sizes = [16, 4], strides = [1, 1]} : vector<16x32xf32> to vector<16x4xf32>
    %180 = vector.extract_strided_slice %168 {offsets = [0, 11], sizes = [16, 4], strides = [1, 1]} : vector<16x32xf32> to vector<16x4xf32>
    %181 = vector.extract_strided_slice %168 {offsets = [0, 12], sizes = [16, 4], strides = [1, 1]} : vector<16x32xf32> to vector<16x4xf32>
    %182 = vector.extract_strided_slice %168 {offsets = [0, 13], sizes = [16, 4], strides = [1, 1]} : vector<16x32xf32> to vector<16x4xf32>
    %183 = vector.extract_strided_slice %168 {offsets = [0, 14], sizes = [16, 4], strides = [1, 1]} : vector<16x32xf32> to vector<16x4xf32>
    %184 = vector.extract_strided_slice %168 {offsets = [0, 15], sizes = [16, 4], strides = [1, 1]} : vector<16x32xf32> to vector<16x4xf32>
    %185 = tpu.concatenate %169, %170, %171, %172, %173, %174, %175, %176, %177, %178, %179, %180, %181, %182, %183, %184 in 0 : vector<16x4xf32>, vector<16x4xf32>, vector<16x4xf32>, vector<16x4xf32>, vector<16x4xf32>, vector<16x4xf32>, vector<16x4xf32>, vector<16x4xf32>, vector<16x4xf32>, vector<16x4xf32>, vector<16x4xf32>, vector<16x4xf32>, vector<16x4xf32>, vector<16x4xf32>, vector<16x4xf32>, vector<16x4xf32> -> vector<256x4xf32>
    %cst_33 = arith.constant dense<0.000000e+00> : vector<120x4xf32>
    %186 = tpu.matmul %7, %185, %cst_33 {dimension_numbers = #tpu.dot_dimension_numbers<[1], [0], [0], [1], [0, 0, 1, 1], [], []>} : vector<120x256xf32>, vector<256x4xf32>, vector<120x4xf32> -> vector<120x4xf32>
    %187 = vector.broadcast %8 : vector<120x1xf32> to vector<120x4xf32>
    %188 = arith.addf %186, %187 : vector<120x4xf32>
    %189 = math.tanh %188 : vector<120x4xf32>
    %190 = vector.extract_strided_slice %189 {offsets = [0, 0], sizes = [120, 1], strides = [1, 1]} : vector<120x4xf32> to vector<120x1xf32>
    %191 = tpu.concatenate %101, %190 in 1 : vector<120x1xf32>, vector<120x1xf32> -> vector<120x2xf32>
    %cst_34 = arith.constant dense<0.000000e+00> : vector<84x2xf32>
    %192 = tpu.matmul %9, %191, %cst_34 {dimension_numbers = #tpu.dot_dimension_numbers<[1], [0], [0], [1], [0, 0, 1, 1], [], []>} : vector<84x120xf32>, vector<120x2xf32>, vector<84x2xf32> -> vector<84x2xf32>
    %193 = vector.broadcast %10 : vector<84x1xf32> to vector<84x2xf32>
    %194 = arith.addf %192, %193 : vector<84x2xf32>
    %195 = math.tanh %194 : vector<84x2xf32>
    %cst_35 = arith.constant dense<0.000000e+00> : vector<10x2xf32>
    %196 = tpu.matmul %11, %195, %cst_35 {dimension_numbers = #tpu.dot_dimension_numbers<[1], [0], [0], [1], [0, 0, 1, 1], [], []>} : vector<10x84xf32>, vector<84x2xf32>, vector<10x2xf32> -> vector<10x2xf32>
    %197 = vector.broadcast %12 : vector<10x1xf32> to vector<10x2xf32>
    %198 = arith.addf %196, %197 : vector<10x2xf32>
    %c0_36 = arith.constant 0 : index
    %c0_37 = arith.constant 0 : index
    %199 = vector.load %arg13[%c0_36, %c0_37] : memref<10x2xf32, #tpu.memory_space<vmem>>, vector<10x2xf32>
    tpu.vector_store %arg13[%c0_36, %c0_37], %198 {strides = array<i32>} : memref<10x2xf32, #tpu.memory_space<vmem>>, vector<10x2xf32>,
    return
  }
}

</mosaic_0001>

<llo_original>
// kernel: lenet5_forward.1
$region0: #{lenet5_forward.1}
  #allocation0 [shape = 'u32[]', space=smem, size = 0x4, offset = 0x4, fixed_abs, tag = 'smem constant byte address 0x4 - core index']
  #allocation1 [shape = 'u32[144,128]{1,0:T(1,128)}', space=vmem, size = 0x12000, scoped, tag = 'internal scratch']
  %s0 = inlined_call_operand.vmem [shape: f32[2,900], index: 0, kind: input, shape index: {}]
  %s1 = inlined_call_operand.vmem [shape: f32[6,25], index: 1, kind: input, shape index: {}]
  %s2 = inlined_call_operand.vmem [shape: f32[6,1], index: 2, kind: input, shape index: {}]
  %s3 = inlined_call_operand.vmem [shape: f32[672,196], index: 3, kind: input, shape index: {}]
  %s4 = inlined_call_operand.vmem [shape: f32[16,150], index: 4, kind: input, shape index: {}]
  %s5 = inlined_call_operand.vmem [shape: f32[16,1], index: 5, kind: input, shape index: {}]
  %s6 = inlined_call_operand.vmem [shape: f32[96,32], index: 6, kind: input, shape index: {}]
  %s7 = inlined_call_operand.vmem [shape: f32[120,256], index: 7, kind: input, shape index: {}]
  %s8 = inlined_call_operand.vmem [shape: f32[120,1], index: 8, kind: input, shape index: {}]
  %s9 = inlined_call_operand.vmem [shape: f32[84,120], index: 9, kind: input, shape index: {}]
  %s10 = inlined_call_operand.vmem [shape: f32[84,1], index: 10, kind: input, shape index: {}]
  %s11 = inlined_call_operand.vmem [shape: f32[10,84], index: 11, kind: input, shape index: {}]
  %s12 = inlined_call_operand.vmem [shape: f32[10,1], index: 12, kind: input, shape index: {}]
  %s13 = inlined_call_operand.vmem [shape: f32[10,2], index: 13, kind: output, shape index: {}]
  %s14 = sld [smem:[#allocation0]]
  $region62: #{lenet5_forward.1} parent=0
    _
  %s16 = ssub.s32 1, %s14
  %s17 = scalar_select 0, %s16, %s14
  // Predicated region
  $region2: #{lenet5_forward.1} parent=0 // pred_check
    _
  $region3: #{lenet5_forward.1} parent=0 // pred_check_branch
    %19 = sbr.rel (0) target = $region5
  $region4: #{lenet5_forward.1} parent=0 // pred_region
    _
  $region5: #{lenet5_forward.1} parent=0 // pred_fallthru
    _
  // Predicated region
  $region6: #{lenet5_forward.1} parent=0 // pred_check
    _
  $region7: #{lenet5_forward.1} parent=0 // pred_check_branch
    %21 = sbr.rel (0) target = $region9
  $region8: #{lenet5_forward.1} parent=0 // pred_region
    _
  $region9: #{lenet5_forward.1} parent=0 // pred_fallthru
    _
  // Predicated region
  $region10: #{lenet5_forward.1} parent=0 // pred_check
    _
  $region11: #{lenet5_forward.1} parent=0 // pred_check_branch
    %23 = sbr.rel (0) target = $region13
  $region12: #{lenet5_forward.1} parent=0 // pred_region
    _
  $region13: #{lenet5_forward.1} parent=0 // pred_fallthru
    _
  // Predicated region
  $region14: #{lenet5_forward.1} parent=0 // pred_check
    _
  $region15: #{lenet5_forward.1} parent=0 // pred_check_branch
    %25 = sbr.rel (0) target = $region17
  $region16: #{lenet5_forward.1} parent=0 // pred_region
    _
  $region17: #{lenet5_forward.1} parent=0 // pred_fallthru
    _
  // Predicated region
  $region18: #{lenet5_forward.1} parent=0 // pred_check
    _
  $region19: #{lenet5_forward.1} parent=0 // pred_check_branch
    %27 = sbr.rel (0) target = $region21
  $region20: #{lenet5_forward.1} parent=0 // pred_region
    _
  $region21: #{lenet5_forward.1} parent=0 // pred_fallthru
    _
  // Predicated region
  $region22: #{lenet5_forward.1} parent=0 // pred_check
    _
  $region23: #{lenet5_forward.1} parent=0 // pred_check_branch
    %29 = sbr.rel (0) target = $region25
  $region24: #{lenet5_forward.1} parent=0 // pred_region
    _
  $region25: #{lenet5_forward.1} parent=0 // pred_fallthru
    _
  // Predicated region
  $region26: #{lenet5_forward.1} parent=0 // pred_check
    _
  $region27: #{lenet5_forward.1} parent=0 // pred_check_branch
    %31 = sbr.rel (0) target = $region29
  $region28: #{lenet5_forward.1} parent=0 // pred_region
    _
  $region29: #{lenet5_forward.1} parent=0 // pred_fallthru
    _
  // Predicated region
  $region30: #{lenet5_forward.1} parent=0 // pred_check
    _
  $region31: #{lenet5_forward.1} parent=0 // pred_check_branch
    %33 = sbr.rel (0) target = $region33
  $region32: #{lenet5_forward.1} parent=0 // pred_region
    _
  $region33: #{lenet5_forward.1} parent=0 // pred_fallthru
    _
  // Predicated region
  $region34: #{lenet5_forward.1} parent=0 // pred_check
    _
  $region35: #{lenet5_forward.1} parent=0 // pred_check_branch
    %35 = sbr.rel (0) target = $region37
  $region36: #{lenet5_forward.1} parent=0 // pred_region
    _
  $region37: #{lenet5_forward.1} parent=0 // pred_fallthru
    _
  // Predicated region
  $region38: #{lenet5_forward.1} parent=0 // pred_check
    _
  $region39: #{lenet5_forward.1} parent=0 // pred_check_branch
    %37 = sbr.rel (0) target = $region41
  $region40: #{lenet5_forward.1} parent=0 // pred_region
    _
  $region41: #{lenet5_forward.1} parent=0 // pred_fallthru
    _
  // Predicated region
  $region42: #{lenet5_forward.1} parent=0 // pred_check
    _
  $region43: #{lenet5_forward.1} parent=0 // pred_check_branch
    %39 = sbr.rel (0) target = $region45
  $region44: #{lenet5_forward.1} parent=0 // pred_region
    _
  $region45: #{lenet5_forward.1} parent=0 // pred_fallthru
    _
  // Predicated region
  $region46: #{lenet5_forward.1} parent=0 // pred_check
    _
  $region47: #{lenet5_forward.1} parent=0 // pred_check_branch
    %41 = sbr.rel (0) target = $region49
  $region48: #{lenet5_forward.1} parent=0 // pred_region
    _
  $region49: #{lenet5_forward.1} parent=0 // pred_fallthru
    _
  // Predicated region
  $region50: #{lenet5_forward.1} parent=0 // pred_check
    _
  $region51: #{lenet5_forward.1} parent=0 // pred_check_branch
    %43 = sbr.rel (0) target = $region53
  $region52: #{lenet5_forward.1} parent=0 // pred_region
    _
  $region53: #{lenet5_forward.1} parent=0 // pred_fallthru
    _
  %v44 = vld [vmem:[%s0] sm:$0xff]
  %v45 = vld [vmem:[%s0 + $0x8] sm:$0xff]
  %v46 = vld [vmem:[%s3] sm:$0xff]
  %v47 = vld [vmem:[%s3 + $0x8] sm:$0xff]
  %v48 = vld [vmem:[%s3 + $0x10] sm:$0xff]
  %v49 = vld [vmem:[%s3 + $0x18] sm:$0xff]
  %v50 = vld [vmem:[%s3 + $0x20] sm:$0xff]
  %v51 = vld [vmem:[%s3 + $0x28] sm:$0xff]
  %v52 = vld [vmem:[%s3 + $0x30] sm:$0xff]
  %v53 = vld [vmem:[%s3 + $0x38] sm:$0xff]
  %v54 = vld [vmem:[%s3 + $0x40] sm:$0xff]
  %v55 = vld [vmem:[%s3 + $0x48] sm:$0xff]
  %v56 = vld [vmem:[%s3 + $0x50] sm:$0xff]
  %v57 = vld [vmem:[%s3 + $0x58] sm:$0xff]
  %v58 = vld [vmem:[%s3 + $0x60] sm:$0xff]
  %v59 = vld [vmem:[%s3 + $0x68] sm:$0xff]
  %v60 = vld [vmem:[%s3 + $0x70] sm:$0xff]
  %v61 = vld [vmem:[%s3 + $0x78] sm:$0xff]
  %v62 = vld [vmem:[%s3 + $0x80] sm:$0xff]
  %v63 = vld [vmem:[%s3 + $0x88] sm:$0xff]
  %v64 = vld [vmem:[%s3 + $0x90] sm:$0xff]
  %v65 = vld [vmem:[%s3 + $0x98] sm:$0xff]
  %v66 = vld [vmem:[%s3 + $0xa0] sm:$0xff]
  %v67 = vld [vmem:[%s3 + $0xa8] sm:$0xff]
  %v68 = vld [vmem:[%s3 + $0xb0] sm:$0xff]
  %v69 = vld [vmem:[%s3 + $0xb8] sm:$0xff]
  %v70 = vld [vmem:[%s3 + $0xc0] sm:$0xff]
  %v71 = vld [vmem:[%s3 + $0xc8] sm:$0xff]
  %v72 = vld [vmem:[%s3 + $0xd0] sm:$0xff]
  %v73 = vld [vmem:[%s3 + $0xd8] sm:$0xff]
  %v74 = vld [vmem:[%s3 + $0xe0] sm:$0xff]
  %v75 = vld [vmem:[%s3 + $0xe8] sm:$0xff]
  %v76 = vld [vmem:[%s3 + $0xf0] sm:$0xff]
  %v77 = vld [vmem:[%s3 + $0xf8] sm:$0xff]
  %v78 = vld [vmem:[%s3 + $0x100] sm:$0xff]
  %v79 = vld [vmem:[%s3 + $0x108] sm:$0xff]
  %v80 = vld [vmem:[%s3 + $0x110] sm:$0xff]
  %v81 = vld [vmem:[%s3 + $0x118] sm:$0xff]
  %v82 = vld [vmem:[%s3 + $0x120] sm:$0xff]
  %v83 = vld [vmem:[%s3 + $0x128] sm:$0xff]
  %v84 = vld [vmem:[%s3 + $0x130] sm:$0xff]
  %v85 = vld [vmem:[%s3 + $0x138] sm:$0xff]
  %v86 = vld [vmem:[%s3 + $0x140] sm:$0xff]
  %v87 = vld [vmem:[%s3 + $0x148] sm:$0xff]
  %v88 = vld [vmem:[%s3 + $0x150] sm:$0xff]
  %v89 = vld [vmem:[%s3 + $0x158] sm:$0xff]
  %v90 = vld [vmem:[%s3 + $0x160] sm:$0xff]
  %v91 = vld [vmem:[%s3 + $0x168] sm:$0xff]
  %v92 = vld [vmem:[%s3 + $0x170] sm:$0xff]
  %v93 = vld [vmem:[%s3 + $0x178] sm:$0xff]
  %v94 = vld [vmem:[%s3 + $0x180] sm:$0xff]
  %v95 = vld [vmem:[%s3 + $0x188] sm:$0xff]
  %v96 = vld [vmem:[%s3 + $0x190] sm:$0xff]
  %v97 = vld [vmem:[%s3 + $0x198] sm:$0xff]
  %v98 = vld [vmem:[%s3 + $0x1a0] sm:$0xff]
  %v99 = vld [vmem:[%s3 + $0x1a8] sm:$0xff]
  %v100 = vld [vmem:[%s3 + $0x1b0] sm:$0xff]
  %v101 = vld [vmem:[%s3 + $0x1b8] sm:$0xff]
  %v102 = vld [vmem:[%s3 + $0x1c0] sm:$0xff]
  %v103 = vld [vmem:[%s3 + $0x1c8] sm:$0xff]
  %v104 = vld [vmem:[%s3 + $0x1d0] sm:$0xff]
  %v105 = vld [vmem:[%s3 + $0x1d8] sm:$0xff]
  %v106 = vld [vmem:[%s3 + $0x1e0] sm:$0xff]
  %v107 = vld [vmem:[%s3 + $0x1e8] sm:$0xff]
  %v108 = vld [vmem:[%s3 + $0x1f0] sm:$0xff]
  %v109 = vld [vmem:[%s3 + $0x1f8] sm:$0xff]
  %v110 = vld [vmem:[%s3 + $0x200] sm:$0xff]
  %v111 = vld [vmem:[%s3 + $0x208] sm:$0xff]
  %v112 = vld [vmem:[%s3 + $0x210] sm:$0xff]
  %v113 = vld [vmem:[%s3 + $0x218] sm:$0xff]
  %v114 = vld [vmem:[%s3 + $0x220] sm:$0xff]
  %v115 = vld [vmem:[%s3 + $0x228] sm:$0xff]
  %v116 = vld [vmem:[%s3 + $0x230] sm:$0xff]
  %v117 = vld [vmem:[%s3 + $0x238] sm:$0xff]
  %v118 = vld [vmem:[%s3 + $0x240] sm:$0xff]
  %v119 = vld [vmem:[%s3 + $0x248] sm:$0xff]
  %v120 = vld [vmem:[%s3 + $0x250] sm:$0xff]
  %v121 = vld [vmem:[%s3 + $0x258] sm:$0xff]
  %v122 = vld [vmem:[%s3 + $0x260] sm:$0xff]
  %v123 = vld [vmem:[%s3 + $0x268] sm:$0xff]
  %v124 = vld [vmem:[%s3 + $0x270] sm:$0xff]
  %v125 = vld [vmem:[%s3 + $0x278] sm:$0xff]
  %v126 = vld [vmem:[%s3 + $0x280] sm:$0xff]
  %v127 = vld [vmem:[%s3 + $0x288] sm:$0xff]
  %v128 = vld [vmem:[%s3 + $0x290] sm:$0xff]
  %v129 = vld [vmem:[%s3 + $0x298] sm:$0xff]
  %v130 = vld [vmem:[%s3 + $0x2a0] sm:$0xff]
  %v131 = vld [vmem:[%s3 + $0x2a8] sm:$0xff]
  %v132 = vld [vmem:[%s3 + $0x2b0] sm:$0xff]
  %v133 = vld [vmem:[%s3 + $0x2b8] sm:$0xff]
  %v134 = vld [vmem:[%s3 + $0x2c0] sm:$0xff]
  %v135 = vld [vmem:[%s3 + $0x2c8] sm:$0xff]
  %v136 = vld [vmem:[%s3 + $0x2d0] sm:$0xff]
  %v137 = vld [vmem:[%s3 + $0x2d8] sm:$0xff]
  %v138 = vld [vmem:[%s3 + $0x2e0] sm:$0xff]
  %v139 = vld [vmem:[%s3 + $0x2e8] sm:$0xff]
  %v140 = vld [vmem:[%s3 + $0x2f0] sm:$0xff]
  %v141 = vld [vmem:[%s3 + $0x2f8] sm:$0xff]
  %v142 = vld [vmem:[%s3 + $0x300] sm:$0xff]
  %v143 = vld [vmem:[%s3 + $0x308] sm:$0xff]
  %v144 = vld [vmem:[%s3 + $0x310] sm:$0xff]
  %v145 = vld [vmem:[%s3 + $0x318] sm:$0xff]
  %v146 = vld [vmem:[%s3 + $0x320] sm:$0xff]
  %v147 = vld [vmem:[%s3 + $0x328] sm:$0xff]
  %v148 = vld [vmem:[%s3 + $0x330] sm:$0xff]
  %v149 = vld [vmem:[%s3 + $0x338] sm:$0xff]
  %v150 = vld [vmem:[%s3 + $0x340] sm:$0xff]
  %v151 = vld [vmem:[%s3 + $0x348] sm:$0xff]
  %v152 = vld [vmem:[%s3 + $0x350] sm:$0xff]
  %v153 = vld [vmem:[%s3 + $0x358] sm:$0xff]
  %v154 = vld [vmem:[%s3 + $0x360] sm:$0xff]
  %v155 = vld [vmem:[%s3 + $0x368] sm:$0xff]
  %v156 = vld [vmem:[%s3 + $0x370] sm:$0xff]
  %v157 = vld [vmem:[%s3 + $0x378] sm:$0xff]
  %v158 = vld [vmem:[%s3 + $0x380] sm:$0xff]
  %v159 = vld [vmem:[%s3 + $0x388] sm:$0xff]
  %v160 = vld [vmem:[%s3 + $0x390] sm:$0xff]
  %v161 = vld [vmem:[%s3 + $0x398] sm:$0xff]
  %v162 = vld [vmem:[%s3 + $0x3a0] sm:$0xff]
  %v163 = vld [vmem:[%s3 + $0x3a8] sm:$0xff]
  %v164 = vld [vmem:[%s3 + $0x3b0] sm:$0xff]
  %v165 = vld [vmem:[%s3 + $0x3b8] sm:$0xff]
  %v166 = vld [vmem:[%s3 + $0x3c0] sm:$0xff]
  %v167 = vld [vmem:[%s3 + $0x3c8] sm:$0xff]
  %v168 = vld [vmem:[%s3 + $0x3d0] sm:$0xff]
  %v169 = vld [vmem:[%s3 + $0x3d8] sm:$0xff]
  %v170 = vld [vmem:[%s3 + $0x3e0] sm:$0xff]
  %v171 = vld [vmem:[%s3 + $0x3e8] sm:$0xff]
  %v172 = vld [vmem:[%s3 + $0x3f0] sm:$0xff]
  %v173 = vld [vmem:[%s3 + $0x3f8] sm:$0xff]
  %v174 = vld [vmem:[%s3 + $0x400] sm:$0xff]
  %v175 = vld [vmem:[%s3 + $0x408] sm:$0xff]
  %v176 = vld [vmem:[%s3 + $0x410] sm:$0xff]
  %v177 = vld [vmem:[%s3 + $0x418] sm:$0xff]
  %v178 = vld [vmem:[%s3 + $0x420] sm:$0xff]
  %v179 = vld [vmem:[%s3 + $0x428] sm:$0xff]
  %v180 = vld [vmem:[%s3 + $0x430] sm:$0xff]
  %v181 = vld [vmem:[%s3 + $0x438] sm:$0xff]
  %v182 = vld [vmem:[%s3 + $0x440] sm:$0xff]
  %v183 = vld [vmem:[%s3 + $0x448] sm:$0xff]
  %v184 = vld [vmem:[%s3 + $0x450] sm:$0xff]
  %v185 = vld [vmem:[%s3 + $0x458] sm:$0xff]
  %v186 = vld [vmem:[%s3 + $0x460] sm:$0xff]
  %v187 = vld [vmem:[%s3 + $0x468] sm:$0xff]
  %v188 = vld [vmem:[%s3 + $0x470] sm:$0xff]
  %v189 = vld [vmem:[%s3 + $0x478] sm:$0xff]
  %v190 = vld [vmem:[%s3 + $0x480] sm:$0xff]
  %v191 = vld [vmem:[%s3 + $0x488] sm:$0xff]
  %v192 = vld [vmem:[%s3 + $0x490] sm:$0xff]
  %v193 = vld [vmem:[%s3 + $0x498] sm:$0xff]
  %v194 = vld [vmem:[%s3 + $0x4a0] sm:$0xff]
  %v195 = vld [vmem:[%s3 + $0x4a8] sm:$0xff]
  %v196 = vld [vmem:[%s3 + $0x4b0] sm:$0xff]
  %v197 = vld [vmem:[%s3 + $0x4b8] sm:$0xff]
  %v198 = vld [vmem:[%s3 + $0x4c0] sm:$0xff]
  %v199 = vld [vmem:[%s3 + $0x4c8] sm:$0xff]
  %v200 = vld [vmem:[%s3 + $0x4d0] sm:$0xff]
  %v201 = vld [vmem:[%s3 + $0x4d8] sm:$0xff]
  %v202 = vld [vmem:[%s3 + $0x4e0] sm:$0xff]
  %v203 = vld [vmem:[%s3 + $0x4e8] sm:$0xff]
  %v204 = vld [vmem:[%s3 + $0x4f0] sm:$0xff]
  %v205 = vld [vmem:[%s3 + $0x4f8] sm:$0xff]
  %v206 = vld [vmem:[%s3 + $0x500] sm:$0xff]
  %v207 = vld [vmem:[%s3 + $0x508] sm:$0xff]
  %v208 = vld [vmem:[%s3 + $0x510] sm:$0xff]
  %v209 = vld [vmem:[%s3 + $0x518] sm:$0xff]
  %v210 = vld [vmem:[%s3 + $0x520] sm:$0xff]
  %v211 = vld [vmem:[%s3 + $0x528] sm:$0xff]
  %v212 = vld [vmem:[%s3 + $0x530] sm:$0xff]
  %v213 = vld [vmem:[%s3 + $0x538] sm:$0xff]
  %v214 = vld [vmem:[%s6] sm:$0xff]
  %v215 = vld [vmem:[%s6 + $0x8] sm:$0xff]
  %v216 = vld [vmem:[%s6 + $0x10] sm:$0xff]
  %v217 = vld [vmem:[%s6 + $0x18] sm:$0xff]
  %v218 = vld [vmem:[%s6 + $0x20] sm:$0xff]
  %v219 = vld [vmem:[%s6 + $0x28] sm:$0xff]
  %v220 = vld [vmem:[%s6 + $0x30] sm:$0xff]
  %v221 = vld [vmem:[%s6 + $0x38] sm:$0xff]
  %v222 = vld [vmem:[%s6 + $0x40] sm:$0xff]
  %v223 = vld [vmem:[%s6 + $0x48] sm:$0xff]
  %v224 = vld [vmem:[%s6 + $0x50] sm:$0xff]
  %v225 = vld [vmem:[%s6 + $0x58] sm:$0xff]
  %v226 = vld [vmem:[%s1] sm:$0x3f]
  %v227 = vld [vmem:[%s2] sm:$0x3f]
  %v228 = vld [vmem:[%s4] sm:$0xff]
  %v229 = vld [vmem:[%s4 + $0x8] sm:$0xff]
  %v230 = vld [vmem:[%s4 + $0x10] sm:$0xff]
  %v231 = vld [vmem:[%s4 + $0x18] sm:$0xff]
  %v232 = vld [vmem:[%s5] sm:$0xff]
  %v233 = vld [vmem:[%s5 + $0x8] sm:$0xff]
  %v234 = vld [vmem:[%s7] sm:$0xff]
  %v235 = vld [vmem:[%s7 + $0x8] sm:$0xff]
  %v236 = vld [vmem:[%s7 + $0x10] sm:$0xff]
  %v237 = vld [vmem:[%s7 + $0x18] sm:$0xff]
  %v238 = vld [vmem:[%s7 + $0x20] sm:$0xff]
  %v239 = vld [vmem:[%s7 + $0x28] sm:$0xff]
  %v240 = vld [vmem:[%s7 + $0x30] sm:$0xff]
  %v241 = vld [vmem:[%s7 + $0x38] sm:$0xff]
  %v242 = vld [vmem:[%s7 + $0x40] sm:$0xff]
  %v243 = vld [vmem:[%s7 + $0x48] sm:$0xff]
  %v244 = vld [vmem:[%s7 + $0x50] sm:$0xff]
  %v245 = vld [vmem:[%s7 + $0x58] sm:$0xff]
  %v246 = vld [vmem:[%s7 + $0x60] sm:$0xff]
  %v247 = vld [vmem:[%s7 + $0x68] sm:$0xff]
  %v248 = vld [vmem:[%s7 + $0x70] sm:$0xff]
  %v249 = vld [vmem:[%s7 + $0x78] sm:$0xff]
  %v250 = vld [vmem:[%s7 + $0x80] sm:$0xff]
  %v251 = vld [vmem:[%s7 + $0x88] sm:$0xff]
  %v252 = vld [vmem:[%s7 + $0x90] sm:$0xff]
  %v253 = vld [vmem:[%s7 + $0x98] sm:$0xff]
  %v254 = vld [vmem:[%s7 + $0xa0] sm:$0xff]
  %v255 = vld [vmem:[%s7 + $0xa8] sm:$0xff]
  %v256 = vld [vmem:[%s7 + $0xb0] sm:$0xff]
  %v257 = vld [vmem:[%s7 + $0xb8] sm:$0xff]
  %v258 = vld [vmem:[%s7 + $0xc0] sm:$0xff]
  %v259 = vld [vmem:[%s7 + $0xc8] sm:$0xff]
  %v260 = vld [vmem:[%s7 + $0xd0] sm:$0xff]
  %v261 = vld [vmem:[%s7 + $0xd8] sm:$0xff]
  %v262 = vld [vmem:[%s7 + $0xe0] sm:$0xff]
  %v263 = vld [vmem:[%s7 + $0xe8] sm:$0xff]
  %v264 = vld [vmem:[%s8] sm:$0xff]
  %v265 = vld [vmem:[%s8 + $0x8] sm:$0xff]
  %v266 = vld [vmem:[%s8 + $0x10] sm:$0xff]
  %v267 = vld [vmem:[%s8 + $0x18] sm:$0xff]
  %v268 = vld [vmem:[%s8 + $0x20] sm:$0xff]
  %v269 = vld [vmem:[%s8 + $0x28] sm:$0xff]
  %v270 = vld [vmem:[%s8 + $0x30] sm:$0xff]
  %v271 = vld [vmem:[%s8 + $0x38] sm:$0xff]
  %v272 = vld [vmem:[%s8 + $0x40] sm:$0xff]
  %v273 = vld [vmem:[%s8 + $0x48] sm:$0xff]
  %v274 = vld [vmem:[%s8 + $0x50] sm:$0xff]
  %v275 = vld [vmem:[%s8 + $0x58] sm:$0xff]
  %v276 = vld [vmem:[%s8 + $0x60] sm:$0xff]
  %v277 = vld [vmem:[%s8 + $0x68] sm:$0xff]
  %v278 = vld [vmem:[%s8 + $0x70] sm:$0xff]
  %v279 = vld [vmem:[%s9] sm:$0xff]
  %v280 = vld [vmem:[%s9 + $0x8] sm:$0xff]
  %v281 = vld [vmem:[%s9 + $0x10] sm:$0xff]
  %v282 = vld [vmem:[%s9 + $0x18] sm:$0xff]
  %v283 = vld [vmem:[%s9 + $0x20] sm:$0xff]
  %v284 = vld [vmem:[%s9 + $0x28] sm:$0xff]
  %v285 = vld [vmem:[%s9 + $0x30] sm:$0xff]
  %v286 = vld [vmem:[%s9 + $0x38] sm:$0xff]
  %v287 = vld [vmem:[%s9 + $0x40] sm:$0xff]
  %v288 = vld [vmem:[%s9 + $0x48] sm:$0xff]
  %v289 = vld [vmem:[%s9 + $0x50] sm:$0xf]
  %v290 = vld [vmem:[%s10] sm:$0xff]
  %v291 = vld [vmem:[%s10 + $0x8] sm:$0xff]
  %v292 = vld [vmem:[%s10 + $0x10] sm:$0xff]
  %v293 = vld [vmem:[%s10 + $0x18] sm:$0xff]
  %v294 = vld [vmem:[%s10 + $0x20] sm:$0xff]
  %v295 = vld [vmem:[%s10 + $0x28] sm:$0xff]
  %v296 = vld [vmem:[%s10 + $0x30] sm:$0xff]
  %v297 = vld [vmem:[%s10 + $0x38] sm:$0xff]
  %v298 = vld [vmem:[%s10 + $0x40] sm:$0xff]
  %v299 = vld [vmem:[%s10 + $0x48] sm:$0xff]
  %v300 = vld [vmem:[%s10 + $0x50] sm:$0xf]
  %v301 = vld [vmem:[%s11] sm:$0xff]
  %v302 = vld [vmem:[%s11 + $0x8] sm:$0x3]
  %v303 = vld [vmem:[%s12] sm:$0xff]
  %v304 = vld [vmem:[%s12 + $0x8] sm:$0x3]
  %v307 = vlaneseq
  %v308 = vshrl.u32 %v307, 7
  %v309 = vsub.s32 0, %v308
  %v310 = vrot.slane %v44, %v309
  %v311 = vlaneseq
  %v312 = vshrl.u32 %v311, 7
  %v313 = vsub.s32 2, %v312
  %v314 = vrot.slane %v44, %v313
  %v315 = vlaneseq
  %v316 = vshrl.u32 %v315, 7
  %v317 = vsub.s32 4, %v316
  %v318 = vrot.slane %v44, %v317
  %v319 = vlaneseq
  %v320 = vshrl.u32 %v319, 7
  %v321 = vsub.s32 6, %v320
  %v322 = vrot.slane %v44, %v321
  %v323 = vlaneseq
  %v324 = vshrl.u32 %v323, 7
  %v325 = vsub.s32 0, %v324
  %v326 = vrot.slane %v45, %v325
  %v327 = vlaneseq
  %v328 = vshrl.u32 %v327, 7
  %v329 = vsub.s32 2, %v328
  %v330 = vrot.slane %v45, %v329
  %337 = vrot.lane.b32.xlu0 %v310, 127
  %v338 = vpop.permute.xlu0 %337
  %339 = vrot.lane.b32.xlu0 %v314, 127
  %v340 = vpop.permute.xlu0 %339
  %341 = vrot.lane.b32.xlu0 %v318, 127
  %v342 = vpop.permute.xlu0 %341
  %343 = vrot.lane.b32.xlu0 %v322, 127
  %v344 = vpop.permute.xlu0 %343
  %345 = vrot.lane.b32.xlu0 %v326, 127
  %v346 = vpop.permute.xlu0 %345
  %347 = vrot.lane.b32.xlu0 %v330, 127
  %v348 = vpop.permute.xlu0 %347
  %vm349 = vcmask 1039360
  %v350 = vsel %vm349, %v338, %v340
  %v351 = vsel %vm349, %v340, %v342
  %v352 = vsel %vm349, %v342, %v344
  %v353 = vsel %vm349, %v344, %v346
  %v354 = vsel %vm349, %v346, %v348
  %361 = vrot.lane.b32.xlu0 %v310, 126
  %v362 = vpop.permute.xlu0 %361
  %363 = vrot.lane.b32.xlu0 %v314, 126
  %v364 = vpop.permute.xlu0 %363
  %365 = vrot.lane.b32.xlu0 %v318, 126
  %v366 = vpop.permute.xlu0 %365
  %367 = vrot.lane.b32.xlu0 %v322, 126
  %v368 = vpop.permute.xlu0 %367
  %369 = vrot.lane.b32.xlu0 %v326, 126
  %v370 = vpop.permute.xlu0 %369
  %371 = vrot.lane.b32.xlu0 %v330, 126
  %v372 = vpop.permute.xlu0 %371
  %vm373 = vcmask 1031168
  %v374 = vsel %vm373, %v362, %v364
  %v375 = vsel %vm373, %v364, %v366
  %v376 = vsel %vm373, %v366, %v368
  %v377 = vsel %vm373, %v368, %v370
  %v378 = vsel %vm373, %v370, %v372
  %385 = vrot.lane.b32.xlu0 %v310, 125
  %v386 = vpop.permute.xlu0 %385
  %387 = vrot.lane.b32.xlu0 %v314, 125
  %v388 = vpop.permute.xlu0 %387
  %389 = vrot.lane.b32.xlu0 %v318, 125
  %v390 = vpop.permute.xlu0 %389
  %391 = vrot.lane.b32.xlu0 %v322, 125
  %v392 = vpop.permute.xlu0 %391
  %393 = vrot.lane.b32.xlu0 %v326, 125
  %v394 = vpop.permute.xlu0 %393
  %395 = vrot.lane.b32.xlu0 %v330, 125
  %v396 = vpop.permute.xlu0 %395
  %vm397 = vcmask 1022976
  %v398 = vsel %vm397, %v386, %v388
  %v399 = vsel %vm397, %v388, %v390
  %v400 = vsel %vm397, %v390, %v392
  %v401 = vsel %vm397, %v392, %v394
  %v402 = vsel %vm397, %v394, %v396
  %409 = vrot.lane.b32.xlu0 %v310, 124
  %v410 = vpop.permute.xlu0 %409
  %411 = vrot.lane.b32.xlu0 %v314, 124
  %v412 = vpop.permute.xlu0 %411
  %413 = vrot.lane.b32.xlu0 %v318, 124
  %v414 = vpop.permute.xlu0 %413
  %415 = vrot.lane.b32.xlu0 %v322, 124
  %v416 = vpop.permute.xlu0 %415
  %417 = vrot.lane.b32.xlu0 %v326, 124
  %v418 = vpop.permute.xlu0 %417
  %419 = vrot.lane.b32.xlu0 %v330, 124
  %v420 = vpop.permute.xlu0 %419
  %vm421 = vcmask 1014784
  %v422 = vsel %vm421, %v410, %v412
  %v423 = vsel %vm421, %v412, %v414
  %v424 = vsel %vm421, %v414, %v416
  %v425 = vsel %vm421, %v416, %v418
  %v426 = vsel %vm421, %v418, %v420
  %433 = vrot.lane.b32.xlu0 %v310, 100
  %v434 = vpop.permute.xlu0 %433
  %435 = vrot.lane.b32.xlu0 %v314, 100
  %v436 = vpop.permute.xlu0 %435
  %437 = vrot.lane.b32.xlu0 %v318, 100
  %v438 = vpop.permute.xlu0 %437
  %439 = vrot.lane.b32.xlu0 %v322, 100
  %v440 = vpop.permute.xlu0 %439
  %441 = vrot.lane.b32.xlu0 %v326, 100
  %v442 = vpop.permute.xlu0 %441
  %443 = vrot.lane.b32.xlu0 %v330, 100
  %v444 = vpop.permute.xlu0 %443
  %vm445 = vcmask 818176
  %v446 = vsel %vm445, %v434, %v436
  %v447 = vsel %vm445, %v436, %v438
  %v448 = vsel %vm445, %v438, %v440
  %v449 = vsel %vm445, %v440, %v442
  %v450 = vsel %vm445, %v442, %v444
  %457 = vrot.lane.b32.xlu0 %v310, 99
  %v458 = vpop.permute.xlu0 %457
  %459 = vrot.lane.b32.xlu0 %v314, 99
  %v460 = vpop.permute.xlu0 %459
  %461 = vrot.lane.b32.xlu0 %v318, 99
  %v462 = vpop.permute.xlu0 %461
  %463 = vrot.lane.b32.xlu0 %v322, 99
  %v464 = vpop.permute.xlu0 %463
  %465 = vrot.lane.b32.xlu0 %v326, 99
  %v466 = vpop.permute.xlu0 %465
  %467 = vrot.lane.b32.xlu0 %v330, 99
  %v468 = vpop.permute.xlu0 %467
  %vm469 = vcmask 809984
  %v470 = vsel %vm469, %v458, %v460
  %v471 = vsel %vm469, %v460, %v462
  %v472 = vsel %vm469, %v462, %v464
  %v473 = vsel %vm469, %v464, %v466
  %v474 = vsel %vm469, %v466, %v468
  %481 = vrot.lane.b32.xlu0 %v310, 98
  %v482 = vpop.permute.xlu0 %481
  %483 = vrot.lane.b32.xlu0 %v314, 98
  %v484 = vpop.permute.xlu0 %483
  %485 = vrot.lane.b32.xlu0 %v318, 98
  %v486 = vpop.permute.xlu0 %485
  %487 = vrot.lane.b32.xlu0 %v322, 98
  %v488 = vpop.permute.xlu0 %487
  %489 = vrot.lane.b32.xlu0 %v326, 98
  %v490 = vpop.permute.xlu0 %489
  %491 = vrot.lane.b32.xlu0 %v330, 98
  %v492 = vpop.permute.xlu0 %491
  %vm493 = vcmask 801792
  %v494 = vsel %vm493, %v482, %v484
  %v495 = vsel %vm493, %v484, %v486
  %v496 = vsel %vm493, %v486, %v488
  %v497 = vsel %vm493, %v488, %v490
  %v498 = vsel %vm493, %v490, %v492
  %505 = vrot.lane.b32.xlu0 %v310, 97
  %v506 = vpop.permute.xlu0 %505
  %507 = vrot.lane.b32.xlu0 %v314, 97
  %v508 = vpop.permute.xlu0 %507
  %509 = vrot.lane.b32.xlu0 %v318, 97
  %v510 = vpop.permute.xlu0 %509
  %511 = vrot.lane.b32.xlu0 %v322, 97
  %v512 = vpop.permute.xlu0 %511
  %513 = vrot.lane.b32.xlu0 %v326, 97
  %v514 = vpop.permute.xlu0 %513
  %515 = vrot.lane.b32.xlu0 %v330, 97
  %v516 = vpop.permute.xlu0 %515
  %vm517 = vcmask 793600
  %v518 = vsel %vm517, %v506, %v508
  %v519 = vsel %vm517, %v508, %v510
  %v520 = vsel %vm517, %v510, %v512
  %v521 = vsel %vm517, %v512, %v514
  %v522 = vsel %vm517, %v514, %v516
  %529 = vrot.lane.b32.xlu0 %v310, 96
  %v530 = vpop.permute.xlu0 %529
  %531 = vrot.lane.b32.xlu0 %v314, 96
  %v532 = vpop.permute.xlu0 %531
  %533 = vrot.lane.b32.xlu0 %v318, 96
  %v534 = vpop.permute.xlu0 %533
  %535 = vrot.lane.b32.xlu0 %v322, 96
  %v536 = vpop.permute.xlu0 %535
  %537 = vrot.lane.b32.xlu0 %v326, 96
  %v538 = vpop.permute.xlu0 %537
  %539 = vrot.lane.b32.xlu0 %v330, 96
  %v540 = vpop.permute.xlu0 %539
  %vm541 = vcmask 785408
  %v542 = vsel %vm541, %v530, %v532
  %v543 = vsel %vm541, %v532, %v534
  %v544 = vsel %vm541, %v534, %v536
  %v545 = vsel %vm541, %v536, %v538
  %v546 = vsel %vm541, %v538, %v540
  %553 = vrot.lane.b32.xlu0 %v310, 72
  %v554 = vpop.permute.xlu0 %553
  %555 = vrot.lane.b32.xlu0 %v314, 72
  %v556 = vpop.permute.xlu0 %555
  %557 = vrot.lane.b32.xlu0 %v318, 72
  %v558 = vpop.permute.xlu0 %557
  %559 = vrot.lane.b32.xlu0 %v322, 72
  %v560 = vpop.permute.xlu0 %559
  %561 = vrot.lane.b32.xlu0 %v326, 72
  %v562 = vpop.permute.xlu0 %561
  %563 = vrot.lane.b32.xlu0 %v330, 72
  %v564 = vpop.permute.xlu0 %563
  %vm565 = vcmask 588800
  %v566 = vsel %vm565, %v554, %v556
  %v567 = vsel %vm565, %v556, %v558
  %v568 = vsel %vm565, %v558, %v560
  %v569 = vsel %vm565, %v560, %v562
  %v570 = vsel %vm565, %v562, %v564
  %577 = vrot.lane.b32.xlu0 %v310, 71
  %v578 = vpop.permute.xlu0 %577
  %579 = vrot.lane.b32.xlu0 %v314, 71
  %v580 = vpop.permute.xlu0 %579
  %581 = vrot.lane.b32.xlu0 %v318, 71
  %v582 = vpop.permute.xlu0 %581
  %583 = vrot.lane.b32.xlu0 %v322, 71
  %v584 = vpop.permute.xlu0 %583
  %585 = vrot.lane.b32.xlu0 %v326, 71
  %v586 = vpop.permute.xlu0 %585
  %587 = vrot.lane.b32.xlu0 %v330, 71
  %v588 = vpop.permute.xlu0 %587
  %vm589 = vcmask 580608
  %v590 = vsel %vm589, %v578, %v580
  %v591 = vsel %vm589, %v580, %v582
  %v592 = vsel %vm589, %v582, %v584
  %v593 = vsel %vm589, %v584, %v586
  %v594 = vsel %vm589, %v586, %v588
  %601 = vrot.lane.b32.xlu0 %v310, 70
  %v602 = vpop.permute.xlu0 %601
  %603 = vrot.lane.b32.xlu0 %v314, 70
  %v604 = vpop.permute.xlu0 %603
  %605 = vrot.lane.b32.xlu0 %v318, 70
  %v606 = vpop.permute.xlu0 %605
  %607 = vrot.lane.b32.xlu0 %v322, 70
  %v608 = vpop.permute.xlu0 %607
  %609 = vrot.lane.b32.xlu0 %v326, 70
  %v610 = vpop.permute.xlu0 %609
  %611 = vrot.lane.b32.xlu0 %v330, 70
  %v612 = vpop.permute.xlu0 %611
  %vm613 = vcmask 572416
  %v614 = vsel %vm613, %v602, %v604
  %v615 = vsel %vm613, %v604, %v606
  %v616 = vsel %vm613, %v606, %v608
  %v617 = vsel %vm613, %v608, %v610
  %v618 = vsel %vm613, %v610, %v612
  %625 = vrot.lane.b32.xlu0 %v310, 69
  %v626 = vpop.permute.xlu0 %625
  %627 = vrot.lane.b32.xlu0 %v314, 69
  %v628 = vpop.permute.xlu0 %627
  %629 = vrot.lane.b32.xlu0 %v318, 69
  %v630 = vpop.permute.xlu0 %629
  %631 = vrot.lane.b32.xlu0 %v322, 69
  %v632 = vpop.permute.xlu0 %631
  %633 = vrot.lane.b32.xlu0 %v326, 69
  %v634 = vpop.permute.xlu0 %633
  %635 = vrot.lane.b32.xlu0 %v330, 69
  %v636 = vpop.permute.xlu0 %635
  %vm637 = vcmask 564224
  %v638 = vsel %vm637, %v626, %v628
  %v639 = vsel %vm637, %v628, %v630
  %v640 = vsel %vm637, %v630, %v632
  %v641 = vsel %vm637, %v632, %v634
  %v642 = vsel %vm637, %v634, %v636
  %649 = vrot.lane.b32.xlu0 %v310, 68
  %v650 = vpop.permute.xlu0 %649
  %651 = vrot.lane.b32.xlu0 %v314, 68
  %v652 = vpop.permute.xlu0 %651
  %653 = vrot.lane.b32.xlu0 %v318, 68
  %v654 = vpop.permute.xlu0 %653
  %655 = vrot.lane.b32.xlu0 %v322, 68
  %v656 = vpop.permute.xlu0 %655
  %657 = vrot.lane.b32.xlu0 %v326, 68
  %v658 = vpop.permute.xlu0 %657
  %659 = vrot.lane.b32.xlu0 %v330, 68
  %v660 = vpop.permute.xlu0 %659
  %vm661 = vcmask 556032
  %v662 = vsel %vm661, %v650, %v652
  %v663 = vsel %vm661, %v652, %v654
  %v664 = vsel %vm661, %v654, %v656
  %v665 = vsel %vm661, %v656, %v658
  %v666 = vsel %vm661, %v658, %v660
  %673 = vrot.lane.b32.xlu0 %v310, 44
  %v674 = vpop.permute.xlu0 %673
  %675 = vrot.lane.b32.xlu0 %v314, 44
  %v676 = vpop.permute.xlu0 %675
  %677 = vrot.lane.b32.xlu0 %v318, 44
  %v678 = vpop.permute.xlu0 %677
  %679 = vrot.lane.b32.xlu0 %v322, 44
  %v680 = vpop.permute.xlu0 %679
  %681 = vrot.lane.b32.xlu0 %v326, 44
  %v682 = vpop.permute.xlu0 %681
  %683 = vrot.lane.b32.xlu0 %v330, 44
  %v684 = vpop.permute.xlu0 %683
  %vm685 = vcmask 359424
  %v686 = vsel %vm685, %v674, %v676
  %v687 = vsel %vm685, %v676, %v678
  %v688 = vsel %vm685, %v678, %v680
  %v689 = vsel %vm685, %v680, %v682
  %v690 = vsel %vm685, %v682, %v684
  %vm697 = vcmask 1040384
  %v698 = vsel %vm697, %v310, %v350
  %v699 = vsel %vm697, %v314, %v351
  %v700 = vsel %vm697, %v318, %v352
  %v701 = vsel %vm697, %v322, %v353
  %v702 = vsel %vm697, %v326, %v354
  %v703 = vsel %vm697, %v330, %v348
  %vm704 = vcmask 1041408
  %v705 = vsel %vm704, %v698, %v374
  %v706 = vsel %vm704, %v699, %v375
  %v707 = vsel %vm704, %v700, %v376
  %v708 = vsel %vm704, %v701, %v377
  %v709 = vsel %vm704, %v702, %v378
  %v710 = vsel %vm704, %v703, %v372
  %vm711 = vcmask 1042432
  %v712 = vsel %vm711, %v705, %v398
  %v713 = vsel %vm711, %v706, %v399
  %v714 = vsel %vm711, %v707, %v400
  %v715 = vsel %vm711, %v708, %v401
  %v716 = vsel %vm711, %v709, %v402
  %v717 = vsel %vm711, %v710, %v396
  %vm718 = vcmask 1043456
  %v719 = vsel %vm718, %v712, %v422
  %v720 = vsel %vm718, %v713, %v423
  %v721 = vsel %vm718, %v714, %v424
  %v722 = vsel %vm718, %v715, %v425
  %v723 = vsel %vm718, %v716, %v426
  %v724 = vsel %vm718, %v717, %v420
  %vm725 = vcmask 1044480
  %v726 = vsel %vm725, %v719, %v446
  %v727 = vsel %vm725, %v720, %v447
  %v728 = vsel %vm725, %v721, %v448
  %v729 = vsel %vm725, %v722, %v449
  %v730 = vsel %vm725, %v723, %v450
  %v731 = vsel %vm725, %v724, %v444
  %vm732 = vcmask 1045504
  %v733 = vsel %vm732, %v726, %v470
  %v734 = vsel %vm732, %v727, %v471
  %v735 = vsel %vm732, %v728, %v472
  %v736 = vsel %vm732, %v729, %v473
  %v737 = vsel %vm732, %v730, %v474
  %v738 = vsel %vm732, %v731, %v468
  %vm739 = vcmask 1046528
  %v740 = vsel %vm739, %v733, %v494
  %v741 = vsel %vm739, %v734, %v495
  %v742 = vsel %vm739, %v735, %v496
  %v743 = vsel %vm739, %v736, %v497
  %v744 = vsel %vm739, %v737, %v498
  %v745 = vsel %vm739, %v738, %v492
  %v746 = vsel %vm697, %v518, %v542
  %v747 = vsel %vm697, %v519, %v543
  %v748 = vsel %vm697, %v520, %v544
  %v749 = vsel %vm697, %v521, %v545
  %v750 = vsel %vm697, %v522, %v546
  %v751 = vsel %vm697, %v516, %v540
  %v752 = vsel %vm704, %v746, %v566
  %v753 = vsel %vm704, %v747, %v567
  %v754 = vsel %vm704, %v748, %v568
  %v755 = vsel %vm704, %v749, %v569
  %v756 = vsel %vm704, %v750, %v570
  %v757 = vsel %vm704, %v751, %v564
  %v758 = vsel %vm711, %v752, %v590
  %v759 = vsel %vm711, %v753, %v591
  %v760 = vsel %vm711, %v754, %v592
  %v761 = vsel %vm711, %v755, %v593
  %v762 = vsel %vm711, %v756, %v594
  %v763 = vsel %vm711, %v757, %v588
  %v764 = vsel %vm718, %v758, %v614
  %v765 = vsel %vm718, %v759, %v615
  %v766 = vsel %vm718, %v760, %v616
  %v767 = vsel %vm718, %v761, %v617
  %v768 = vsel %vm718, %v762, %v618
  %v769 = vsel %vm718, %v763, %v612
  %v770 = vsel %vm725, %v764, %v638
  %v771 = vsel %vm725, %v765, %v639
  %v772 = vsel %vm725, %v766, %v640
  %v773 = vsel %vm725, %v767, %v641
  %v774 = vsel %vm725, %v768, %v642
  %v775 = vsel %vm725, %v769, %v636
  %v776 = vsel %vm732, %v770, %v662
  %v777 = vsel %vm732, %v771, %v663
  %v778 = vsel %vm732, %v772, %v664
  %v779 = vsel %vm732, %v773, %v665
  %v780 = vsel %vm732, %v774, %v666
  %v781 = vsel %vm732, %v775, %v660
  %v782 = vsel %vm739, %v776, %v686
  %v783 = vsel %vm739, %v777, %v687
  %v784 = vsel %vm739, %v778, %v688
  %v785 = vsel %vm739, %v779, %v689
  %v786 = vsel %vm739, %v780, %v690
  %v787 = vsel %vm739, %v781, %v684
  %v788 = vlaneseq
  %v789 = vshrl.u32 %v788, 7
  %v790 = vsub.s32 4, %v789
  %v791 = vrot.slane %v45, %v790
  %792 = vrot.lane.b32.xlu0 %v310, 101
  %v793 = vpop.permute.xlu0 %792
  %794 = vrot.lane.b32.xlu0 %v314, 101
  %v795 = vpop.permute.xlu0 %794
  %796 = vrot.lane.b32.xlu0 %v318, 101
  %v797 = vpop.permute.xlu0 %796
  %798 = vrot.lane.b32.xlu0 %v322, 101
  %v799 = vpop.permute.xlu0 %798
  %800 = vrot.lane.b32.xlu0 %v326, 101
  %v801 = vpop.permute.xlu0 %800
  %802 = vrot.lane.b32.xlu0 %v330, 101
  %v803 = vpop.permute.xlu0 %802
  %804 = vrot.lane.b32.xlu0 %v791, 101
  %v805 = vpop.permute.xlu0 %804
  %vm806 = vcmask 826368
  %v807 = vsel %vm806, %v793, %v795
  %v808 = vsel %vm806, %v795, %v797
  %v809 = vsel %vm806, %v797, %v799
  %v810 = vsel %vm806, %v799, %v801
  %v811 = vsel %vm806, %v801, %v803
  %v812 = vsel %vm806, %v803, %v805
  %819 = vrot.lane.b32.xlu0 %v791, 100
  %v820 = vpop.permute.xlu0 %819
  %v821 = vsel %vm445, %v444, %v820
  %823 = vrot.lane.b32.xlu0 %v791, 99
  %v824 = vpop.permute.xlu0 %823
  %v825 = vsel %vm469, %v468, %v824
  %827 = vrot.lane.b32.xlu0 %v791, 98
  %v828 = vpop.permute.xlu0 %827
  %v829 = vsel %vm493, %v492, %v828
  %831 = vrot.lane.b32.xlu0 %v791, 97
  %v832 = vpop.permute.xlu0 %831
  %v833 = vsel %vm517, %v516, %v832
  %v834 = vsel %vm718, %v712, %v807
  %v835 = vsel %vm718, %v713, %v808
  %v836 = vsel %vm718, %v714, %v809
  %v837 = vsel %vm718, %v715, %v810
  %v838 = vsel %vm718, %v716, %v811
  %v839 = vsel %vm718, %v717, %v812
  %v840 = vsel %vm725, %v834, %v446
  %v841 = vsel %vm725, %v835, %v447
  %v842 = vsel %vm725, %v836, %v448
  %v843 = vsel %vm725, %v837, %v449
  %v844 = vsel %vm725, %v838, %v450
  %v845 = vsel %vm725, %v839, %v821
  %v846 = vsel %vm732, %v840, %v470
  %v847 = vsel %vm732, %v841, %v471
  %v848 = vsel %vm732, %v842, %v472
  %v849 = vsel %vm732, %v843, %v473
  %v850 = vsel %vm732, %v844, %v474
  %v851 = vsel %vm732, %v845, %v825
  %v852 = vsel %vm739, %v846, %v494
  %v853 = vsel %vm739, %v847, %v495
  %v854 = vsel %vm739, %v848, %v496
  %v855 = vsel %vm739, %v849, %v497
  %v856 = vsel %vm739, %v850, %v498
  %v857 = vsel %vm739, %v851, %v829
  %864 = vrot.lane.b32.xlu0 %v852, 43
  %v865 = vpop.permute.xlu0 %864
  %866 = vrot.lane.b32.xlu0 %v853, 43
  %v867 = vpop.permute.xlu0 %866
  %868 = vrot.lane.b32.xlu0 %v854, 43
  %v869 = vpop.permute.xlu0 %868
  %870 = vrot.lane.b32.xlu0 %v855, 43
  %v871 = vpop.permute.xlu0 %870
  %872 = vrot.lane.b32.xlu0 %v856, 43
  %v873 = vpop.permute.xlu0 %872
  %874 = vrot.lane.b32.xlu0 %v857, 43
  %v875 = vpop.permute.xlu0 %874
  %876 = vrot.lane.b32.xlu0 %v518, 43
  %v877 = vpop.permute.xlu0 %876
  %878 = vrot.lane.b32.xlu0 %v519, 43
  %v879 = vpop.permute.xlu0 %878
  %880 = vrot.lane.b32.xlu0 %v520, 43
  %v881 = vpop.permute.xlu0 %880
  %882 = vrot.lane.b32.xlu0 %v521, 43
  %v883 = vpop.permute.xlu0 %882
  %884 = vrot.lane.b32.xlu0 %v522, 43
  %v885 = vpop.permute.xlu0 %884
  %886 = vrot.lane.b32.xlu0 %v833, 43
  %v887 = vpop.permute.xlu0 %886
  %vm888 = vcmask 351232
  %v889 = vsel %vm888, %v865, %v867
  %v890 = vsel %vm888, %v867, %v869
  %v891 = vsel %vm888, %v869, %v871
  %v892 = vsel %vm888, %v871, %v873
  %v893 = vsel %vm888, %v873, %v875
  %v894 = vsel %vm888, %v877, %v879
  %v895 = vsel %vm888, %v879, %v881
  %v896 = vsel %vm888, %v881, %v883
  %v897 = vsel %vm888, %v883, %v885
  %v898 = vsel %vm888, %v885, %v887
  %906 = vset.pattern.permute.xlu0 0
  %907 = vperm.xlu0 %906, %v227
  %v908 = vpop.permute.xlu0 %907
  %vm910 = vcmask 203776
  %v912 = vsel %vm910, %v226, 0
  %v914 = vsel %vm697, %v894, 0
  %v916 = vsel %vm697, %v895, 0
  %v918 = vsel %vm697, %v896, 0
  %v920 = vsel %vm697, %v897, 0
  %v922 = vsel %vm697, %v898, 0
  %v924 = vsel %vm697, %v887, 0
  %926 = vmatprep.subr.mxu0 %v741
  %927 = vmatpush1.msra.mxu0 %v740
  %928 = vmatprep.subr.mxu0 %v783
  %929 = vmatpush1.msra.mxu0 %v782
  %930 = vmatprep.subr.mxu0 %v890
  %931 = vmatpush1.msra.mxu0 %v889
  %932 = vmatprep.subr.mxu0 %v916
  %933 = vmatpush1.msra.mxu0 %v914
  %934 = vmatprep.subr.mxu0 0.0
  %935 = vmatpush1.msra.mxu0 0.0
  %936 = vmatprep.subr.mxu0 0.0
  %937 = vmatpush1.msra.mxu0 0.0
  %938 = vmatprep.subr.mxu0 0.0
  %939 = vmatpush1.msra.mxu0 0.0
  %940 = vmatprep.subr.mxu0 0.0
  %941 = vmatpush1.msra.mxu0 0.0
  %942 = vmatprep.subr.mxu0 0.0
  %943 = vmatpush1.msra.mxu0 0.0
  %944 = vmatprep.subr.mxu0 0.0
  %945 = vmatpush1.msra.mxu0 0.0
  %946 = vmatprep.subr.mxu0 0.0
  %947 = vmatpush1.msra.mxu0 0.0
  %948 = vmatprep.subr.mxu0 0.0
  %949 = vmatpush1.msra.mxu0 0.0
  %950 = vmatprep.subr.mxu0 0.0
  %951 = vmatpush1.msra.mxu0 0.0
  %952 = vmatprep.subr.mxu0 0.0
  %953 = vmatpush1.msra.mxu0 0.0
  %954 = vmatprep.subr.mxu0 0.0
  %955 = vmatpush1.msra.mxu0 0.0
  %956 = vmatprep.subr.mxu0 0.0
  %957 = vmatpush1.msra.mxu0 0.0
  %958 = vmatprep.subr.mxu0 0.0
  %959 = vmatpush1.msra.mxu0 0.0
  %960 = vmatprep.subr.mxu0 0.0
  %961 = vmatpush1.msra.mxu0 0.0
  %962 = vmatprep.subr.mxu0 0.0
  %963 = vmatpush1.msra.mxu0 0.0
  %964 = vmatprep.subr.mxu0 0.0
  %965 = vmatpush1.msra.mxu0 0.0
  %966 = vmatprep.subr.mxu0 0.0
  %967 = vmatpush1.msra.mxu0 0.0
  %968 = vmatprep.subr.mxu0 0.0
  %969 = vmatpush1.msra.mxu0 0.0
  %970 = vmatprep.subr.mxu0 0.0
  %971 = vmatpush1.msra.mxu0 0.0
  %972 = vmatprep.subr.mxu0 0.0
  %973 = vmatpush1.msra.mxu0 0.0
  %974 = vmatprep.subr.mxu0 0.0
  %975 = vmatpush1.msra.mxu0 0.0
  %976 = vmatprep.subr.mxu0 0.0
  %977 = vmatpush1.msra.mxu0 0.0
  %978 = vmatprep.subr.mxu0 0.0
  %979 = vmatpush1.msra.mxu0 0.0
  %980 = vmatprep.subr.mxu0 0.0
  %981 = vmatpush1.msra.mxu0 0.0
  %982 = vmatprep.subr.mxu0 0.0
  %983 = vmatpush1.msra.mxu0 0.0
  %984 = vmatprep.subr.mxu0 0.0
  %985 = vmatpush1.msra.mxu0 0.0
  %986 = vmatprep.subr.mxu0 0.0
  %987 = vmatpush1.msra.mxu0 0.0
  %988 = vmatprep.subr.mxu0 0.0
  %989 = vmatpush1.msra.mxu0 0.0
  %990 = vmatprep.mubr.f32.mxu0 0.0
  %991 = vmatmul.mubr.f32.gmra.mrb[0].mxu0 %v912
  %v992 = vpop.f32.mrb[0].mxu0
  %v993 = vadd.f32 %v908, %v992
  %v994 = vpop.f32.mrb[0].mxu0
  %v995 = vadd.f32 %v908, %v994
  %996 = vdwg.mxu0
  %997 = vmatprep.subr.mxu0 %v743
  %998 = vmatpush1.msra.mxu0 %v742
  %999 = vmatprep.subr.mxu0 %v785
  %1000 = vmatpush1.msra.mxu0 %v784
  %1001 = vmatprep.subr.mxu0 %v892
  %1002 = vmatpush1.msra.mxu0 %v891
  %1003 = vmatprep.subr.mxu0 %v920
  %1004 = vmatpush1.msra.mxu0 %v918
  %1005 = vmatprep.subr.mxu0 0.0
  %1006 = vmatpush1.msra.mxu0 0.0
  %1007 = vmatprep.subr.mxu0 0.0
  %1008 = vmatpush1.msra.mxu0 0.0
  %1009 = vmatprep.subr.mxu0 0.0
  %1010 = vmatpush1.msra.mxu0 0.0
  %1011 = vmatprep.subr.mxu0 0.0
  %1012 = vmatpush1.msra.mxu0 0.0
  %1013 = vmatprep.subr.mxu0 0.0
  %1014 = vmatpush1.msra.mxu0 0.0
  %1015 = vmatprep.subr.mxu0 0.0
  %1016 = vmatpush1.msra.mxu0 0.0
  %1017 = vmatprep.subr.mxu0 0.0
  %1018 = vmatpush1.msra.mxu0 0.0
  %1019 = vmatprep.subr.mxu0 0.0
  %1020 = vmatpush1.msra.mxu0 0.0
  %1021 = vmatprep.subr.mxu0 0.0
  %1022 = vmatpush1.msra.mxu0 0.0
  %1023 = vmatprep.subr.mxu0 0.0
  %1024 = vmatpush1.msra.mxu0 0.0
  %1025 = vmatprep.subr.mxu0 0.0
  %1026 = vmatpush1.msra.mxu0 0.0
  %1027 = vmatprep.subr.mxu0 0.0
  %1028 = vmatpush1.msra.mxu0 0.0
  %1029 = vmatprep.subr.mxu0 0.0
  %1030 = vmatpush1.msra.mxu0 0.0
  %1031 = vmatprep.subr.mxu0 0.0
  %1032 = vmatpush1.msra.mxu0 0.0
  %1033 = vmatprep.subr.mxu0 0.0
  %1034 = vmatpush1.msra.mxu0 0.0
  %1035 = vmatprep.subr.mxu0 0.0
  %1036 = vmatpush1.msra.mxu0 0.0
  %1037 = vmatprep.subr.mxu0 0.0
  %1038 = vmatpush1.msra.mxu0 0.0
  %1039 = vmatprep.subr.mxu0 0.0
  %1040 = vmatpush1.msra.mxu0 0.0
  %1041 = vmatprep.subr.mxu0 0.0
  %1042 = vmatpush1.msra.mxu0 0.0
  %1043 = vmatprep.subr.mxu0 0.0
  %1044 = vmatpush1.msra.mxu0 0.0
  %1045 = vmatprep.subr.mxu0 0.0
  %1046 = vmatpush1.msra.mxu0 0.0
  %1047 = vmatprep.subr.mxu0 0.0
  %1048 = vmatpush1.msra.mxu0 0.0
  %1049 = vmatprep.subr.mxu0 0.0
  %1050 = vmatpush1.msra.mxu0 0.0
  %1051 = vmatprep.subr.mxu0 0.0
  %1052 = vmatpush1.msra.mxu0 0.0
  %1053 = vmatprep.subr.mxu0 0.0
  %1054 = vmatpush1.msra.mxu0 0.0
  %1055 = vmatprep.subr.mxu0 0.0
  %1056 = vmatpush1.msra.mxu0 0.0
  %1057 = vmatprep.subr.mxu0 0.0
  %1058 = vmatpush1.msra.mxu0 0.0
  %1059 = vmatprep.subr.mxu0 0.0
  %1060 = vmatpush1.msra.mxu0 0.0
  %1061 = vmatprep.mubr.f32.mxu0 0.0
  %1062 = vmatmul.mubr.f32.gmra.mrb[0].mxu0 %v912
  %v1063 = vpop.f32.mrb[0].mxu0
  %v1064 = vadd.f32 %v908, %v1063
  %v1065 = vpop.f32.mrb[0].mxu0
  %v1066 = vadd.f32 %v908, %v1065
  %1067 = vdwg.mxu0
  %1068 = vmatprep.subr.mxu0 %v745
  %1069 = vmatpush1.msra.mxu0 %v744
  %1070 = vmatprep.subr.mxu0 %v787
  %1071 = vmatpush1.msra.mxu0 %v786
  %1072 = vmatprep.subr.mxu0 %v875
  %1073 = vmatpush1.msra.mxu0 %v893
  %1074 = vmatprep.subr.mxu0 %v924
  %1075 = vmatpush1.msra.mxu0 %v922
  %1076 = vmatprep.subr.mxu0 0.0
  %1077 = vmatpush1.msra.mxu0 0.0
  %1078 = vmatprep.subr.mxu0 0.0
  %1079 = vmatpush1.msra.mxu0 0.0
  %1080 = vmatprep.subr.mxu0 0.0
  %1081 = vmatpush1.msra.mxu0 0.0
  %1082 = vmatprep.subr.mxu0 0.0
  %1083 = vmatpush1.msra.mxu0 0.0
  %1084 = vmatprep.subr.mxu0 0.0
  %1085 = vmatpush1.msra.mxu0 0.0
  %1086 = vmatprep.subr.mxu0 0.0
  %1087 = vmatpush1.msra.mxu0 0.0
  %1088 = vmatprep.subr.mxu0 0.0
  %1089 = vmatpush1.msra.mxu0 0.0
  %1090 = vmatprep.subr.mxu0 0.0
  %1091 = vmatpush1.msra.mxu0 0.0
  %1092 = vmatprep.subr.mxu0 0.0
  %1093 = vmatpush1.msra.mxu0 0.0
  %1094 = vmatprep.subr.mxu0 0.0
  %1095 = vmatpush1.msra.mxu0 0.0
  %1096 = vmatprep.subr.mxu0 0.0
  %1097 = vmatpush1.msra.mxu0 0.0
  %1098 = vmatprep.subr.mxu0 0.0
  %1099 = vmatpush1.msra.mxu0 0.0
  %1100 = vmatprep.subr.mxu0 0.0
  %1101 = vmatpush1.msra.mxu0 0.0
  %1102 = vmatprep.subr.mxu0 0.0
  %1103 = vmatpush1.msra.mxu0 0.0
  %1104 = vmatprep.subr.mxu0 0.0
  %1105 = vmatpush1.msra.mxu0 0.0
  %1106 = vmatprep.subr.mxu0 0.0
  %1107 = vmatpush1.msra.mxu0 0.0
  %1108 = vmatprep.subr.mxu0 0.0
  %1109 = vmatpush1.msra.mxu0 0.0
  %1110 = vmatprep.subr.mxu0 0.0
  %1111 = vmatpush1.msra.mxu0 0.0
  %1112 = vmatprep.subr.mxu0 0.0
  %1113 = vmatpush1.msra.mxu0 0.0
  %1114 = vmatprep.subr.mxu0 0.0
  %1115 = vmatpush1.msra.mxu0 0.0
  %1116 = vmatprep.subr.mxu0 0.0
  %1117 = vmatpush1.msra.mxu0 0.0
  %1118 = vmatprep.subr.mxu0 0.0
  %1119 = vmatpush1.msra.mxu0 0.0
  %1120 = vmatprep.subr.mxu0 0.0
  %1121 = vmatpush1.msra.mxu0 0.0
  %1122 = vmatprep.subr.mxu0 0.0
  %1123 = vmatpush1.msra.mxu0 0.0
  %1124 = vmatprep.subr.mxu0 0.0
  %1125 = vmatpush1.msra.mxu0 0.0
  %1126 = vmatprep.subr.mxu0 0.0
  %1127 = vmatpush1.msra.mxu0 0.0
  %1128 = vmatprep.subr.mxu0 0.0
  %1129 = vmatpush1.msra.mxu0 0.0
  %1130 = vmatprep.subr.mxu0 0.0
  %1131 = vmatpush1.msra.mxu0 0.0
  %1132 = vmatprep.mubr.f32.mxu0 0.0
  %1133 = vmatmul.mubr.f32.gmra.mrb[0].mxu0 %v912
  %v1134 = vpop.f32.mrb[0].mxu0
  %v1135 = vadd.f32 %v908, %v1134
  %v1136 = vpop.f32.mrb[0].mxu0
  %v1137 = vadd.f32 %v908, %v1136
  %1138 = vdwg.mxu0
  %v1139 = vtanh.pop %v993
  %v1140 = vtanh.pop %v995
  %v1141 = vtanh.pop %v1064
  %v1142 = vtanh.pop %v1066
  %v1143 = vtanh.pop %v1135
  %v1144 = vtanh.pop %v1137
  %vm1145 = vcmask 261120
  %v1147 = vsel %vm1145, %v1144, 0
  %1149 = vmatprep.subr.mxu0 %v47
  %1150 = vmatpush1.msra.mxu0 %v46
  %1151 = vmatprep.subr.mxu0 %v49
  %1152 = vmatpush1.msra.mxu0 %v48
  %1153 = vmatprep.subr.mxu0 %v51
  %1154 = vmatpush1.msra.mxu0 %v50
  %1155 = vmatprep.subr.mxu0 %v53
  %1156 = vmatpush1.msra.mxu0 %v52
  %1157 = vmatprep.subr.mxu0 %v55
  %1158 = vmatpush1.msra.mxu0 %v54
  %1159 = vmatprep.subr.mxu0 %v57
  %1160 = vmatpush1.msra.mxu0 %v56
  %1161 = vmatprep.subr.mxu0 %v59
  %1162 = vmatpush1.msra.mxu0 %v58
  %1163 = vmatprep.subr.mxu0 %v61
  %1164 = vmatpush1.msra.mxu0 %v60
  %1165 = vmatprep.subr.mxu0 %v63
  %1166 = vmatpush1.msra.mxu0 %v62
  %1167 = vmatprep.subr.mxu0 %v65
  %1168 = vmatpush1.msra.mxu0 %v64
  %1169 = vmatprep.subr.mxu0 %v67
  %1170 = vmatpush1.msra.mxu0 %v66
  %1171 = vmatprep.subr.mxu0 %v69
  %1172 = vmatpush1.msra.mxu0 %v68
  %1173 = vmatprep.subr.mxu0 %v71
  %1174 = vmatpush1.msra.mxu0 %v70
  %1175 = vmatprep.subr.mxu0 %v73
  %1176 = vmatpush1.msra.mxu0 %v72
  %1177 = vmatprep.subr.mxu0 %v75
  %1178 = vmatpush1.msra.mxu0 %v74
  %1179 = vmatprep.subr.mxu0 %v77
  %1180 = vmatpush1.msra.mxu0 %v76
  %1181 = vmatprep.subr.mxu0 %v79
  %1182 = vmatpush1.msra.mxu0 %v78
  %1183 = vmatprep.subr.mxu0 %v81
  %1184 = vmatpush1.msra.mxu0 %v80
  %1185 = vmatprep.subr.mxu0 %v83
  %1186 = vmatpush1.msra.mxu0 %v82
  %1187 = vmatprep.subr.mxu0 %v85
  %1188 = vmatpush1.msra.mxu0 %v84
  %1189 = vmatprep.subr.mxu0 %v87
  %1190 = vmatpush1.msra.mxu0 %v86
  %1191 = vmatprep.subr.mxu0 %v89
  %1192 = vmatpush1.msra.mxu0 %v88
  %1193 = vmatprep.subr.mxu0 %v91
  %1194 = vmatpush1.msra.mxu0 %v90
  %1195 = vmatprep.subr.mxu0 %v93
  %1196 = vmatpush1.msra.mxu0 %v92
  %1197 = vmatprep.subr.mxu0 %v95
  %1198 = vmatpush1.msra.mxu0 %v94
  %1199 = vmatprep.subr.mxu0 %v97
  %1200 = vmatpush1.msra.mxu0 %v96
  %1201 = vmatprep.subr.mxu0 %v99
  %1202 = vmatpush1.msra.mxu0 %v98
  %1203 = vmatprep.subr.mxu0 %v101
  %1204 = vmatpush1.msra.mxu0 %v100
  %1205 = vmatprep.subr.mxu0 %v103
  %1206 = vmatpush1.msra.mxu0 %v102
  %1207 = vmatprep.subr.mxu0 %v105
  %1208 = vmatpush1.msra.mxu0 %v104
  %1209 = vmatprep.subr.mxu0 %v107
  %1210 = vmatpush1.msra.mxu0 %v106
  %1211 = vmatprep.subr.mxu0 %v109
  %1212 = vmatpush1.msra.mxu0 %v108
  %1213 = vmatprep.mubr.f32.mxu0 %v1140
  %1214 = vmatmul.mubr.f32.gmra.mrb[0].mxu0 %v1139
  %v1215 = vpop.f32.mrb[0].mxu0
  %v1216 = vadd.f32 0.0, %v1215
  %v1217 = vpop.f32.mrb[0].mxu0
  %v1218 = vadd.f32 0.0, %v1217
  %1219 = vdwg.mxu0
  %1220 = vmatprep.subr.mxu0 %v111
  %1221 = vmatpush1.msra.mxu0 %v110
  %1222 = vmatprep.subr.mxu0 %v113
  %1223 = vmatpush1.msra.mxu0 %v112
  %1224 = vmatprep.subr.mxu0 %v115
  %1225 = vmatpush1.msra.mxu0 %v114
  %1226 = vmatprep.subr.mxu0 %v117
  %1227 = vmatpush1.msra.mxu0 %v116
  %1228 = vmatprep.subr.mxu0 %v119
  %1229 = vmatpush1.msra.mxu0 %v118
  %1230 = vmatprep.subr.mxu0 %v121
  %1231 = vmatpush1.msra.mxu0 %v120
  %1232 = vmatprep.subr.mxu0 %v123
  %1233 = vmatpush1.msra.mxu0 %v122
  %1234 = vmatprep.subr.mxu0 %v125
  %1235 = vmatpush1.msra.mxu0 %v124
  %1236 = vmatprep.subr.mxu0 %v127
  %1237 = vmatpush1.msra.mxu0 %v126
  %1238 = vmatprep.subr.mxu0 %v129
  %1239 = vmatpush1.msra.mxu0 %v128
  %1240 = vmatprep.subr.mxu0 %v131
  %1241 = vmatpush1.msra.mxu0 %v130
  %1242 = vmatprep.subr.mxu0 %v133
  %1243 = vmatpush1.msra.mxu0 %v132
  %1244 = vmatprep.subr.mxu0 %v135
  %1245 = vmatpush1.msra.mxu0 %v134
  %1246 = vmatprep.subr.mxu0 %v137
  %1247 = vmatpush1.msra.mxu0 %v136
  %1248 = vmatprep.subr.mxu0 %v139
  %1249 = vmatpush1.msra.mxu0 %v138
  %1250 = vmatprep.subr.mxu0 %v141
  %1251 = vmatpush1.msra.mxu0 %v140
  %1252 = vmatprep.subr.mxu0 %v143
  %1253 = vmatpush1.msra.mxu0 %v142
  %1254 = vmatprep.subr.mxu0 %v145
  %1255 = vmatpush1.msra.mxu0 %v144
  %1256 = vmatprep.subr.mxu0 %v147
  %1257 = vmatpush1.msra.mxu0 %v146
  %1258 = vmatprep.subr.mxu0 %v149
  %1259 = vmatpush1.msra.mxu0 %v148
  %1260 = vmatprep.subr.mxu0 %v151
  %1261 = vmatpush1.msra.mxu0 %v150
  %1262 = vmatprep.subr.mxu0 %v153
  %1263 = vmatpush1.msra.mxu0 %v152
  %1264 = vmatprep.subr.mxu0 %v155
  %1265 = vmatpush1.msra.mxu0 %v154
  %1266 = vmatprep.subr.mxu0 %v157
  %1267 = vmatpush1.msra.mxu0 %v156
  %1268 = vmatprep.subr.mxu0 %v159
  %1269 = vmatpush1.msra.mxu0 %v158
  %1270 = vmatprep.subr.mxu0 %v161
  %1271 = vmatpush1.msra.mxu0 %v160
  %1272 = vmatprep.subr.mxu0 %v163
  %1273 = vmatpush1.msra.mxu0 %v162
  %1274 = vmatprep.subr.mxu0 %v165
  %1275 = vmatpush1.msra.mxu0 %v164
  %1276 = vmatprep.subr.mxu0 %v167
  %1277 = vmatpush1.msra.mxu0 %v166
  %1278 = vmatprep.subr.mxu0 %v169
  %1279 = vmatpush1.msra.mxu0 %v168
  %1280 = vmatprep.subr.mxu0 %v171
  %1281 = vmatpush1.msra.mxu0 %v170
  %1282 = vmatprep.subr.mxu0 %v173
  %1283 = vmatpush1.msra.mxu0 %v172
  %1284 = vmatprep.mubr.f32.mxu0 %v1142
  %1285 = vmatmul.mubr.f32.gmra.mrb[0].mxu0 %v1141
  %v1286 = vpop.f32.mrb[0].mxu0
  %v1287 = vadd.f32 %v1216, %v1286
  %v1288 = vpop.f32.mrb[0].mxu0
  %v1289 = vadd.f32 %v1218, %v1288
  %1290 = vdwg.mxu0
  %1291 = vmatprep.subr.mxu0 %v175
  %1292 = vmatpush1.msra.mxu0 %v174
  %1293 = vmatprep.subr.mxu0 %v177
  %1294 = vmatpush1.msra.mxu0 %v176
  %1295 = vmatprep.subr.mxu0 %v179
  %1296 = vmatpush1.msra.mxu0 %v178
  %1297 = vmatprep.subr.mxu0 %v181
  %1298 = vmatpush1.msra.mxu0 %v180
  %1299 = vmatprep.subr.mxu0 %v183
  %1300 = vmatpush1.msra.mxu0 %v182
  %1301 = vmatprep.subr.mxu0 %v185
  %1302 = vmatpush1.msra.mxu0 %v184
  %1303 = vmatprep.subr.mxu0 %v187
  %1304 = vmatpush1.msra.mxu0 %v186
  %1305 = vmatprep.subr.mxu0 %v189
  %1306 = vmatpush1.msra.mxu0 %v188
  %1307 = vmatprep.subr.mxu0 %v191
  %1308 = vmatpush1.msra.mxu0 %v190
  %1309 = vmatprep.subr.mxu0 %v193
  %1310 = vmatpush1.msra.mxu0 %v192
  %1311 = vmatprep.subr.mxu0 %v195
  %1312 = vmatpush1.msra.mxu0 %v194
  %1313 = vmatprep.subr.mxu0 %v197
  %1314 = vmatpush1.msra.mxu0 %v196
  %1315 = vmatprep.subr.mxu0 %v199
  %1316 = vmatpush1.msra.mxu0 %v198
  %1317 = vmatprep.subr.mxu0 %v201
  %1318 = vmatpush1.msra.mxu0 %v200
  %1319 = vmatprep.subr.mxu0 %v203
  %1320 = vmatpush1.msra.mxu0 %v202
  %1321 = vmatprep.subr.mxu0 %v205
  %1322 = vmatpush1.msra.mxu0 %v204
  %1323 = vmatprep.subr.mxu0 %v207
  %1324 = vmatpush1.msra.mxu0 %v206
  %1325 = vmatprep.subr.mxu0 %v209
  %1326 = vmatpush1.msra.mxu0 %v208
  %1327 = vmatprep.subr.mxu0 %v211
  %1328 = vmatpush1.msra.mxu0 %v210
  %1329 = vmatprep.subr.mxu0 %v213
  %1330 = vmatpush1.msra.mxu0 %v212
  %1331 = vmatprep.subr.mxu0 0.0
  %1332 = vmatpush1.msra.mxu0 0.0
  %1333 = vmatprep.subr.mxu0 0.0
  %1334 = vmatpush1.msra.mxu0 0.0
  %1335 = vmatprep.subr.mxu0 0.0
  %1336 = vmatpush1.msra.mxu0 0.0
  %1337 = vmatprep.subr.mxu0 0.0
  %1338 = vmatpush1.msra.mxu0 0.0
  %1339 = vmatprep.subr.mxu0 0.0
  %1340 = vmatpush1.msra.mxu0 0.0
  %1341 = vmatprep.subr.mxu0 0.0
  %1342 = vmatpush1.msra.mxu0 0.0
  %1343 = vmatprep.subr.mxu0 0.0
  %1344 = vmatpush1.msra.mxu0 0.0
  %1345 = vmatprep.subr.mxu0 0.0
  %1346 = vmatpush1.msra.mxu0 0.0
  %1347 = vmatprep.subr.mxu0 0.0
  %1348 = vmatpush1.msra.mxu0 0.0
  %1349 = vmatprep.subr.mxu0 0.0
  %1350 = vmatpush1.msra.mxu0 0.0
  %1351 = vmatprep.subr.mxu0 0.0
  %1352 = vmatpush1.msra.mxu0 0.0
  %1353 = vmatprep.subr.mxu0 0.0
  %1354 = vmatpush1.msra.mxu0 0.0
  %1355 = vmatprep.mubr.f32.mxu0 %v1147
  %1356 = vmatmul.mubr.f32.gmra.mrb[0].mxu0 %v1143
  %v1357 = vpop.f32.mrb[0].mxu0
  %v1358 = vadd.f32 %v1287, %v1357
  %v1359 = vpop.f32.mrb[0].mxu0
  %v1360 = vadd.f32 %v1289, %v1359
  %1361 = vdwg.mxu0
  %v1363 = vrot.slane %v1358, 2
  %1364 = vrot.lane.b32.xlu0 %v1363, 127
  %v1365 = vpop.permute.xlu0 %1364
  %v1367 = vrot.slane %v1358, 4
  %1368 = vrot.lane.b32.xlu0 %v1367, 126
  %v1369 = vpop.permute.xlu0 %1368
  %v1371 = vrot.slane %v1358, 6
  %1372 = vrot.lane.b32.xlu0 %v1371, 125
  %v1373 = vpop.permute.xlu0 %1372
  %1375 = vrot.lane.b32.xlu0 %v1358, 124
  %v1376 = vpop.permute.xlu0 %1375
  %1378 = vrot.lane.b32.xlu0 %v1363, 116
  %v1379 = vpop.permute.xlu0 %1378
  %1381 = vrot.lane.b32.xlu0 %v1367, 115
  %v1382 = vpop.permute.xlu0 %1381
  %1384 = vrot.lane.b32.xlu0 %v1371, 114
  %v1385 = vpop.permute.xlu0 %1384
  %1387 = vrot.lane.b32.xlu0 %v1358, 113
  %v1388 = vpop.permute.xlu0 %1387
  %1390 = vrot.lane.b32.xlu0 %v1363, 112
  %v1391 = vpop.permute.xlu0 %1390
  %1393 = vrot.lane.b32.xlu0 %v1367, 104
  %v1394 = vpop.permute.xlu0 %1393
  %1396 = vrot.lane.b32.xlu0 %v1371, 103
  %v1397 = vpop.permute.xlu0 %1396
  %1399 = vrot.lane.b32.xlu0 %v1358, 102
  %v1400 = vpop.permute.xlu0 %1399
  %1402 = vrot.lane.b32.xlu0 %v1363, 101
  %v1403 = vpop.permute.xlu0 %1402
  %1405 = vrot.lane.b32.xlu0 %v1367, 100
  %v1406 = vpop.permute.xlu0 %1405
  %v1409 = vrot.slane %v1360, 6
  %1410 = vrot.lane.b32.xlu0 %v1371, 92
  %v1411 = vpop.permute.xlu0 %1410
  %1412 = vrot.lane.b32.xlu0 %v1409, 92
  %v1413 = vpop.permute.xlu0 %1412
  %vm1414 = vcmask 752640
  %v1415 = vsel %vm1414, %v1411, %v1413
  %v1417 = vsel %vm732, %v1358, %v1365
  %v1418 = vsel %vm718, %v1365, %v1369
  %v1419 = vsel %vm704, %v1369, %v1373
  %v1420 = vsel %vm732, %v1376, %v1379
  %v1421 = vsel %vm718, %v1379, %v1382
  %v1422 = vsel %vm704, %v1382, %v1385
  %v1423 = vsel %vm732, %v1388, %v1391
  %v1424 = vsel %vm718, %v1391, %v1394
  %v1425 = vsel %vm704, %v1394, %v1397
  %v1426 = vsel %vm732, %v1400, %v1403
  %v1427 = vsel %vm718, %v1403, %v1406
  %v1428 = vsel %vm704, %v1406, %v1415
  %v1429 = vrot.slane %v1360, 2
  %1430 = vrot.lane.b32.xlu0 %v1429, 127
  %v1431 = vpop.permute.xlu0 %1430
  %v1432 = vsel %vm349, %v1365, %v1431
  %v1435 = vrot.slane %v1360, 4
  %1436 = vrot.lane.b32.xlu0 %v1435, 126
  %v1437 = vpop.permute.xlu0 %1436
  %v1438 = vsel %vm373, %v1369, %v1437
  %1441 = vrot.lane.b32.xlu0 %v1409, 125
  %v1442 = vpop.permute.xlu0 %1441
  %v1443 = vsel %vm397, %v1373, %v1442
  %1446 = vrot.lane.b32.xlu0 %v1358, 117
  %v1447 = vpop.permute.xlu0 %1446
  %1448 = vrot.lane.b32.xlu0 %v1360, 117
  %v1449 = vpop.permute.xlu0 %1448
  %vm1450 = vcmask 957440
  %v1451 = vsel %vm1450, %v1447, %v1449
  %1454 = vrot.lane.b32.xlu0 %v1429, 116
  %v1455 = vpop.permute.xlu0 %1454
  %vm1456 = vcmask 949248
  %v1457 = vsel %vm1456, %v1379, %v1455
  %1460 = vrot.lane.b32.xlu0 %v1435, 115
  %v1461 = vpop.permute.xlu0 %1460
  %vm1462 = vcmask 941056
  %v1463 = vsel %vm1462, %v1382, %v1461
  %1466 = vrot.lane.b32.xlu0 %v1409, 114
  %v1467 = vpop.permute.xlu0 %1466
  %vm1468 = vcmask 932864
  %v1469 = vsel %vm1468, %v1385, %v1467
  %1472 = vrot.lane.b32.xlu0 %v1360, 113
  %v1473 = vpop.permute.xlu0 %1472
  %vm1474 = vcmask 924672
  %v1475 = vsel %vm1474, %v1388, %v1473
  %v1476 = vsel %vm732, %v1358, %v1432
  %v1477 = vsel %vm732, %v1360, %v1431
  %v1478 = vsel %vm718, %v1432, %v1438
  %v1479 = vsel %vm718, %v1431, %v1437
  %v1480 = vsel %vm704, %v1438, %v1443
  %v1481 = vsel %vm704, %v1437, %v1442
  %v1482 = vsel %vm732, %v1451, %v1457
  %v1483 = vsel %vm732, %v1449, %v1455
  %v1484 = vsel %vm718, %v1457, %v1463
  %v1485 = vsel %vm718, %v1455, %v1461
  %v1486 = vsel %vm704, %v1463, %v1469
  %v1487 = vsel %vm704, %v1461, %v1467
  %1500 = vrot.lane.b32.xlu0 %v1476, 91
  %v1501 = vpop.permute.xlu0 %1500
  %1502 = vrot.lane.b32.xlu0 %v1477, 91
  %v1503 = vpop.permute.xlu0 %1502
  %1504 = vrot.lane.b32.xlu0 %v1478, 91
  %v1505 = vpop.permute.xlu0 %1504
  %1506 = vrot.lane.b32.xlu0 %v1479, 91
  %v1507 = vpop.permute.xlu0 %1506
  %1508 = vrot.lane.b32.xlu0 %v1480, 91
  %v1509 = vpop.permute.xlu0 %1508
  %1510 = vrot.lane.b32.xlu0 %v1481, 91
  %v1511 = vpop.permute.xlu0 %1510
  %1512 = vrot.lane.b32.xlu0 %v1482, 91
  %v1513 = vpop.permute.xlu0 %1512
  %1514 = vrot.lane.b32.xlu0 %v1483, 91
  %v1515 = vpop.permute.xlu0 %1514
  %1516 = vrot.lane.b32.xlu0 %v1484, 91
  %v1517 = vpop.permute.xlu0 %1516
  %1518 = vrot.lane.b32.xlu0 %v1485, 91
  %v1519 = vpop.permute.xlu0 %1518
  %1520 = vrot.lane.b32.xlu0 %v1486, 91
  %v1521 = vpop.permute.xlu0 %1520
  %1522 = vrot.lane.b32.xlu0 %v1487, 91
  %v1523 = vpop.permute.xlu0 %1522
  %1524 = vrot.lane.b32.xlu0 %v1475, 91
  %v1525 = vpop.permute.xlu0 %1524
  %1526 = vrot.lane.b32.xlu0 %v1473, 91
  %v1527 = vpop.permute.xlu0 %1526
  %vm1528 = vcmask 744448
  %v1529 = vsel %vm1528, %v1501, %v1503
  %v1530 = vsel %vm1528, %v1505, %v1507
  %v1531 = vsel %vm1528, %v1509, %v1511
  %v1532 = vsel %vm1528, %v1513, %v1515
  %v1533 = vsel %vm1528, %v1517, %v1519
  %v1534 = vsel %vm1528, %v1521, %v1523
  %v1535 = vsel %vm1528, %v1525, %v1527
  %1543 = vset.pattern.permute.xlu0 0
  %1544 = vperm.xlu0 %1543, %v232
  %v1545 = vpop.permute.xlu0 %1544
  %1548 = vset.pattern.permute.xlu0 0
  %1549 = vperm.xlu0 %1548, %v233
  %v1550 = vpop.permute.xlu0 %1549
  %vm1552 = vcmask 179200
  %v1554 = vsel %vm1552, %v229, 0
  %v1557 = vsel %vm1552, %v231, 0
  %v1559 = vsel %vm732, %v1535, 0
  %1561 = vmatprep.subr.mxu0 0.0
  %1562 = vmatpush1.msra.mxu0 %v1417
  %1563 = vmatprep.subr.mxu0 0.0
  %1564 = vmatpush1.msra.mxu0 %v1418
  %1565 = vmatprep.subr.mxu0 0.0
  %1566 = vmatpush1.msra.mxu0 %v1419
  %1567 = vmatprep.subr.mxu0 0.0
  %1568 = vmatpush1.msra.mxu0 %v1420
  %1569 = vmatprep.subr.mxu0 0.0
  %1570 = vmatpush1.msra.mxu0 %v1421
  %1571 = vmatprep.subr.mxu0 0.0
  %1572 = vmatpush1.msra.mxu0 %v1422
  %1573 = vmatprep.subr.mxu0 0.0
  %1574 = vmatpush1.msra.mxu0 %v1423
  %1575 = vmatprep.subr.mxu0 0.0
  %1576 = vmatpush1.msra.mxu0 %v1424
  %1577 = vmatprep.subr.mxu0 0.0
  %1578 = vmatpush1.msra.mxu0 %v1425
  %1579 = vmatprep.subr.mxu0 0.0
  %1580 = vmatpush1.msra.mxu0 %v1426
  %1581 = vmatprep.subr.mxu0 0.0
  %1582 = vmatpush1.msra.mxu0 %v1427
  %1583 = vmatprep.subr.mxu0 0.0
  %1584 = vmatpush1.msra.mxu0 %v1428
  %1585 = vmatprep.subr.mxu0 0.0
  %1586 = vmatpush1.msra.mxu0 %v1529
  %1587 = vmatprep.subr.mxu0 0.0
  %1588 = vmatpush1.msra.mxu0 %v1530
  %1589 = vmatprep.subr.mxu0 0.0
  %1590 = vmatpush1.msra.mxu0 %v1531
  %1591 = vmatprep.subr.mxu0 0.0
  %1592 = vmatpush1.msra.mxu0 %v1532
  %1593 = vmatprep.subr.mxu0 0.0
  %1594 = vmatpush1.msra.mxu0 %v1533
  %1595 = vmatprep.subr.mxu0 0.0
  %1596 = vmatpush1.msra.mxu0 %v1534
  %1597 = vmatprep.subr.mxu0 0.0
  %1598 = vmatpush1.msra.mxu0 %v1559
  %1599 = vmatprep.subr.mxu0 0.0
  %1600 = vmatpush1.msra.mxu0 0.0
  %1601 = vmatprep.subr.mxu0 0.0
  %1602 = vmatpush1.msra.mxu0 0.0
  %1603 = vmatprep.subr.mxu0 0.0
  %1604 = vmatpush1.msra.mxu0 0.0
  %1605 = vmatprep.subr.mxu0 0.0
  %1606 = vmatpush1.msra.mxu0 0.0
  %1607 = vmatprep.subr.mxu0 0.0
  %1608 = vmatpush1.msra.mxu0 0.0
  %1609 = vmatprep.subr.mxu0 0.0
  %1610 = vmatpush1.msra.mxu0 0.0
  %1611 = vmatprep.subr.mxu0 0.0
  %1612 = vmatpush1.msra.mxu0 0.0
  %1613 = vmatprep.subr.mxu0 0.0
  %1614 = vmatpush1.msra.mxu0 0.0
  %1615 = vmatprep.subr.mxu0 0.0
  %1616 = vmatpush1.msra.mxu0 0.0
  %1617 = vmatprep.subr.mxu0 0.0
  %1618 = vmatpush1.msra.mxu0 0.0
  %1619 = vmatprep.subr.mxu0 0.0
  %1620 = vmatpush1.msra.mxu0 0.0
  %1621 = vmatprep.subr.mxu0 0.0
  %1622 = vmatpush1.msra.mxu0 0.0
  %1623 = vmatprep.subr.mxu0 0.0
  %1624 = vmatpush1.msra.mxu0 0.0
  %1625 = vmatprep.mubr.f32.mxu0 %v1554
  %1626 = vmatmul.mubr.f32.gmra.mrb[0].mxu0 %v228
  %v1627 = vpop.f32.mrb[0].mxu0
  %v1628 = vadd.f32 %v1545, %v1627
  %v1629 = vpop.f32.mrb[0].mxu0
  %1630 = vmatprep.mubr.f32.mxu0 %v1557
  %1631 = vmatmul.mubr.f32.gmra.mrb[0].mxu0 %v230
  %v1632 = vpop.f32.mrb[0].mxu0
  %v1633 = vadd.f32 %v1550, %v1632
  %v1634 = vpop.f32.mrb[0].mxu0
  %1635 = vdwg.mxu0
  %v1636 = vtanh.pop %v1628
  %v1637 = vtanh.pop %v1633
  %v1639 = vsel %vm541, %v1636, 0
  %v1642 = vsel %vm541, %v1637, 0
  %1644 = vmatprep.subr.mxu0 0.0
  %1645 = vmatpush1.msra.mxu0 %v214
  %1646 = vmatprep.subr.mxu0 0.0
  %1647 = vmatpush1.msra.mxu0 %v215
  %1648 = vmatprep.subr.mxu0 0.0
  %1649 = vmatpush1.msra.mxu0 %v216
  %1650 = vmatprep.subr.mxu0 0.0
  %1651 = vmatpush1.msra.mxu0 %v217
  %1652 = vmatprep.subr.mxu0 0.0
  %1653 = vmatpush1.msra.mxu0 %v218
  %1654 = vmatprep.subr.mxu0 0.0
  %1655 = vmatpush1.msra.mxu0 %v219
  %1656 = vmatprep.subr.mxu0 0.0
  %1657 = vmatpush1.msra.mxu0 %v220
  %1658 = vmatprep.subr.mxu0 0.0
  %1659 = vmatpush1.msra.mxu0 %v221
  %1660 = vmatprep.subr.mxu0 0.0
  %1661 = vmatpush1.msra.mxu0 %v222
  %1662 = vmatprep.subr.mxu0 0.0
  %1663 = vmatpush1.msra.mxu0 %v223
  %1664 = vmatprep.subr.mxu0 0.0
  %1665 = vmatpush1.msra.mxu0 %v224
  %1666 = vmatprep.subr.mxu0 0.0
  %1667 = vmatpush1.msra.mxu0 %v225
  %1668 = vmatprep.subr.mxu0 0.0
  %1669 = vmatpush1.msra.mxu0 0.0
  %1670 = vmatprep.subr.mxu0 0.0
  %1671 = vmatpush1.msra.mxu0 0.0
  %1672 = vmatprep.subr.mxu0 0.0
  %1673 = vmatpush1.msra.mxu0 0.0
  %1674 = vmatprep.subr.mxu0 0.0
  %1675 = vmatpush1.msra.mxu0 0.0
  %1676 = vmatprep.subr.mxu0 0.0
  %1677 = vmatpush1.msra.mxu0 0.0
  %1678 = vmatprep.subr.mxu0 0.0
  %1679 = vmatpush1.msra.mxu0 0.0
  %1680 = vmatprep.subr.mxu0 0.0
  %1681 = vmatpush1.msra.mxu0 0.0
  %1682 = vmatprep.subr.mxu0 0.0
  %1683 = vmatpush1.msra.mxu0 0.0
  %1684 = vmatprep.subr.mxu0 0.0
  %1685 = vmatpush1.msra.mxu0 0.0
  %1686 = vmatprep.subr.mxu0 0.0
  %1687 = vmatpush1.msra.mxu0 0.0
  %1688 = vmatprep.subr.mxu0 0.0
  %1689 = vmatpush1.msra.mxu0 0.0
  %1690 = vmatprep.subr.mxu0 0.0
  %1691 = vmatpush1.msra.mxu0 0.0
  %1692 = vmatprep.subr.mxu0 0.0
  %1693 = vmatpush1.msra.mxu0 0.0
  %1694 = vmatprep.subr.mxu0 0.0
  %1695 = vmatpush1.msra.mxu0 0.0
  %1696 = vmatprep.subr.mxu0 0.0
  %1697 = vmatpush1.msra.mxu0 0.0
  %1698 = vmatprep.subr.mxu0 0.0
  %1699 = vmatpush1.msra.mxu0 0.0
  %1700 = vmatprep.subr.mxu0 0.0
  %1701 = vmatpush1.msra.mxu0 0.0
  %1702 = vmatprep.subr.mxu0 0.0
  %1703 = vmatpush1.msra.mxu0 0.0
  %1704 = vmatprep.subr.mxu0 0.0
  %1705 = vmatpush1.msra.mxu0 0.0
  %1706 = vmatprep.subr.mxu0 0.0
  %1707 = vmatpush1.msra.mxu0 0.0
  %1708 = vmatprep.mubr.f32.mxu0 0.0
  %1709 = vmatmul.mubr.f32.gmra.mrb[0].mxu0 %v1639
  %v1710 = vpop.f32.mrb[0].mxu0
  %v1711 = vadd.f32 0.0, %v1710
  %v1712 = vpop.f32.mrb[0].mxu0
  %1713 = vmatprep.mubr.f32.mxu0 0.0
  %1714 = vmatmul.mubr.f32.gmra.mrb[0].mxu0 %v1642
  %v1715 = vpop.f32.mrb[0].mxu0
  %v1716 = vadd.f32 0.0, %v1715
  %v1717 = vpop.f32.mrb[0].mxu0
  %1718 = vdwg.mxu0
  %1721 = vrot.lane.b32.xlu0 %v1711, 127
  %v1722 = vpop.permute.xlu0 %1721
  %1723 = vrot.lane.b32.xlu0 %v1716, 127
  %v1724 = vpop.permute.xlu0 %1723
  %1727 = vrot.lane.b32.xlu0 %v1711, 126
  %v1728 = vpop.permute.xlu0 %1727
  %1729 = vrot.lane.b32.xlu0 %v1716, 126
  %v1730 = vpop.permute.xlu0 %1729
  %1733 = vrot.lane.b32.xlu0 %v1711, 125
  %v1734 = vpop.permute.xlu0 %1733
  %1735 = vrot.lane.b32.xlu0 %v1716, 125
  %v1736 = vpop.permute.xlu0 %1735
  %1739 = vrot.lane.b32.xlu0 %v1711, 124
  %v1740 = vpop.permute.xlu0 %1739
  %1741 = vrot.lane.b32.xlu0 %v1716, 124
  %v1742 = vpop.permute.xlu0 %1741
  %1745 = vrot.lane.b32.xlu0 %v1711, 123
  %v1746 = vpop.permute.xlu0 %1745
  %1747 = vrot.lane.b32.xlu0 %v1716, 123
  %v1748 = vpop.permute.xlu0 %1747
  %1751 = vrot.lane.b32.xlu0 %v1711, 122
  %v1752 = vpop.permute.xlu0 %1751
  %1753 = vrot.lane.b32.xlu0 %v1716, 122
  %v1754 = vpop.permute.xlu0 %1753
  %1757 = vrot.lane.b32.xlu0 %v1711, 121
  %v1758 = vpop.permute.xlu0 %1757
  %1759 = vrot.lane.b32.xlu0 %v1716, 121
  %v1760 = vpop.permute.xlu0 %1759
  %1763 = vrot.lane.b32.xlu0 %v1711, 120
  %v1764 = vpop.permute.xlu0 %1763
  %1765 = vrot.lane.b32.xlu0 %v1716, 120
  %v1766 = vpop.permute.xlu0 %1765
  %1769 = vrot.lane.b32.xlu0 %v1711, 119
  %v1770 = vpop.permute.xlu0 %1769
  %1771 = vrot.lane.b32.xlu0 %v1716, 119
  %v1772 = vpop.permute.xlu0 %1771
  %1775 = vrot.lane.b32.xlu0 %v1711, 118
  %v1776 = vpop.permute.xlu0 %1775
  %1777 = vrot.lane.b32.xlu0 %v1716, 118
  %v1778 = vpop.permute.xlu0 %1777
  %1781 = vrot.lane.b32.xlu0 %v1711, 117
  %v1782 = vpop.permute.xlu0 %1781
  %1783 = vrot.lane.b32.xlu0 %v1716, 117
  %v1784 = vpop.permute.xlu0 %1783
  %1787 = vrot.lane.b32.xlu0 %v1711, 116
  %v1788 = vpop.permute.xlu0 %1787
  %1789 = vrot.lane.b32.xlu0 %v1716, 116
  %v1790 = vpop.permute.xlu0 %1789
  %1793 = vrot.lane.b32.xlu0 %v1711, 115
  %v1794 = vpop.permute.xlu0 %1793
  %1795 = vrot.lane.b32.xlu0 %v1716, 115
  %v1796 = vpop.permute.xlu0 %1795
  %1799 = vrot.lane.b32.xlu0 %v1711, 114
  %v1800 = vpop.permute.xlu0 %1799
  %1801 = vrot.lane.b32.xlu0 %v1716, 114
  %v1802 = vpop.permute.xlu0 %1801
  %1805 = vrot.lane.b32.xlu0 %v1711, 113
  %v1806 = vpop.permute.xlu0 %1805
  %1807 = vrot.lane.b32.xlu0 %v1716, 113
  %v1808 = vpop.permute.xlu0 %1807
  %1812 = vset.pattern.permute.xlu0 0
  %1813 = vperm.xlu0 %1812, %v264
  %v1814 = vpop.permute.xlu0 %1813
  %1817 = vset.pattern.permute.xlu0 0
  %1818 = vperm.xlu0 %1817, %v265
  %v1819 = vpop.permute.xlu0 %1818
  %1822 = vset.pattern.permute.xlu0 0
  %1823 = vperm.xlu0 %1822, %v266
  %v1824 = vpop.permute.xlu0 %1823
  %1827 = vset.pattern.permute.xlu0 0
  %1828 = vperm.xlu0 %1827, %v267
  %v1829 = vpop.permute.xlu0 %1828
  %1832 = vset.pattern.permute.xlu0 0
  %1833 = vperm.xlu0 %1832, %v268
  %v1834 = vpop.permute.xlu0 %1833
  %1837 = vset.pattern.permute.xlu0 0
  %1838 = vperm.xlu0 %1837, %v269
  %v1839 = vpop.permute.xlu0 %1838
  %1842 = vset.pattern.permute.xlu0 0
  %1843 = vperm.xlu0 %1842, %v270
  %v1844 = vpop.permute.xlu0 %1843
  %1847 = vset.pattern.permute.xlu0 0
  %1848 = vperm.xlu0 %1847, %v271
  %v1849 = vpop.permute.xlu0 %1848
  %1852 = vset.pattern.permute.xlu0 0
  %1853 = vperm.xlu0 %1852, %v272
  %v1854 = vpop.permute.xlu0 %1853
  %1857 = vset.pattern.permute.xlu0 0
  %1858 = vperm.xlu0 %1857, %v273
  %v1859 = vpop.permute.xlu0 %1858
  %1862 = vset.pattern.permute.xlu0 0
  %1863 = vperm.xlu0 %1862, %v274
  %v1864 = vpop.permute.xlu0 %1863
  %1867 = vset.pattern.permute.xlu0 0
  %1868 = vperm.xlu0 %1867, %v275
  %v1869 = vpop.permute.xlu0 %1868
  %1872 = vset.pattern.permute.xlu0 0
  %1873 = vperm.xlu0 %1872, %v276
  %v1874 = vpop.permute.xlu0 %1873
  %1877 = vset.pattern.permute.xlu0 0
  %1878 = vperm.xlu0 %1877, %v277
  %v1879 = vpop.permute.xlu0 %1878
  %1882 = vset.pattern.permute.xlu0 0
  %1883 = vperm.xlu0 %1882, %v278
  %v1884 = vpop.permute.xlu0 %1883
  %1886 = vmatprep.subr.mxu0 0.0
  %1887 = vmatpush1.msra.mxu0 %v1711
  %1888 = vmatprep.subr.mxu0 0.0
  %1889 = vmatpush1.msra.mxu0 %v1716
  %1890 = vmatprep.subr.mxu0 0.0
  %1891 = vmatpush1.msra.mxu0 %v1722
  %1892 = vmatprep.subr.mxu0 0.0
  %1893 = vmatpush1.msra.mxu0 %v1724
  %1894 = vmatprep.subr.mxu0 0.0
  %1895 = vmatpush1.msra.mxu0 %v1728
  %1896 = vmatprep.subr.mxu0 0.0
  %1897 = vmatpush1.msra.mxu0 %v1730
  %1898 = vmatprep.subr.mxu0 0.0
  %1899 = vmatpush1.msra.mxu0 %v1734
  %1900 = vmatprep.subr.mxu0 0.0
  %1901 = vmatpush1.msra.mxu0 %v1736
  %1902 = vmatprep.subr.mxu0 0.0
  %1903 = vmatpush1.msra.mxu0 %v1740
  %1904 = vmatprep.subr.mxu0 0.0
  %1905 = vmatpush1.msra.mxu0 %v1742
  %1906 = vmatprep.subr.mxu0 0.0
  %1907 = vmatpush1.msra.mxu0 %v1746
  %1908 = vmatprep.subr.mxu0 0.0
  %1909 = vmatpush1.msra.mxu0 %v1748
  %1910 = vmatprep.subr.mxu0 0.0
  %1911 = vmatpush1.msra.mxu0 %v1752
  %1912 = vmatprep.subr.mxu0 0.0
  %1913 = vmatpush1.msra.mxu0 %v1754
  %1914 = vmatprep.subr.mxu0 0.0
  %1915 = vmatpush1.msra.mxu0 %v1758
  %1916 = vmatprep.subr.mxu0 0.0
  %1917 = vmatpush1.msra.mxu0 %v1760
  %1918 = vmatprep.subr.mxu0 0.0
  %1919 = vmatpush1.msra.mxu0 %v1764
  %1920 = vmatprep.subr.mxu0 0.0
  %1921 = vmatpush1.msra.mxu0 %v1766
  %1922 = vmatprep.subr.mxu0 0.0
  %1923 = vmatpush1.msra.mxu0 %v1770
  %1924 = vmatprep.subr.mxu0 0.0
  %1925 = vmatpush1.msra.mxu0 %v1772
  %1926 = vmatprep.subr.mxu0 0.0
  %1927 = vmatpush1.msra.mxu0 %v1776
  %1928 = vmatprep.subr.mxu0 0.0
  %1929 = vmatpush1.msra.mxu0 %v1778
  %1930 = vmatprep.subr.mxu0 0.0
  %1931 = vmatpush1.msra.mxu0 %v1782
  %1932 = vmatprep.subr.mxu0 0.0
  %1933 = vmatpush1.msra.mxu0 %v1784
  %1934 = vmatprep.subr.mxu0 0.0
  %1935 = vmatpush1.msra.mxu0 %v1788
  %1936 = vmatprep.subr.mxu0 0.0
  %1937 = vmatpush1.msra.mxu0 %v1790
  %1938 = vmatprep.subr.mxu0 0.0
  %1939 = vmatpush1.msra.mxu0 %v1794
  %1940 = vmatprep.subr.mxu0 0.0
  %1941 = vmatpush1.msra.mxu0 %v1796
  %1942 = vmatprep.subr.mxu0 0.0
  %1943 = vmatpush1.msra.mxu0 %v1800
  %1944 = vmatprep.subr.mxu0 0.0
  %1945 = vmatpush1.msra.mxu0 %v1802
  %1946 = vmatprep.subr.mxu0 0.0
  %1947 = vmatpush1.msra.mxu0 %v1806
  %1948 = vmatprep.subr.mxu0 0.0
  %1949 = vmatpush1.msra.mxu0 %v1808
  %1950 = vmatprep.mubr.f32.mxu0 %v235
  %1951 = vmatmul.mubr.f32.gmra.mrb[0].mxu0 %v234
  %v1952 = vpop.f32.mrb[0].mxu0
  %v1953 = vadd.f32 %v1814, %v1952
  %v1954 = vpop.f32.mrb[0].mxu0
  %1955 = vmatprep.mubr.f32.mxu0 %v237
  %1956 = vmatmul.mubr.f32.gmra.mrb[0].mxu0 %v236
  %v1957 = vpop.f32.mrb[0].mxu0
  %v1958 = vadd.f32 %v1819, %v1957
  %v1959 = vpop.f32.mrb[0].mxu0
  %1960 = vmatprep.mubr.f32.mxu0 %v239
  %1961 = vmatmul.mubr.f32.gmra.mrb[0].mxu0 %v238
  %v1962 = vpop.f32.mrb[0].mxu0
  %v1963 = vadd.f32 %v1824, %v1962
  %v1964 = vpop.f32.mrb[0].mxu0
  %1965 = vmatprep.mubr.f32.mxu0 %v241
  %1966 = vmatmul.mubr.f32.gmra.mrb[0].mxu0 %v240
  %v1967 = vpop.f32.mrb[0].mxu0
  %v1968 = vadd.f32 %v1829, %v1967
  %v1969 = vpop.f32.mrb[0].mxu0
  %1970 = vmatprep.mubr.f32.mxu0 %v243
  %1971 = vmatmul.mubr.f32.gmra.mrb[0].mxu0 %v242
  %v1972 = vpop.f32.mrb[0].mxu0
  %v1973 = vadd.f32 %v1834, %v1972
  %v1974 = vpop.f32.mrb[0].mxu0
  %1975 = vmatprep.mubr.f32.mxu0 %v245
  %1976 = vmatmul.mubr.f32.gmra.mrb[0].mxu0 %v244
  %v1977 = vpop.f32.mrb[0].mxu0
  %v1978 = vadd.f32 %v1839, %v1977
  %v1979 = vpop.f32.mrb[0].mxu0
  %1980 = vmatprep.mubr.f32.mxu0 %v247
  %1981 = vmatmul.mubr.f32.gmra.mrb[0].mxu0 %v246
  %v1982 = vpop.f32.mrb[0].mxu0
  %v1983 = vadd.f32 %v1844, %v1982
  %v1984 = vpop.f32.mrb[0].mxu0
  %1985 = vmatprep.mubr.f32.mxu0 %v249
  %1986 = vmatmul.mubr.f32.gmra.mrb[0].mxu0 %v248
  %v1987 = vpop.f32.mrb[0].mxu0
  %v1988 = vadd.f32 %v1849, %v1987
  %v1989 = vpop.f32.mrb[0].mxu0
  %1990 = vmatprep.mubr.f32.mxu0 %v251
  %1991 = vmatmul.mubr.f32.gmra.mrb[0].mxu0 %v250
  %v1992 = vpop.f32.mrb[0].mxu0
  %v1993 = vadd.f32 %v1854, %v1992
  %v1994 = vpop.f32.mrb[0].mxu0
  %1995 = vmatprep.mubr.f32.mxu0 %v253
  %1996 = vmatmul.mubr.f32.gmra.mrb[0].mxu0 %v252
  %v1997 = vpop.f32.mrb[0].mxu0
  %v1998 = vadd.f32 %v1859, %v1997
  %v1999 = vpop.f32.mrb[0].mxu0
  %2000 = vmatprep.mubr.f32.mxu0 %v255
  %2001 = vmatmul.mubr.f32.gmra.mrb[0].mxu0 %v254
  %v2002 = vpop.f32.mrb[0].mxu0
  %v2003 = vadd.f32 %v1864, %v2002
  %v2004 = vpop.f32.mrb[0].mxu0
  %2005 = vmatprep.mubr.f32.mxu0 %v257
  %2006 = vmatmul.mubr.f32.gmra.mrb[0].mxu0 %v256
  %v2007 = vpop.f32.mrb[0].mxu0
  %v2008 = vadd.f32 %v1869, %v2007
  %v2009 = vpop.f32.mrb[0].mxu0
  %2010 = vmatprep.mubr.f32.mxu0 %v259
  %2011 = vmatmul.mubr.f32.gmra.mrb[0].mxu0 %v258
  %v2012 = vpop.f32.mrb[0].mxu0
  %v2013 = vadd.f32 %v1874, %v2012
  %v2014 = vpop.f32.mrb[0].mxu0
  %2015 = vmatprep.mubr.f32.mxu0 %v261
  %2016 = vmatmul.mubr.f32.gmra.mrb[0].mxu0 %v260
  %v2017 = vpop.f32.mrb[0].mxu0
  %v2018 = vadd.f32 %v1879, %v2017
  %v2019 = vpop.f32.mrb[0].mxu0
  %2020 = vmatprep.mubr.f32.mxu0 %v263
  %2021 = vmatmul.mubr.f32.gmra.mrb[0].mxu0 %v262
  %v2022 = vpop.f32.mrb[0].mxu0
  %v2023 = vadd.f32 %v1884, %v2022
  %v2024 = vpop.f32.mrb[0].mxu0
  %2025 = vdwg.mxu0
  %v2026 = vtanh.pop %v1953
  %v2027 = vtanh.pop %v1958
  %v2028 = vtanh.pop %v1963
  %v2029 = vtanh.pop %v1968
  %v2030 = vtanh.pop %v1973
  %v2031 = vtanh.pop %v1978
  %v2032 = vtanh.pop %v1983
  %v2033 = vtanh.pop %v1988
  %v2034 = vtanh.pop %v1993
  %v2035 = vtanh.pop %v1998
  %v2036 = vtanh.pop %v2003
  %v2037 = vtanh.pop %v2008
  %v2038 = vtanh.pop %v2013
  %v2039 = vtanh.pop %v2018
  %v2040 = vtanh.pop %v2023
  %v2041 = vlaneseq
  %v2042 = vshrl.u32 %v2041, 7
  %v2043 = vsub.s32 1, %v2042
  %v2044 = vrot.slane %v44, %v2043
  %v2045 = vlaneseq
  %v2046 = vshrl.u32 %v2045, 7
  %v2047 = vsub.s32 3, %v2046
  %v2048 = vrot.slane %v44, %v2047
  %v2049 = vlaneseq
  %v2050 = vshrl.u32 %v2049, 7
  %v2051 = vsub.s32 5, %v2050
  %v2052 = vrot.slane %v44, %v2051
  %v2053 = vlaneseq
  %v2054 = vshrl.u32 %v2053, 7
  %v2055 = vsub.s32 7, %v2054
  %v2056 = vrot.slane %v44, %v2055
  %v2057 = vlaneseq
  %v2058 = vshrl.u32 %v2057, 7
  %v2059 = vsub.s32 1, %v2058
  %v2060 = vrot.slane %v45, %v2059
  %v2061 = vlaneseq
  %v2062 = vshrl.u32 %v2061, 7
  %v2063 = vsub.s32 3, %v2062
  %v2064 = vrot.slane %v45, %v2063
  %2071 = vrot.lane.b32.xlu0 %v2044, 127
  %v2072 = vpop.permute.xlu0 %2071
  %2073 = vrot.lane.b32.xlu0 %v2048, 127
  %v2074 = vpop.permute.xlu0 %2073
  %2075 = vrot.lane.b32.xlu0 %v2052, 127
  %v2076 = vpop.permute.xlu0 %2075
  %2077 = vrot.lane.b32.xlu0 %v2056, 127
  %v2078 = vpop.permute.xlu0 %2077
  %2079 = vrot.lane.b32.xlu0 %v2060, 127
  %v2080 = vpop.permute.xlu0 %2079
  %2081 = vrot.lane.b32.xlu0 %v2064, 127
  %v2082 = vpop.permute.xlu0 %2081
  %v2083 = vsel %vm349, %v2072, %v2074
  %v2084 = vsel %vm349, %v2074, %v2076
  %v2085 = vsel %vm349, %v2076, %v2078
  %v2086 = vsel %vm349, %v2078, %v2080
  %v2087 = vsel %vm349, %v2080, %v2082
  %2094 = vrot.lane.b32.xlu0 %v2044, 126
  %v2095 = vpop.permute.xlu0 %2094
  %2096 = vrot.lane.b32.xlu0 %v2048, 126
  %v2097 = vpop.permute.xlu0 %2096
  %2098 = vrot.lane.b32.xlu0 %v2052, 126
  %v2099 = vpop.permute.xlu0 %2098
  %2100 = vrot.lane.b32.xlu0 %v2056, 126
  %v2101 = vpop.permute.xlu0 %2100
  %2102 = vrot.lane.b32.xlu0 %v2060, 126
  %v2103 = vpop.permute.xlu0 %2102
  %2104 = vrot.lane.b32.xlu0 %v2064, 126
  %v2105 = vpop.permute.xlu0 %2104
  %v2106 = vsel %vm373, %v2095, %v2097
  %v2107 = vsel %vm373, %v2097, %v2099
  %v2108 = vsel %vm373, %v2099, %v2101
  %v2109 = vsel %vm373, %v2101, %v2103
  %v2110 = vsel %vm373, %v2103, %v2105
  %2117 = vrot.lane.b32.xlu0 %v2044, 125
  %v2118 = vpop.permute.xlu0 %2117
  %2119 = vrot.lane.b32.xlu0 %v2048, 125
  %v2120 = vpop.permute.xlu0 %2119
  %2121 = vrot.lane.b32.xlu0 %v2052, 125
  %v2122 = vpop.permute.xlu0 %2121
  %2123 = vrot.lane.b32.xlu0 %v2056, 125
  %v2124 = vpop.permute.xlu0 %2123
  %2125 = vrot.lane.b32.xlu0 %v2060, 125
  %v2126 = vpop.permute.xlu0 %2125
  %2127 = vrot.lane.b32.xlu0 %v2064, 125
  %v2128 = vpop.permute.xlu0 %2127
  %v2129 = vsel %vm397, %v2118, %v2120
  %v2130 = vsel %vm397, %v2120, %v2122
  %v2131 = vsel %vm397, %v2122, %v2124
  %v2132 = vsel %vm397, %v2124, %v2126
  %v2133 = vsel %vm397, %v2126, %v2128
  %2140 = vrot.lane.b32.xlu0 %v2044, 124
  %v2141 = vpop.permute.xlu0 %2140
  %2142 = vrot.lane.b32.xlu0 %v2048, 124
  %v2143 = vpop.permute.xlu0 %2142
  %2144 = vrot.lane.b32.xlu0 %v2052, 124
  %v2145 = vpop.permute.xlu0 %2144
  %2146 = vrot.lane.b32.xlu0 %v2056, 124
  %v2147 = vpop.permute.xlu0 %2146
  %2148 = vrot.lane.b32.xlu0 %v2060, 124
  %v2149 = vpop.permute.xlu0 %2148
  %2150 = vrot.lane.b32.xlu0 %v2064, 124
  %v2151 = vpop.permute.xlu0 %2150
  %v2152 = vsel %vm421, %v2141, %v2143
  %v2153 = vsel %vm421, %v2143, %v2145
  %v2154 = vsel %vm421, %v2145, %v2147
  %v2155 = vsel %vm421, %v2147, %v2149
  %v2156 = vsel %vm421, %v2149, %v2151
  %2163 = vrot.lane.b32.xlu0 %v2044, 100
  %v2164 = vpop.permute.xlu0 %2163
  %2165 = vrot.lane.b32.xlu0 %v2048, 100
  %v2166 = vpop.permute.xlu0 %2165
  %2167 = vrot.lane.b32.xlu0 %v2052, 100
  %v2168 = vpop.permute.xlu0 %2167
  %2169 = vrot.lane.b32.xlu0 %v2056, 100
  %v2170 = vpop.permute.xlu0 %2169
  %2171 = vrot.lane.b32.xlu0 %v2060, 100
  %v2172 = vpop.permute.xlu0 %2171
  %2173 = vrot.lane.b32.xlu0 %v2064, 100
  %v2174 = vpop.permute.xlu0 %2173
  %v2175 = vsel %vm445, %v2164, %v2166
  %v2176 = vsel %vm445, %v2166, %v2168
  %v2177 = vsel %vm445, %v2168, %v2170
  %v2178 = vsel %vm445, %v2170, %v2172
  %v2179 = vsel %vm445, %v2172, %v2174
  %2186 = vrot.lane.b32.xlu0 %v2044, 99
  %v2187 = vpop.permute.xlu0 %2186
  %2188 = vrot.lane.b32.xlu0 %v2048, 99
  %v2189 = vpop.permute.xlu0 %2188
  %2190 = vrot.lane.b32.xlu0 %v2052, 99
  %v2191 = vpop.permute.xlu0 %2190
  %2192 = vrot.lane.b32.xlu0 %v2056, 99
  %v2193 = vpop.permute.xlu0 %2192
  %2194 = vrot.lane.b32.xlu0 %v2060, 99
  %v2195 = vpop.permute.xlu0 %2194
  %2196 = vrot.lane.b32.xlu0 %v2064, 99
  %v2197 = vpop.permute.xlu0 %2196
  %v2198 = vsel %vm469, %v2187, %v2189
  %v2199 = vsel %vm469, %v2189, %v2191
  %v2200 = vsel %vm469, %v2191, %v2193
  %v2201 = vsel %vm469, %v2193, %v2195
  %v2202 = vsel %vm469, %v2195, %v2197
  %2209 = vrot.lane.b32.xlu0 %v2044, 98
  %v2210 = vpop.permute.xlu0 %2209
  %2211 = vrot.lane.b32.xlu0 %v2048, 98
  %v2212 = vpop.permute.xlu0 %2211
  %2213 = vrot.lane.b32.xlu0 %v2052, 98
  %v2214 = vpop.permute.xlu0 %2213
  %2215 = vrot.lane.b32.xlu0 %v2056, 98
  %v2216 = vpop.permute.xlu0 %2215
  %2217 = vrot.lane.b32.xlu0 %v2060, 98
  %v2218 = vpop.permute.xlu0 %2217
  %2219 = vrot.lane.b32.xlu0 %v2064, 98
  %v2220 = vpop.permute.xlu0 %2219
  %v2221 = vsel %vm493, %v2210, %v2212
  %v2222 = vsel %vm493, %v2212, %v2214
  %v2223 = vsel %vm493, %v2214, %v2216
  %v2224 = vsel %vm493, %v2216, %v2218
  %v2225 = vsel %vm493, %v2218, %v2220
  %2232 = vrot.lane.b32.xlu0 %v2044, 97
  %v2233 = vpop.permute.xlu0 %2232
  %2234 = vrot.lane.b32.xlu0 %v2048, 97
  %v2235 = vpop.permute.xlu0 %2234
  %2236 = vrot.lane.b32.xlu0 %v2052, 97
  %v2237 = vpop.permute.xlu0 %2236
  %2238 = vrot.lane.b32.xlu0 %v2056, 97
  %v2239 = vpop.permute.xlu0 %2238
  %2240 = vrot.lane.b32.xlu0 %v2060, 97
  %v2241 = vpop.permute.xlu0 %2240
  %2242 = vrot.lane.b32.xlu0 %v2064, 97
  %v2243 = vpop.permute.xlu0 %2242
  %v2244 = vsel %vm517, %v2233, %v2235
  %v2245 = vsel %vm517, %v2235, %v2237
  %v2246 = vsel %vm517, %v2237, %v2239
  %v2247 = vsel %vm517, %v2239, %v2241
  %v2248 = vsel %vm517, %v2241, %v2243
  %2255 = vrot.lane.b32.xlu0 %v2044, 96
  %v2256 = vpop.permute.xlu0 %2255
  %2257 = vrot.lane.b32.xlu0 %v2048, 96
  %v2258 = vpop.permute.xlu0 %2257
  %2259 = vrot.lane.b32.xlu0 %v2052, 96
  %v2260 = vpop.permute.xlu0 %2259
  %2261 = vrot.lane.b32.xlu0 %v2056, 96
  %v2262 = vpop.permute.xlu0 %2261
  %2263 = vrot.lane.b32.xlu0 %v2060, 96
  %v2264 = vpop.permute.xlu0 %2263
  %2265 = vrot.lane.b32.xlu0 %v2064, 96
  %v2266 = vpop.permute.xlu0 %2265
  %v2267 = vsel %vm541, %v2256, %v2258
  %v2268 = vsel %vm541, %v2258, %v2260
  %v2269 = vsel %vm541, %v2260, %v2262
  %v2270 = vsel %vm541, %v2262, %v2264
  %v2271 = vsel %vm541, %v2264, %v2266
  %2278 = vrot.lane.b32.xlu0 %v2044, 72
  %v2279 = vpop.permute.xlu0 %2278
  %2280 = vrot.lane.b32.xlu0 %v2048, 72
  %v2281 = vpop.permute.xlu0 %2280
  %2282 = vrot.lane.b32.xlu0 %v2052, 72
  %v2283 = vpop.permute.xlu0 %2282
  %2284 = vrot.lane.b32.xlu0 %v2056, 72
  %v2285 = vpop.permute.xlu0 %2284
  %2286 = vrot.lane.b32.xlu0 %v2060, 72
  %v2287 = vpop.permute.xlu0 %2286
  %2288 = vrot.lane.b32.xlu0 %v2064, 72
  %v2289 = vpop.permute.xlu0 %2288
  %v2290 = vsel %vm565, %v2279, %v2281
  %v2291 = vsel %vm565, %v2281, %v2283
  %v2292 = vsel %vm565, %v2283, %v2285
  %v2293 = vsel %vm565, %v2285, %v2287
  %v2294 = vsel %vm565, %v2287, %v2289
  %2301 = vrot.lane.b32.xlu0 %v2044, 71
  %v2302 = vpop.permute.xlu0 %2301
  %2303 = vrot.lane.b32.xlu0 %v2048, 71
  %v2304 = vpop.permute.xlu0 %2303
  %2305 = vrot.lane.b32.xlu0 %v2052, 71
  %v2306 = vpop.permute.xlu0 %2305
  %2307 = vrot.lane.b32.xlu0 %v2056, 71
  %v2308 = vpop.permute.xlu0 %2307
  %2309 = vrot.lane.b32.xlu0 %v2060, 71
  %v2310 = vpop.permute.xlu0 %2309
  %2311 = vrot.lane.b32.xlu0 %v2064, 71
  %v2312 = vpop.permute.xlu0 %2311
  %v2313 = vsel %vm589, %v2302, %v2304
  %v2314 = vsel %vm589, %v2304, %v2306
  %v2315 = vsel %vm589, %v2306, %v2308
  %v2316 = vsel %vm589, %v2308, %v2310
  %v2317 = vsel %vm589, %v2310, %v2312
  %2324 = vrot.lane.b32.xlu0 %v2044, 70
  %v2325 = vpop.permute.xlu0 %2324
  %2326 = vrot.lane.b32.xlu0 %v2048, 70
  %v2327 = vpop.permute.xlu0 %2326
  %2328 = vrot.lane.b32.xlu0 %v2052, 70
  %v2329 = vpop.permute.xlu0 %2328
  %2330 = vrot.lane.b32.xlu0 %v2056, 70
  %v2331 = vpop.permute.xlu0 %2330
  %2332 = vrot.lane.b32.xlu0 %v2060, 70
  %v2333 = vpop.permute.xlu0 %2332
  %2334 = vrot.lane.b32.xlu0 %v2064, 70
  %v2335 = vpop.permute.xlu0 %2334
  %v2336 = vsel %vm613, %v2325, %v2327
  %v2337 = vsel %vm613, %v2327, %v2329
  %v2338 = vsel %vm613, %v2329, %v2331
  %v2339 = vsel %vm613, %v2331, %v2333
  %v2340 = vsel %vm613, %v2333, %v2335
  %2347 = vrot.lane.b32.xlu0 %v2044, 69
  %v2348 = vpop.permute.xlu0 %2347
  %2349 = vrot.lane.b32.xlu0 %v2048, 69
  %v2350 = vpop.permute.xlu0 %2349
  %2351 = vrot.lane.b32.xlu0 %v2052, 69
  %v2352 = vpop.permute.xlu0 %2351
  %2353 = vrot.lane.b32.xlu0 %v2056, 69
  %v2354 = vpop.permute.xlu0 %2353
  %2355 = vrot.lane.b32.xlu0 %v2060, 69
  %v2356 = vpop.permute.xlu0 %2355
  %2357 = vrot.lane.b32.xlu0 %v2064, 69
  %v2358 = vpop.permute.xlu0 %2357
  %v2359 = vsel %vm637, %v2348, %v2350
  %v2360 = vsel %vm637, %v2350, %v2352
  %v2361 = vsel %vm637, %v2352, %v2354
  %v2362 = vsel %vm637, %v2354, %v2356
  %v2363 = vsel %vm637, %v2356, %v2358
  %2370 = vrot.lane.b32.xlu0 %v2044, 68
  %v2371 = vpop.permute.xlu0 %2370
  %2372 = vrot.lane.b32.xlu0 %v2048, 68
  %v2373 = vpop.permute.xlu0 %2372
  %2374 = vrot.lane.b32.xlu0 %v2052, 68
  %v2375 = vpop.permute.xlu0 %2374
  %2376 = vrot.lane.b32.xlu0 %v2056, 68
  %v2377 = vpop.permute.xlu0 %2376
  %2378 = vrot.lane.b32.xlu0 %v2060, 68
  %v2379 = vpop.permute.xlu0 %2378
  %2380 = vrot.lane.b32.xlu0 %v2064, 68
  %v2381 = vpop.permute.xlu0 %2380
  %v2382 = vsel %vm661, %v2371, %v2373
  %v2383 = vsel %vm661, %v2373, %v2375
  %v2384 = vsel %vm661, %v2375, %v2377
  %v2385 = vsel %vm661, %v2377, %v2379
  %v2386 = vsel %vm661, %v2379, %v2381
  %2393 = vrot.lane.b32.xlu0 %v2044, 44
  %v2394 = vpop.permute.xlu0 %2393
  %2395 = vrot.lane.b32.xlu0 %v2048, 44
  %v2396 = vpop.permute.xlu0 %2395
  %2397 = vrot.lane.b32.xlu0 %v2052, 44
  %v2398 = vpop.permute.xlu0 %2397
  %2399 = vrot.lane.b32.xlu0 %v2056, 44
  %v2400 = vpop.permute.xlu0 %2399
  %2401 = vrot.lane.b32.xlu0 %v2060, 44
  %v2402 = vpop.permute.xlu0 %2401
  %2403 = vrot.lane.b32.xlu0 %v2064, 44
  %v2404 = vpop.permute.xlu0 %2403
  %v2405 = vsel %vm685, %v2394, %v2396
  %v2406 = vsel %vm685, %v2396, %v2398
  %v2407 = vsel %vm685, %v2398, %v2400
  %v2408 = vsel %vm685, %v2400, %v2402
  %v2409 = vsel %vm685, %v2402, %v2404
  %v2416 = vsel %vm697, %v2044, %v2083
  %v2417 = vsel %vm697, %v2048, %v2084
  %v2418 = vsel %vm697, %v2052, %v2085
  %v2419 = vsel %vm697, %v2056, %v2086
  %v2420 = vsel %vm697, %v2060, %v2087
  %v2421 = vsel %vm697, %v2064, %v2082
  %v2422 = vsel %vm704, %v2416, %v2106
  %v2423 = vsel %vm704, %v2417, %v2107
  %v2424 = vsel %vm704, %v2418, %v2108
  %v2425 = vsel %vm704, %v2419, %v2109
  %v2426 = vsel %vm704, %v2420, %v2110
  %v2427 = vsel %vm704, %v2421, %v2105
  %v2428 = vsel %vm711, %v2422, %v2129
  %v2429 = vsel %vm711, %v2423, %v2130
  %v2430 = vsel %vm711, %v2424, %v2131
  %v2431 = vsel %vm711, %v2425, %v2132
  %v2432 = vsel %vm711, %v2426, %v2133
  %v2433 = vsel %vm711, %v2427, %v2128
  %v2434 = vsel %vm718, %v2428, %v2152
  %v2435 = vsel %vm718, %v2429, %v2153
  %v2436 = vsel %vm718, %v2430, %v2154
  %v2437 = vsel %vm718, %v2431, %v2155
  %v2438 = vsel %vm718, %v2432, %v2156
  %v2439 = vsel %vm718, %v2433, %v2151
  %v2440 = vsel %vm725, %v2434, %v2175
  %v2441 = vsel %vm725, %v2435, %v2176
  %v2442 = vsel %vm725, %v2436, %v2177
  %v2443 = vsel %vm725, %v2437, %v2178
  %v2444 = vsel %vm725, %v2438, %v2179
  %v2445 = vsel %vm725, %v2439, %v2174
  %v2446 = vsel %vm732, %v2440, %v2198
  %v2447 = vsel %vm732, %v2441, %v2199
  %v2448 = vsel %vm732, %v2442, %v2200
  %v2449 = vsel %vm732, %v2443, %v2201
  %v2450 = vsel %vm732, %v2444, %v2202
  %v2451 = vsel %vm732, %v2445, %v2197
  %v2452 = vsel %vm739, %v2446, %v2221
  %v2453 = vsel %vm739, %v2447, %v2222
  %v2454 = vsel %vm739, %v2448, %v2223
  %v2455 = vsel %vm739, %v2449, %v2224
  %v2456 = vsel %vm739, %v2450, %v2225
  %v2457 = vsel %vm739, %v2451, %v2220
  %v2458 = vsel %vm697, %v2244, %v2267
  %v2459 = vsel %vm697, %v2245, %v2268
  %v2460 = vsel %vm697, %v2246, %v2269
  %v2461 = vsel %vm697, %v2247, %v2270
  %v2462 = vsel %vm697, %v2248, %v2271
  %v2463 = vsel %vm697, %v2243, %v2266
  %v2464 = vsel %vm704, %v2458, %v2290
  %v2465 = vsel %vm704, %v2459, %v2291
  %v2466 = vsel %vm704, %v2460, %v2292
  %v2467 = vsel %vm704, %v2461, %v2293
  %v2468 = vsel %vm704, %v2462, %v2294
  %v2469 = vsel %vm704, %v2463, %v2289
  %v2470 = vsel %vm711, %v2464, %v2313
  %v2471 = vsel %vm711, %v2465, %v2314
  %v2472 = vsel %vm711, %v2466, %v2315
  %v2473 = vsel %vm711, %v2467, %v2316
  %v2474 = vsel %vm711, %v2468, %v2317
  %v2475 = vsel %vm711, %v2469, %v2312
  %v2476 = vsel %vm718, %v2470, %v2336
  %v2477 = vsel %vm718, %v2471, %v2337
  %v2478 = vsel %vm718, %v2472, %v2338
  %v2479 = vsel %vm718, %v2473, %v2339
  %v2480 = vsel %vm718, %v2474, %v2340
  %v2481 = vsel %vm718, %v2475, %v2335
  %v2482 = vsel %vm725, %v2476, %v2359
  %v2483 = vsel %vm725, %v2477, %v2360
  %v2484 = vsel %vm725, %v2478, %v2361
  %v2485 = vsel %vm725, %v2479, %v2362
  %v2486 = vsel %vm725, %v2480, %v2363
  %v2487 = vsel %vm725, %v2481, %v2358
  %v2488 = vsel %vm732, %v2482, %v2382
  %v2489 = vsel %vm732, %v2483, %v2383
  %v2490 = vsel %vm732, %v2484, %v2384
  %v2491 = vsel %vm732, %v2485, %v2385
  %v2492 = vsel %vm732, %v2486, %v2386
  %v2493 = vsel %vm732, %v2487, %v2381
  %v2494 = vsel %vm739, %v2488, %v2405
  %v2495 = vsel %vm739, %v2489, %v2406
  %v2496 = vsel %vm739, %v2490, %v2407
  %v2497 = vsel %vm739, %v2491, %v2408
  %v2498 = vsel %vm739, %v2492, %v2409
  %v2499 = vsel %vm739, %v2493, %v2404
  %v2500 = vlaneseq
  %v2501 = vshrl.u32 %v2500, 7
  %v2502 = vsub.s32 5, %v2501
  %v2503 = vrot.slane %v45, %v2502
  %2504 = vrot.lane.b32.xlu0 %v2044, 101
  %v2505 = vpop.permute.xlu0 %2504
  %2506 = vrot.lane.b32.xlu0 %v2048, 101
  %v2507 = vpop.permute.xlu0 %2506
  %2508 = vrot.lane.b32.xlu0 %v2052, 101
  %v2509 = vpop.permute.xlu0 %2508
  %2510 = vrot.lane.b32.xlu0 %v2056, 101
  %v2511 = vpop.permute.xlu0 %2510
  %2512 = vrot.lane.b32.xlu0 %v2060, 101
  %v2513 = vpop.permute.xlu0 %2512
  %2514 = vrot.lane.b32.xlu0 %v2064, 101
  %v2515 = vpop.permute.xlu0 %2514
  %2516 = vrot.lane.b32.xlu0 %v2503, 101
  %v2517 = vpop.permute.xlu0 %2516
  %v2518 = vsel %vm806, %v2505, %v2507
  %v2519 = vsel %vm806, %v2507, %v2509
  %v2520 = vsel %vm806, %v2509, %v2511
  %v2521 = vsel %vm806, %v2511, %v2513
  %v2522 = vsel %vm806, %v2513, %v2515
  %v2523 = vsel %vm806, %v2515, %v2517
  %2530 = vrot.lane.b32.xlu0 %v2503, 100
  %v2531 = vpop.permute.xlu0 %2530
  %v2532 = vsel %vm445, %v2174, %v2531
  %2534 = vrot.lane.b32.xlu0 %v2503, 99
  %v2535 = vpop.permute.xlu0 %2534
  %v2536 = vsel %vm469, %v2197, %v2535
  %2538 = vrot.lane.b32.xlu0 %v2503, 98
  %v2539 = vpop.permute.xlu0 %2538
  %v2540 = vsel %vm493, %v2220, %v2539
  %2542 = vrot.lane.b32.xlu0 %v2503, 97
  %v2543 = vpop.permute.xlu0 %2542
  %v2544 = vsel %vm517, %v2243, %v2543
  %v2545 = vsel %vm718, %v2428, %v2518
  %v2546 = vsel %vm718, %v2429, %v2519
  %v2547 = vsel %vm718, %v2430, %v2520
  %v2548 = vsel %vm718, %v2431, %v2521
  %v2549 = vsel %vm718, %v2432, %v2522
  %v2550 = vsel %vm718, %v2433, %v2523
  %v2551 = vsel %vm725, %v2545, %v2175
  %v2552 = vsel %vm725, %v2546, %v2176
  %v2553 = vsel %vm725, %v2547, %v2177
  %v2554 = vsel %vm725, %v2548, %v2178
  %v2555 = vsel %vm725, %v2549, %v2179
  %v2556 = vsel %vm725, %v2550, %v2532
  %v2557 = vsel %vm732, %v2551, %v2198
  %v2558 = vsel %vm732, %v2552, %v2199
  %v2559 = vsel %vm732, %v2553, %v2200
  %v2560 = vsel %vm732, %v2554, %v2201
  %v2561 = vsel %vm732, %v2555, %v2202
  %v2562 = vsel %vm732, %v2556, %v2536
  %v2563 = vsel %vm739, %v2557, %v2221
  %v2564 = vsel %vm739, %v2558, %v2222
  %v2565 = vsel %vm739, %v2559, %v2223
  %v2566 = vsel %vm739, %v2560, %v2224
  %v2567 = vsel %vm739, %v2561, %v2225
  %v2568 = vsel %vm739, %v2562, %v2540
  %2575 = vrot.lane.b32.xlu0 %v2563, 43
  %v2576 = vpop.permute.xlu0 %2575
  %2577 = vrot.lane.b32.xlu0 %v2564, 43
  %v2578 = vpop.permute.xlu0 %2577
  %2579 = vrot.lane.b32.xlu0 %v2565, 43
  %v2580 = vpop.permute.xlu0 %2579
  %2581 = vrot.lane.b32.xlu0 %v2566, 43
  %v2582 = vpop.permute.xlu0 %2581
  %2583 = vrot.lane.b32.xlu0 %v2567, 43
  %v2584 = vpop.permute.xlu0 %2583
  %2585 = vrot.lane.b32.xlu0 %v2568, 43
  %v2586 = vpop.permute.xlu0 %2585
  %2587 = vrot.lane.b32.xlu0 %v2244, 43
  %v2588 = vpop.permute.xlu0 %2587
  %2589 = vrot.lane.b32.xlu0 %v2245, 43
  %v2590 = vpop.permute.xlu0 %2589
  %2591 = vrot.lane.b32.xlu0 %v2246, 43
  %v2592 = vpop.permute.xlu0 %2591
  %2593 = vrot.lane.b32.xlu0 %v2247, 43
  %v2594 = vpop.permute.xlu0 %2593
  %2595 = vrot.lane.b32.xlu0 %v2248, 43
  %v2596 = vpop.permute.xlu0 %2595
  %2597 = vrot.lane.b32.xlu0 %v2544, 43
  %v2598 = vpop.permute.xlu0 %2597
  %v2599 = vsel %vm888, %v2576, %v2578
  %v2600 = vsel %vm888, %v2578, %v2580
  %v2601 = vsel %vm888, %v2580, %v2582
  %v2602 = vsel %vm888, %v2582, %v2584
  %v2603 = vsel %vm888, %v2584, %v2586
  %v2604 = vsel %vm888, %v2588, %v2590
  %v2605 = vsel %vm888, %v2590, %v2592
  %v2606 = vsel %vm888, %v2592, %v2594
  %v2607 = vsel %vm888, %v2594, %v2596
  %v2608 = vsel %vm888, %v2596, %v2598
  %v2615 = vsel %vm697, %v2604, 0
  %v2617 = vsel %vm697, %v2605, 0
  %v2619 = vsel %vm697, %v2606, 0
  %v2621 = vsel %vm697, %v2607, 0
  %v2623 = vsel %vm697, %v2608, 0
  %v2625 = vsel %vm697, %v2598, 0
  %2627 = vmatprep.subr.mxu0 %v2453
  %2628 = vmatpush1.msra.mxu0 %v2452
  %2629 = vmatprep.subr.mxu0 %v2495
  %2630 = vmatpush1.msra.mxu0 %v2494
  %2631 = vmatprep.subr.mxu0 %v2600
  %2632 = vmatpush1.msra.mxu0 %v2599
  %2633 = vmatprep.subr.mxu0 %v2617
  %2634 = vmatpush1.msra.mxu0 %v2615
  %2635 = vmatprep.subr.mxu0 0.0
  %2636 = vmatpush1.msra.mxu0 0.0
  %2637 = vmatprep.subr.mxu0 0.0
  %2638 = vmatpush1.msra.mxu0 0.0
  %2639 = vmatprep.subr.mxu0 0.0
  %2640 = vmatpush1.msra.mxu0 0.0
  %2641 = vmatprep.subr.mxu0 0.0
  %2642 = vmatpush1.msra.mxu0 0.0
  %2643 = vmatprep.subr.mxu0 0.0
  %2644 = vmatpush1.msra.mxu0 0.0
  %2645 = vmatprep.subr.mxu0 0.0
  %2646 = vmatpush1.msra.mxu0 0.0
  %2647 = vmatprep.subr.mxu0 0.0
  %2648 = vmatpush1.msra.mxu0 0.0
  %2649 = vmatprep.subr.mxu0 0.0
  %2650 = vmatpush1.msra.mxu0 0.0
  %2651 = vmatprep.subr.mxu0 0.0
  %2652 = vmatpush1.msra.mxu0 0.0
  %2653 = vmatprep.subr.mxu0 0.0
  %2654 = vmatpush1.msra.mxu0 0.0
  %2655 = vmatprep.subr.mxu0 0.0
  %2656 = vmatpush1.msra.mxu0 0.0
  %2657 = vmatprep.subr.mxu0 0.0
  %2658 = vmatpush1.msra.mxu0 0.0
  %2659 = vmatprep.subr.mxu0 0.0
  %2660 = vmatpush1.msra.mxu0 0.0
  %2661 = vmatprep.subr.mxu0 0.0
  %2662 = vmatpush1.msra.mxu0 0.0
  %2663 = vmatprep.subr.mxu0 0.0
  %2664 = vmatpush1.msra.mxu0 0.0
  %2665 = vmatprep.subr.mxu0 0.0
  %2666 = vmatpush1.msra.mxu0 0.0
  %2667 = vmatprep.subr.mxu0 0.0
  %2668 = vmatpush1.msra.mxu0 0.0
  %2669 = vmatprep.subr.mxu0 0.0
  %2670 = vmatpush1.msra.mxu0 0.0
  %2671 = vmatprep.subr.mxu0 0.0
  %2672 = vmatpush1.msra.mxu0 0.0
  %2673 = vmatprep.subr.mxu0 0.0
  %2674 = vmatpush1.msra.mxu0 0.0
  %2675 = vmatprep.subr.mxu0 0.0
  %2676 = vmatpush1.msra.mxu0 0.0
  %2677 = vmatprep.subr.mxu0 0.0
  %2678 = vmatpush1.msra.mxu0 0.0
  %2679 = vmatprep.subr.mxu0 0.0
  %2680 = vmatpush1.msra.mxu0 0.0
  %2681 = vmatprep.subr.mxu0 0.0
  %2682 = vmatpush1.msra.mxu0 0.0
  %2683 = vmatprep.subr.mxu0 0.0
  %2684 = vmatpush1.msra.mxu0 0.0
  %2685 = vmatprep.subr.mxu0 0.0
  %2686 = vmatpush1.msra.mxu0 0.0
  %2687 = vmatprep.subr.mxu0 0.0
  %2688 = vmatpush1.msra.mxu0 0.0
  %2689 = vmatprep.subr.mxu0 0.0
  %2690 = vmatpush1.msra.mxu0 0.0
  %2691 = vmatprep.mubr.f32.mxu0 0.0
  %2692 = vmatmul.mubr.f32.gmra.mrb[0].mxu0 %v912
  %v2693 = vpop.f32.mrb[0].mxu0
  %v2694 = vadd.f32 %v908, %v2693
  %v2695 = vpop.f32.mrb[0].mxu0
  %v2696 = vadd.f32 %v908, %v2695
  %2697 = vdwg.mxu0
  %2698 = vmatprep.subr.mxu0 %v2455
  %2699 = vmatpush1.msra.mxu0 %v2454
  %2700 = vmatprep.subr.mxu0 %v2497
  %2701 = vmatpush1.msra.mxu0 %v2496
  %2702 = vmatprep.subr.mxu0 %v2602
  %2703 = vmatpush1.msra.mxu0 %v2601
  %2704 = vmatprep.subr.mxu0 %v2621
  %2705 = vmatpush1.msra.mxu0 %v2619
  %2706 = vmatprep.subr.mxu0 0.0
  %2707 = vmatpush1.msra.mxu0 0.0
  %2708 = vmatprep.subr.mxu0 0.0
  %2709 = vmatpush1.msra.mxu0 0.0
  %2710 = vmatprep.subr.mxu0 0.0
  %2711 = vmatpush1.msra.mxu0 0.0
  %2712 = vmatprep.subr.mxu0 0.0
  %2713 = vmatpush1.msra.mxu0 0.0
  %2714 = vmatprep.subr.mxu0 0.0
  %2715 = vmatpush1.msra.mxu0 0.0
  %2716 = vmatprep.subr.mxu0 0.0
  %2717 = vmatpush1.msra.mxu0 0.0
  %2718 = vmatprep.subr.mxu0 0.0
  %2719 = vmatpush1.msra.mxu0 0.0
  %2720 = vmatprep.subr.mxu0 0.0
  %2721 = vmatpush1.msra.mxu0 0.0
  %2722 = vmatprep.subr.mxu0 0.0
  %2723 = vmatpush1.msra.mxu0 0.0
  %2724 = vmatprep.subr.mxu0 0.0
  %2725 = vmatpush1.msra.mxu0 0.0
  %2726 = vmatprep.subr.mxu0 0.0
  %2727 = vmatpush1.msra.mxu0 0.0
  %2728 = vmatprep.subr.mxu0 0.0
  %2729 = vmatpush1.msra.mxu0 0.0
  %2730 = vmatprep.subr.mxu0 0.0
  %2731 = vmatpush1.msra.mxu0 0.0
  %2732 = vmatprep.subr.mxu0 0.0
  %2733 = vmatpush1.msra.mxu0 0.0
  %2734 = vmatprep.subr.mxu0 0.0
  %2735 = vmatpush1.msra.mxu0 0.0
  %2736 = vmatprep.subr.mxu0 0.0
  %2737 = vmatpush1.msra.mxu0 0.0
  %2738 = vmatprep.subr.mxu0 0.0
  %2739 = vmatpush1.msra.mxu0 0.0
  %2740 = vmatprep.subr.mxu0 0.0
  %2741 = vmatpush1.msra.mxu0 0.0
  %2742 = vmatprep.subr.mxu0 0.0
  %2743 = vmatpush1.msra.mxu0 0.0
  %2744 = vmatprep.subr.mxu0 0.0
  %2745 = vmatpush1.msra.mxu0 0.0
  %2746 = vmatprep.subr.mxu0 0.0
  %2747 = vmatpush1.msra.mxu0 0.0
  %2748 = vmatprep.subr.mxu0 0.0
  %2749 = vmatpush1.msra.mxu0 0.0
  %2750 = vmatprep.subr.mxu0 0.0
  %2751 = vmatpush1.msra.mxu0 0.0
  %2752 = vmatprep.subr.mxu0 0.0
  %2753 = vmatpush1.msra.mxu0 0.0
  %2754 = vmatprep.subr.mxu0 0.0
  %2755 = vmatpush1.msra.mxu0 0.0
  %2756 = vmatprep.subr.mxu0 0.0
  %2757 = vmatpush1.msra.mxu0 0.0
  %2758 = vmatprep.subr.mxu0 0.0
  %2759 = vmatpush1.msra.mxu0 0.0
  %2760 = vmatprep.subr.mxu0 0.0
  %2761 = vmatpush1.msra.mxu0 0.0
  %2762 = vmatprep.mubr.f32.mxu0 0.0
  %2763 = vmatmul.mubr.f32.gmra.mrb[0].mxu0 %v912
  %v2764 = vpop.f32.mrb[0].mxu0
  %v2765 = vadd.f32 %v908, %v2764
  %v2766 = vpop.f32.mrb[0].mxu0
  %v2767 = vadd.f32 %v908, %v2766
  %2768 = vdwg.mxu0
  %2769 = vmatprep.subr.mxu0 %v2457
  %2770 = vmatpush1.msra.mxu0 %v2456
  %2771 = vmatprep.subr.mxu0 %v2499
  %2772 = vmatpush1.msra.mxu0 %v2498
  %2773 = vmatprep.subr.mxu0 %v2586
  %2774 = vmatpush1.msra.mxu0 %v2603
  %2775 = vmatprep.subr.mxu0 %v2625
  %2776 = vmatpush1.msra.mxu0 %v2623
  %2777 = vmatprep.subr.mxu0 0.0
  %2778 = vmatpush1.msra.mxu0 0.0
  %2779 = vmatprep.subr.mxu0 0.0
  %2780 = vmatpush1.msra.mxu0 0.0
  %2781 = vmatprep.subr.mxu0 0.0
  %2782 = vmatpush1.msra.mxu0 0.0
  %2783 = vmatprep.subr.mxu0 0.0
  %2784 = vmatpush1.msra.mxu0 0.0
  %2785 = vmatprep.subr.mxu0 0.0
  %2786 = vmatpush1.msra.mxu0 0.0
  %2787 = vmatprep.subr.mxu0 0.0
  %2788 = vmatpush1.msra.mxu0 0.0
  %2789 = vmatprep.subr.mxu0 0.0
  %2790 = vmatpush1.msra.mxu0 0.0
  %2791 = vmatprep.subr.mxu0 0.0
  %2792 = vmatpush1.msra.mxu0 0.0
  %2793 = vmatprep.subr.mxu0 0.0
  %2794 = vmatpush1.msra.mxu0 0.0
  %2795 = vmatprep.subr.mxu0 0.0
  %2796 = vmatpush1.msra.mxu0 0.0
  %2797 = vmatprep.subr.mxu0 0.0
  %2798 = vmatpush1.msra.mxu0 0.0
  %2799 = vmatprep.subr.mxu0 0.0
  %2800 = vmatpush1.msra.mxu0 0.0
  %2801 = vmatprep.subr.mxu0 0.0
  %2802 = vmatpush1.msra.mxu0 0.0
  %2803 = vmatprep.subr.mxu0 0.0
  %2804 = vmatpush1.msra.mxu0 0.0
  %2805 = vmatprep.subr.mxu0 0.0
  %2806 = vmatpush1.msra.mxu0 0.0
  %2807 = vmatprep.subr.mxu0 0.0
  %2808 = vmatpush1.msra.mxu0 0.0
  %2809 = vmatprep.subr.mxu0 0.0
  %2810 = vmatpush1.msra.mxu0 0.0
  %2811 = vmatprep.subr.mxu0 0.0
  %2812 = vmatpush1.msra.mxu0 0.0
  %2813 = vmatprep.subr.mxu0 0.0
  %2814 = vmatpush1.msra.mxu0 0.0
  %2815 = vmatprep.subr.mxu0 0.0
  %2816 = vmatpush1.msra.mxu0 0.0
  %2817 = vmatprep.subr.mxu0 0.0
  %2818 = vmatpush1.msra.mxu0 0.0
  %2819 = vmatprep.subr.mxu0 0.0
  %2820 = vmatpush1.msra.mxu0 0.0
  %2821 = vmatprep.subr.mxu0 0.0
  %2822 = vmatpush1.msra.mxu0 0.0
  %2823 = vmatprep.subr.mxu0 0.0
  %2824 = vmatpush1.msra.mxu0 0.0
  %2825 = vmatprep.subr.mxu0 0.0
  %2826 = vmatpush1.msra.mxu0 0.0
  %2827 = vmatprep.subr.mxu0 0.0
  %2828 = vmatpush1.msra.mxu0 0.0
  %2829 = vmatprep.subr.mxu0 0.0
  %2830 = vmatpush1.msra.mxu0 0.0
  %2831 = vmatprep.subr.mxu0 0.0
  %2832 = vmatpush1.msra.mxu0 0.0
  %2833 = vmatprep.mubr.f32.mxu0 0.0
  %2834 = vmatmul.mubr.f32.gmra.mrb[0].mxu0 %v912
  %v2835 = vpop.f32.mrb[0].mxu0
  %v2836 = vadd.f32 %v908, %v2835
  %v2837 = vpop.f32.mrb[0].mxu0
  %v2838 = vadd.f32 %v908, %v2837
  %2839 = vdwg.mxu0
  %v2840 = vtanh.pop %v2694
  %v2841 = vtanh.pop %v2696
  %v2842 = vtanh.pop %v2765
  %v2843 = vtanh.pop %v2767
  %v2844 = vtanh.pop %v2836
  %v2845 = vtanh.pop %v2838
  %v2847 = vsel %vm1145, %v2845, 0
  %2849 = vmatprep.subr.mxu0 %v47
  %2850 = vmatpush1.msra.mxu0 %v46
  %2851 = vmatprep.subr.mxu0 %v49
  %2852 = vmatpush1.msra.mxu0 %v48
  %2853 = vmatprep.subr.mxu0 %v51
  %2854 = vmatpush1.msra.mxu0 %v50
  %2855 = vmatprep.subr.mxu0 %v53
  %2856 = vmatpush1.msra.mxu0 %v52
  %2857 = vmatprep.subr.mxu0 %v55
  %2858 = vmatpush1.msra.mxu0 %v54
  %2859 = vmatprep.subr.mxu0 %v57
  %2860 = vmatpush1.msra.mxu0 %v56
  %2861 = vmatprep.subr.mxu0 %v59
  %2862 = vmatpush1.msra.mxu0 %v58
  %2863 = vmatprep.subr.mxu0 %v61
  %2864 = vmatpush1.msra.mxu0 %v60
  %2865 = vmatprep.subr.mxu0 %v63
  %2866 = vmatpush1.msra.mxu0 %v62
  %2867 = vmatprep.subr.mxu0 %v65
  %2868 = vmatpush1.msra.mxu0 %v64
  %2869 = vmatprep.subr.mxu0 %v67
  %2870 = vmatpush1.msra.mxu0 %v66
  %2871 = vmatprep.subr.mxu0 %v69
  %2872 = vmatpush1.msra.mxu0 %v68
  %2873 = vmatprep.subr.mxu0 %v71
  %2874 = vmatpush1.msra.mxu0 %v70
  %2875 = vmatprep.subr.mxu0 %v73
  %2876 = vmatpush1.msra.mxu0 %v72
  %2877 = vmatprep.subr.mxu0 %v75
  %2878 = vmatpush1.msra.mxu0 %v74
  %2879 = vmatprep.subr.mxu0 %v77
  %2880 = vmatpush1.msra.mxu0 %v76
  %2881 = vmatprep.subr.mxu0 %v79
  %2882 = vmatpush1.msra.mxu0 %v78
  %2883 = vmatprep.subr.mxu0 %v81
  %2884 = vmatpush1.msra.mxu0 %v80
  %2885 = vmatprep.subr.mxu0 %v83
  %2886 = vmatpush1.msra.mxu0 %v82
  %2887 = vmatprep.subr.mxu0 %v85
  %2888 = vmatpush1.msra.mxu0 %v84
  %2889 = vmatprep.subr.mxu0 %v87
  %2890 = vmatpush1.msra.mxu0 %v86
  %2891 = vmatprep.subr.mxu0 %v89
  %2892 = vmatpush1.msra.mxu0 %v88
  %2893 = vmatprep.subr.mxu0 %v91
  %2894 = vmatpush1.msra.mxu0 %v90
  %2895 = vmatprep.subr.mxu0 %v93
  %2896 = vmatpush1.msra.mxu0 %v92
  %2897 = vmatprep.subr.mxu0 %v95
  %2898 = vmatpush1.msra.mxu0 %v94
  %2899 = vmatprep.subr.mxu0 %v97
  %2900 = vmatpush1.msra.mxu0 %v96
  %2901 = vmatprep.subr.mxu0 %v99
  %2902 = vmatpush1.msra.mxu0 %v98
  %2903 = vmatprep.subr.mxu0 %v101
  %2904 = vmatpush1.msra.mxu0 %v100
  %2905 = vmatprep.subr.mxu0 %v103
  %2906 = vmatpush1.msra.mxu0 %v102
  %2907 = vmatprep.subr.mxu0 %v105
  %2908 = vmatpush1.msra.mxu0 %v104
  %2909 = vmatprep.subr.mxu0 %v107
  %2910 = vmatpush1.msra.mxu0 %v106
  %2911 = vmatprep.subr.mxu0 %v109
  %2912 = vmatpush1.msra.mxu0 %v108
  %2913 = vmatprep.mubr.f32.mxu0 %v2841
  %2914 = vmatmul.mubr.f32.gmra.mrb[0].mxu0 %v2840
  %v2915 = vpop.f32.mrb[0].mxu0
  %v2916 = vadd.f32 0.0, %v2915
  %v2917 = vpop.f32.mrb[0].mxu0
  %v2918 = vadd.f32 0.0, %v2917
  %2919 = vdwg.mxu0
  %2920 = vmatprep.subr.mxu0 %v111
  %2921 = vmatpush1.msra.mxu0 %v110
  %2922 = vmatprep.subr.mxu0 %v113
  %2923 = vmatpush1.msra.mxu0 %v112
  %2924 = vmatprep.subr.mxu0 %v115
  %2925 = vmatpush1.msra.mxu0 %v114
  %2926 = vmatprep.subr.mxu0 %v117
  %2927 = vmatpush1.msra.mxu0 %v116
  %2928 = vmatprep.subr.mxu0 %v119
  %2929 = vmatpush1.msra.mxu0 %v118
  %2930 = vmatprep.subr.mxu0 %v121
  %2931 = vmatpush1.msra.mxu0 %v120
  %2932 = vmatprep.subr.mxu0 %v123
  %2933 = vmatpush1.msra.mxu0 %v122
  %2934 = vmatprep.subr.mxu0 %v125
  %2935 = vmatpush1.msra.mxu0 %v124
  %2936 = vmatprep.subr.mxu0 %v127
  %2937 = vmatpush1.msra.mxu0 %v126
  %2938 = vmatprep.subr.mxu0 %v129
  %2939 = vmatpush1.msra.mxu0 %v128
  %2940 = vmatprep.subr.mxu0 %v131
  %2941 = vmatpush1.msra.mxu0 %v130
  %2942 = vmatprep.subr.mxu0 %v133
  %2943 = vmatpush1.msra.mxu0 %v132
  %2944 = vmatprep.subr.mxu0 %v135
  %2945 = vmatpush1.msra.mxu0 %v134
  %2946 = vmatprep.subr.mxu0 %v137
  %2947 = vmatpush1.msra.mxu0 %v136
  %2948 = vmatprep.subr.mxu0 %v139
  %2949 = vmatpush1.msra.mxu0 %v138
  %2950 = vmatprep.subr.mxu0 %v141
  %2951 = vmatpush1.msra.mxu0 %v140
  %2952 = vmatprep.subr.mxu0 %v143
  %2953 = vmatpush1.msra.mxu0 %v142
  %2954 = vmatprep.subr.mxu0 %v145
  %2955 = vmatpush1.msra.mxu0 %v144
  %2956 = vmatprep.subr.mxu0 %v147
  %2957 = vmatpush1.msra.mxu0 %v146
  %2958 = vmatprep.subr.mxu0 %v149
  %2959 = vmatpush1.msra.mxu0 %v148
  %2960 = vmatprep.subr.mxu0 %v151
  %2961 = vmatpush1.msra.mxu0 %v150
  %2962 = vmatprep.subr.mxu0 %v153
  %2963 = vmatpush1.msra.mxu0 %v152
  %2964 = vmatprep.subr.mxu0 %v155
  %2965 = vmatpush1.msra.mxu0 %v154
  %2966 = vmatprep.subr.mxu0 %v157
  %2967 = vmatpush1.msra.mxu0 %v156
  %2968 = vmatprep.subr.mxu0 %v159
  %2969 = vmatpush1.msra.mxu0 %v158
  %2970 = vmatprep.subr.mxu0 %v161
  %2971 = vmatpush1.msra.mxu0 %v160
  %2972 = vmatprep.subr.mxu0 %v163
  %2973 = vmatpush1.msra.mxu0 %v162
  %2974 = vmatprep.subr.mxu0 %v165
  %2975 = vmatpush1.msra.mxu0 %v164
  %2976 = vmatprep.subr.mxu0 %v167
  %2977 = vmatpush1.msra.mxu0 %v166
  %2978 = vmatprep.subr.mxu0 %v169
  %2979 = vmatpush1.msra.mxu0 %v168
  %2980 = vmatprep.subr.mxu0 %v171
  %2981 = vmatpush1.msra.mxu0 %v170
  %2982 = vmatprep.subr.mxu0 %v173
  %2983 = vmatpush1.msra.mxu0 %v172
  %2984 = vmatprep.mubr.f32.mxu0 %v2843
  %2985 = vmatmul.mubr.f32.gmra.mrb[0].mxu0 %v2842
  %v2986 = vpop.f32.mrb[0].mxu0
  %v2987 = vadd.f32 %v2916, %v2986
  %v2988 = vpop.f32.mrb[0].mxu0
  %v2989 = vadd.f32 %v2918, %v2988
  %2990 = vdwg.mxu0
  %2991 = vmatprep.subr.mxu0 %v175
  %2992 = vmatpush1.msra.mxu0 %v174
  %2993 = vmatprep.subr.mxu0 %v177
  %2994 = vmatpush1.msra.mxu0 %v176
  %2995 = vmatprep.subr.mxu0 %v179
  %2996 = vmatpush1.msra.mxu0 %v178
  %2997 = vmatprep.subr.mxu0 %v181
  %2998 = vmatpush1.msra.mxu0 %v180
  %2999 = vmatprep.subr.mxu0 %v183
  %3000 = vmatpush1.msra.mxu0 %v182
  %3001 = vmatprep.subr.mxu0 %v185
  %3002 = vmatpush1.msra.mxu0 %v184
  %3003 = vmatprep.subr.mxu0 %v187
  %3004 = vmatpush1.msra.mxu0 %v186
  %3005 = vmatprep.subr.mxu0 %v189
  %3006 = vmatpush1.msra.mxu0 %v188
  %3007 = vmatprep.subr.mxu0 %v191
  %3008 = vmatpush1.msra.mxu0 %v190
  %3009 = vmatprep.subr.mxu0 %v193
  %3010 = vmatpush1.msra.mxu0 %v192
  %3011 = vmatprep.subr.mxu0 %v195
  %3012 = vmatpush1.msra.mxu0 %v194
  %3013 = vmatprep.subr.mxu0 %v197
  %3014 = vmatpush1.msra.mxu0 %v196
  %3015 = vmatprep.subr.mxu0 %v199
  %3016 = vmatpush1.msra.mxu0 %v198
  %3017 = vmatprep.subr.mxu0 %v201
  %3018 = vmatpush1.msra.mxu0 %v200
  %3019 = vmatprep.subr.mxu0 %v203
  %3020 = vmatpush1.msra.mxu0 %v202
  %3021 = vmatprep.subr.mxu0 %v205
  %3022 = vmatpush1.msra.mxu0 %v204
  %3023 = vmatprep.subr.mxu0 %v207
  %3024 = vmatpush1.msra.mxu0 %v206
  %3025 = vmatprep.subr.mxu0 %v209
  %3026 = vmatpush1.msra.mxu0 %v208
  %3027 = vmatprep.subr.mxu0 %v211
  %3028 = vmatpush1.msra.mxu0 %v210
  %3029 = vmatprep.subr.mxu0 %v213
  %3030 = vmatpush1.msra.mxu0 %v212
  %3031 = vmatprep.subr.mxu0 0.0
  %3032 = vmatpush1.msra.mxu0 0.0
  %3033 = vmatprep.subr.mxu0 0.0
  %3034 = vmatpush1.msra.mxu0 0.0
  %3035 = vmatprep.subr.mxu0 0.0
  %3036 = vmatpush1.msra.mxu0 0.0
  %3037 = vmatprep.subr.mxu0 0.0
  %3038 = vmatpush1.msra.mxu0 0.0
  %3039 = vmatprep.subr.mxu0 0.0
  %3040 = vmatpush1.msra.mxu0 0.0
  %3041 = vmatprep.subr.mxu0 0.0
  %3042 = vmatpush1.msra.mxu0 0.0
  %3043 = vmatprep.subr.mxu0 0.0
  %3044 = vmatpush1.msra.mxu0 0.0
  %3045 = vmatprep.subr.mxu0 0.0
  %3046 = vmatpush1.msra.mxu0 0.0
  %3047 = vmatprep.subr.mxu0 0.0
  %3048 = vmatpush1.msra.mxu0 0.0
  %3049 = vmatprep.subr.mxu0 0.0
  %3050 = vmatpush1.msra.mxu0 0.0
  %3051 = vmatprep.subr.mxu0 0.0
  %3052 = vmatpush1.msra.mxu0 0.0
  %3053 = vmatprep.subr.mxu0 0.0
  %3054 = vmatpush1.msra.mxu0 0.0
  %3055 = vmatprep.mubr.f32.mxu0 %v2847
  %3056 = vmatmul.mubr.f32.gmra.mrb[0].mxu0 %v2844
  %v3057 = vpop.f32.mrb[0].mxu0
  %v3058 = vadd.f32 %v2987, %v3057
  %v3059 = vpop.f32.mrb[0].mxu0
  %v3060 = vadd.f32 %v2989, %v3059
  %3061 = vdwg.mxu0
  %v3063 = vrot.slane %v3058, 2
  %3064 = vrot.lane.b32.xlu0 %v3063, 127
  %v3065 = vpop.permute.xlu0 %3064
  %v3067 = vrot.slane %v3058, 4
  %3068 = vrot.lane.b32.xlu0 %v3067, 126
  %v3069 = vpop.permute.xlu0 %3068
  %v3071 = vrot.slane %v3058, 6
  %3072 = vrot.lane.b32.xlu0 %v3071, 125
  %v3073 = vpop.permute.xlu0 %3072
  %3075 = vrot.lane.b32.xlu0 %v3058, 124
  %v3076 = vpop.permute.xlu0 %3075
  %3078 = vrot.lane.b32.xlu0 %v3063, 116
  %v3079 = vpop.permute.xlu0 %3078
  %3081 = vrot.lane.b32.xlu0 %v3067, 115
  %v3082 = vpop.permute.xlu0 %3081
  %3084 = vrot.lane.b32.xlu0 %v3071, 114
  %v3085 = vpop.permute.xlu0 %3084
  %3087 = vrot.lane.b32.xlu0 %v3058, 113
  %v3088 = vpop.permute.xlu0 %3087
  %3090 = vrot.lane.b32.xlu0 %v3063, 112
  %v3091 = vpop.permute.xlu0 %3090
  %3093 = vrot.lane.b32.xlu0 %v3067, 104
  %v3094 = vpop.permute.xlu0 %3093
  %3096 = vrot.lane.b32.xlu0 %v3071, 103
  %v3097 = vpop.permute.xlu0 %3096
  %3099 = vrot.lane.b32.xlu0 %v3058, 102
  %v3100 = vpop.permute.xlu0 %3099
  %3102 = vrot.lane.b32.xlu0 %v3063, 101
  %v3103 = vpop.permute.xlu0 %3102
  %3105 = vrot.lane.b32.xlu0 %v3067, 100
  %v3106 = vpop.permute.xlu0 %3105
  %v3109 = vrot.slane %v3060, 6
  %3110 = vrot.lane.b32.xlu0 %v3071, 92
  %v3111 = vpop.permute.xlu0 %3110
  %3112 = vrot.lane.b32.xlu0 %v3109, 92
  %v3113 = vpop.permute.xlu0 %3112
  %v3114 = vsel %vm1414, %v3111, %v3113
  %v3116 = vsel %vm732, %v3058, %v3065
  %v3117 = vsel %vm718, %v3065, %v3069
  %v3118 = vsel %vm704, %v3069, %v3073
  %v3119 = vsel %vm732, %v3076, %v3079
  %v3120 = vsel %vm718, %v3079, %v3082
  %v3121 = vsel %vm704, %v3082, %v3085
  %v3122 = vsel %vm732, %v3088, %v3091
  %v3123 = vsel %vm718, %v3091, %v3094
  %v3124 = vsel %vm704, %v3094, %v3097
  %v3125 = vsel %vm732, %v3100, %v3103
  %v3126 = vsel %vm718, %v3103, %v3106
  %v3127 = vsel %vm704, %v3106, %v3114
  %v3128 = vrot.slane %v3060, 2
  %3129 = vrot.lane.b32.xlu0 %v3128, 127
  %v3130 = vpop.permute.xlu0 %3129
  %v3131 = vsel %vm349, %v3065, %v3130
  %v3134 = vrot.slane %v3060, 4
  %3135 = vrot.lane.b32.xlu0 %v3134, 126
  %v3136 = vpop.permute.xlu0 %3135
  %v3137 = vsel %vm373, %v3069, %v3136
  %3140 = vrot.lane.b32.xlu0 %v3109, 125
  %v3141 = vpop.permute.xlu0 %3140
  %v3142 = vsel %vm397, %v3073, %v3141
  %3145 = vrot.lane.b32.xlu0 %v3058, 117
  %v3146 = vpop.permute.xlu0 %3145
  %3147 = vrot.lane.b32.xlu0 %v3060, 117
  %v3148 = vpop.permute.xlu0 %3147
  %v3149 = vsel %vm1450, %v3146, %v3148
  %3152 = vrot.lane.b32.xlu0 %v3128, 116
  %v3153 = vpop.permute.xlu0 %3152
  %v3154 = vsel %vm1456, %v3079, %v3153
  %3157 = vrot.lane.b32.xlu0 %v3134, 115
  %v3158 = vpop.permute.xlu0 %3157
  %v3159 = vsel %vm1462, %v3082, %v3158
  %3162 = vrot.lane.b32.xlu0 %v3109, 114
  %v3163 = vpop.permute.xlu0 %3162
  %v3164 = vsel %vm1468, %v3085, %v3163
  %3167 = vrot.lane.b32.xlu0 %v3060, 113
  %v3168 = vpop.permute.xlu0 %3167
  %v3169 = vsel %vm1474, %v3088, %v3168
  %v3170 = vsel %vm732, %v3058, %v3131
  %v3171 = vsel %vm732, %v3060, %v3130
  %v3172 = vsel %vm718, %v3131, %v3137
  %v3173 = vsel %vm718, %v3130, %v3136
  %v3174 = vsel %vm704, %v3137, %v3142
  %v3175 = vsel %vm704, %v3136, %v3141
  %v3176 = vsel %vm732, %v3149, %v3154
  %v3177 = vsel %vm732, %v3148, %v3153
  %v3178 = vsel %vm718, %v3154, %v3159
  %v3179 = vsel %vm718, %v3153, %v3158
  %v3180 = vsel %vm704, %v3159, %v3164
  %v3181 = vsel %vm704, %v3158, %v3163
  %3194 = vrot.lane.b32.xlu0 %v3170, 91
  %v3195 = vpop.permute.xlu0 %3194
  %3196 = vrot.lane.b32.xlu0 %v3171, 91
  %v3197 = vpop.permute.xlu0 %3196
  %3198 = vrot.lane.b32.xlu0 %v3172, 91
  %v3199 = vpop.permute.xlu0 %3198
  %3200 = vrot.lane.b32.xlu0 %v3173, 91
  %v3201 = vpop.permute.xlu0 %3200
  %3202 = vrot.lane.b32.xlu0 %v3174, 91
  %v3203 = vpop.permute.xlu0 %3202
  %3204 = vrot.lane.b32.xlu0 %v3175, 91
  %v3205 = vpop.permute.xlu0 %3204
  %3206 = vrot.lane.b32.xlu0 %v3176, 91
  %v3207 = vpop.permute.xlu0 %3206
  %3208 = vrot.lane.b32.xlu0 %v3177, 91
  %v3209 = vpop.permute.xlu0 %3208
  %3210 = vrot.lane.b32.xlu0 %v3178, 91
  %v3211 = vpop.permute.xlu0 %3210
  %3212 = vrot.lane.b32.xlu0 %v3179, 91
  %v3213 = vpop.permute.xlu0 %3212
  %3214 = vrot.lane.b32.xlu0 %v3180, 91
  %v3215 = vpop.permute.xlu0 %3214
  %3216 = vrot.lane.b32.xlu0 %v3181, 91
  %v3217 = vpop.permute.xlu0 %3216
  %3218 = vrot.lane.b32.xlu0 %v3169, 91
  %v3219 = vpop.permute.xlu0 %3218
  %3220 = vrot.lane.b32.xlu0 %v3168, 91
  %v3221 = vpop.permute.xlu0 %3220
  %v3222 = vsel %vm1528, %v3195, %v3197
  %v3223 = vsel %vm1528, %v3199, %v3201
  %v3224 = vsel %vm1528, %v3203, %v3205
  %v3225 = vsel %vm1528, %v3207, %v3209
  %v3226 = vsel %vm1528, %v3211, %v3213
  %v3227 = vsel %vm1528, %v3215, %v3217
  %v3228 = vsel %vm1528, %v3219, %v3221
  %v3235 = vsel %vm732, %v3228, 0
  %3237 = vmatprep.subr.mxu0 0.0
  %3238 = vmatpush1.msra.mxu0 %v3116
  %3239 = vmatprep.subr.mxu0 0.0
  %3240 = vmatpush1.msra.mxu0 %v3117
  %3241 = vmatprep.subr.mxu0 0.0
  %3242 = vmatpush1.msra.mxu0 %v3118
  %3243 = vmatprep.subr.mxu0 0.0
  %3244 = vmatpush1.msra.mxu0 %v3119
  %3245 = vmatprep.subr.mxu0 0.0
  %3246 = vmatpush1.msra.mxu0 %v3120
  %3247 = vmatprep.subr.mxu0 0.0
  %3248 = vmatpush1.msra.mxu0 %v3121
  %3249 = vmatprep.subr.mxu0 0.0
  %3250 = vmatpush1.msra.mxu0 %v3122
  %3251 = vmatprep.subr.mxu0 0.0
  %3252 = vmatpush1.msra.mxu0 %v3123
  %3253 = vmatprep.subr.mxu0 0.0
  %3254 = vmatpush1.msra.mxu0 %v3124
  %3255 = vmatprep.subr.mxu0 0.0
  %3256 = vmatpush1.msra.mxu0 %v3125
  %3257 = vmatprep.subr.mxu0 0.0
  %3258 = vmatpush1.msra.mxu0 %v3126
  %3259 = vmatprep.subr.mxu0 0.0
  %3260 = vmatpush1.msra.mxu0 %v3127
  %3261 = vmatprep.subr.mxu0 0.0
  %3262 = vmatpush1.msra.mxu0 %v3222
  %3263 = vmatprep.subr.mxu0 0.0
  %3264 = vmatpush1.msra.mxu0 %v3223
  %3265 = vmatprep.subr.mxu0 0.0
  %3266 = vmatpush1.msra.mxu0 %v3224
  %3267 = vmatprep.subr.mxu0 0.0
  %3268 = vmatpush1.msra.mxu0 %v3225
  %3269 = vmatprep.subr.mxu0 0.0
  %3270 = vmatpush1.msra.mxu0 %v3226
  %3271 = vmatprep.subr.mxu0 0.0
  %3272 = vmatpush1.msra.mxu0 %v3227
  %3273 = vmatprep.subr.mxu0 0.0
  %3274 = vmatpush1.msra.mxu0 %v3235
  %3275 = vmatprep.subr.mxu0 0.0
  %3276 = vmatpush1.msra.mxu0 0.0
  %3277 = vmatprep.subr.mxu0 0.0
  %3278 = vmatpush1.msra.mxu0 0.0
  %3279 = vmatprep.subr.mxu0 0.0
  %3280 = vmatpush1.msra.mxu0 0.0
  %3281 = vmatprep.subr.mxu0 0.0
  %3282 = vmatpush1.msra.mxu0 0.0
  %3283 = vmatprep.subr.mxu0 0.0
  %3284 = vmatpush1.msra.mxu0 0.0
  %3285 = vmatprep.subr.mxu0 0.0
  %3286 = vmatpush1.msra.mxu0 0.0
  %3287 = vmatprep.subr.mxu0 0.0
  %3288 = vmatpush1.msra.mxu0 0.0
  %3289 = vmatprep.subr.mxu0 0.0
  %3290 = vmatpush1.msra.mxu0 0.0
  %3291 = vmatprep.subr.mxu0 0.0
  %3292 = vmatpush1.msra.mxu0 0.0
  %3293 = vmatprep.subr.mxu0 0.0
  %3294 = vmatpush1.msra.mxu0 0.0
  %3295 = vmatprep.subr.mxu0 0.0
  %3296 = vmatpush1.msra.mxu0 0.0
  %3297 = vmatprep.subr.mxu0 0.0
  %3298 = vmatpush1.msra.mxu0 0.0
  %3299 = vmatprep.subr.mxu0 0.0
  %3300 = vmatpush1.msra.mxu0 0.0
  %3301 = vmatprep.mubr.f32.mxu0 %v1554
  %3302 = vmatmul.mubr.f32.gmra.mrb[0].mxu0 %v228
  %v3303 = vpop.f32.mrb[0].mxu0
  %v3304 = vadd.f32 %v1545, %v3303
  %v3305 = vpop.f32.mrb[0].mxu0
  %3306 = vmatprep.mubr.f32.mxu0 %v1557
  %3307 = vmatmul.mubr.f32.gmra.mrb[0].mxu0 %v230
  %v3308 = vpop.f32.mrb[0].mxu0
  %v3309 = vadd.f32 %v1550, %v3308
  %v3310 = vpop.f32.mrb[0].mxu0
  %3311 = vdwg.mxu0
  %v3312 = vtanh.pop %v3304
  %v3313 = vtanh.pop %v3309
  %v3315 = vsel %vm541, %v3312, 0
  %v3318 = vsel %vm541, %v3313, 0
  %3320 = vmatprep.subr.mxu0 0.0
  %3321 = vmatpush1.msra.mxu0 %v214
  %3322 = vmatprep.subr.mxu0 0.0
  %3323 = vmatpush1.msra.mxu0 %v215
  %3324 = vmatprep.subr.mxu0 0.0
  %3325 = vmatpush1.msra.mxu0 %v216
  %3326 = vmatprep.subr.mxu0 0.0
  %3327 = vmatpush1.msra.mxu0 %v217
  %3328 = vmatprep.subr.mxu0 0.0
  %3329 = vmatpush1.msra.mxu0 %v218
  %3330 = vmatprep.subr.mxu0 0.0
  %3331 = vmatpush1.msra.mxu0 %v219
  %3332 = vmatprep.subr.mxu0 0.0
  %3333 = vmatpush1.msra.mxu0 %v220
  %3334 = vmatprep.subr.mxu0 0.0
  %3335 = vmatpush1.msra.mxu0 %v221
  %3336 = vmatprep.subr.mxu0 0.0
  %3337 = vmatpush1.msra.mxu0 %v222
  %3338 = vmatprep.subr.mxu0 0.0
  %3339 = vmatpush1.msra.mxu0 %v223
  %3340 = vmatprep.subr.mxu0 0.0
  %3341 = vmatpush1.msra.mxu0 %v224
  %3342 = vmatprep.subr.mxu0 0.0
  %3343 = vmatpush1.msra.mxu0 %v225
  %3344 = vmatprep.subr.mxu0 0.0
  %3345 = vmatpush1.msra.mxu0 0.0
  %3346 = vmatprep.subr.mxu0 0.0
  %3347 = vmatpush1.msra.mxu0 0.0
  %3348 = vmatprep.subr.mxu0 0.0
  %3349 = vmatpush1.msra.mxu0 0.0
  %3350 = vmatprep.subr.mxu0 0.0
  %3351 = vmatpush1.msra.mxu0 0.0
  %3352 = vmatprep.subr.mxu0 0.0
  %3353 = vmatpush1.msra.mxu0 0.0
  %3354 = vmatprep.subr.mxu0 0.0
  %3355 = vmatpush1.msra.mxu0 0.0
  %3356 = vmatprep.subr.mxu0 0.0
  %3357 = vmatpush1.msra.mxu0 0.0
  %3358 = vmatprep.subr.mxu0 0.0
  %3359 = vmatpush1.msra.mxu0 0.0
  %3360 = vmatprep.subr.mxu0 0.0
  %3361 = vmatpush1.msra.mxu0 0.0
  %3362 = vmatprep.subr.mxu0 0.0
  %3363 = vmatpush1.msra.mxu0 0.0
  %3364 = vmatprep.subr.mxu0 0.0
  %3365 = vmatpush1.msra.mxu0 0.0
  %3366 = vmatprep.subr.mxu0 0.0
  %3367 = vmatpush1.msra.mxu0 0.0
  %3368 = vmatprep.subr.mxu0 0.0
  %3369 = vmatpush1.msra.mxu0 0.0
  %3370 = vmatprep.subr.mxu0 0.0
  %3371 = vmatpush1.msra.mxu0 0.0
  %3372 = vmatprep.subr.mxu0 0.0
  %3373 = vmatpush1.msra.mxu0 0.0
  %3374 = vmatprep.subr.mxu0 0.0
  %3375 = vmatpush1.msra.mxu0 0.0
  %3376 = vmatprep.subr.mxu0 0.0
  %3377 = vmatpush1.msra.mxu0 0.0
  %3378 = vmatprep.subr.mxu0 0.0
  %3379 = vmatpush1.msra.mxu0 0.0
  %3380 = vmatprep.subr.mxu0 0.0
  %3381 = vmatpush1.msra.mxu0 0.0
  %3382 = vmatprep.subr.mxu0 0.0
  %3383 = vmatpush1.msra.mxu0 0.0
  %3384 = vmatprep.mubr.f32.mxu0 0.0
  %3385 = vmatmul.mubr.f32.gmra.mrb[0].mxu0 %v3315
  %v3386 = vpop.f32.mrb[0].mxu0
  %v3387 = vadd.f32 0.0, %v3386
  %v3388 = vpop.f32.mrb[0].mxu0
  %3389 = vmatprep.mubr.f32.mxu0 0.0
  %3390 = vmatmul.mubr.f32.gmra.mrb[0].mxu0 %v3318
  %v3391 = vpop.f32.mrb[0].mxu0
  %v3392 = vadd.f32 0.0, %v3391
  %v3393 = vpop.f32.mrb[0].mxu0
  %3394 = vdwg.mxu0
  %3397 = vrot.lane.b32.xlu0 %v3387, 127
  %v3398 = vpop.permute.xlu0 %3397
  %3399 = vrot.lane.b32.xlu0 %v3392, 127
  %v3400 = vpop.permute.xlu0 %3399
  %3403 = vrot.lane.b32.xlu0 %v3387, 126
  %v3404 = vpop.permute.xlu0 %3403
  %3405 = vrot.lane.b32.xlu0 %v3392, 126
  %v3406 = vpop.permute.xlu0 %3405
  %3409 = vrot.lane.b32.xlu0 %v3387, 125
  %v3410 = vpop.permute.xlu0 %3409
  %3411 = vrot.lane.b32.xlu0 %v3392, 125
  %v3412 = vpop.permute.xlu0 %3411
  %3415 = vrot.lane.b32.xlu0 %v3387, 124
  %v3416 = vpop.permute.xlu0 %3415
  %3417 = vrot.lane.b32.xlu0 %v3392, 124
  %v3418 = vpop.permute.xlu0 %3417
  %3421 = vrot.lane.b32.xlu0 %v3387, 123
  %v3422 = vpop.permute.xlu0 %3421
  %3423 = vrot.lane.b32.xlu0 %v3392, 123
  %v3424 = vpop.permute.xlu0 %3423
  %3427 = vrot.lane.b32.xlu0 %v3387, 122
  %v3428 = vpop.permute.xlu0 %3427
  %3429 = vrot.lane.b32.xlu0 %v3392, 122
  %v3430 = vpop.permute.xlu0 %3429
  %3433 = vrot.lane.b32.xlu0 %v3387, 121
  %v3434 = vpop.permute.xlu0 %3433
  %3435 = vrot.lane.b32.xlu0 %v3392, 121
  %v3436 = vpop.permute.xlu0 %3435
  %3439 = vrot.lane.b32.xlu0 %v3387, 120
  %v3440 = vpop.permute.xlu0 %3439
  %3441 = vrot.lane.b32.xlu0 %v3392, 120
  %v3442 = vpop.permute.xlu0 %3441
  %3445 = vrot.lane.b32.xlu0 %v3387, 119
  %v3446 = vpop.permute.xlu0 %3445
  %3447 = vrot.lane.b32.xlu0 %v3392, 119
  %v3448 = vpop.permute.xlu0 %3447
  %3451 = vrot.lane.b32.xlu0 %v3387, 118
  %v3452 = vpop.permute.xlu0 %3451
  %3453 = vrot.lane.b32.xlu0 %v3392, 118
  %v3454 = vpop.permute.xlu0 %3453
  %3457 = vrot.lane.b32.xlu0 %v3387, 117
  %v3458 = vpop.permute.xlu0 %3457
  %3459 = vrot.lane.b32.xlu0 %v3392, 117
  %v3460 = vpop.permute.xlu0 %3459
  %3463 = vrot.lane.b32.xlu0 %v3387, 116
  %v3464 = vpop.permute.xlu0 %3463
  %3465 = vrot.lane.b32.xlu0 %v3392, 116
  %v3466 = vpop.permute.xlu0 %3465
  %3469 = vrot.lane.b32.xlu0 %v3387, 115
  %v3470 = vpop.permute.xlu0 %3469
  %3471 = vrot.lane.b32.xlu0 %v3392, 115
  %v3472 = vpop.permute.xlu0 %3471
  %3475 = vrot.lane.b32.xlu0 %v3387, 114
  %v3476 = vpop.permute.xlu0 %3475
  %3477 = vrot.lane.b32.xlu0 %v3392, 114
  %v3478 = vpop.permute.xlu0 %3477
  %3481 = vrot.lane.b32.xlu0 %v3387, 113
  %v3482 = vpop.permute.xlu0 %3481
  %3483 = vrot.lane.b32.xlu0 %v3392, 113
  %v3484 = vpop.permute.xlu0 %3483
  %3487 = vmatprep.subr.mxu0 0.0
  %3488 = vmatpush1.msra.mxu0 %v3387
  %3489 = vmatprep.subr.mxu0 0.0
  %3490 = vmatpush1.msra.mxu0 %v3392
  %3491 = vmatprep.subr.mxu0 0.0
  %3492 = vmatpush1.msra.mxu0 %v3398
  %3493 = vmatprep.subr.mxu0 0.0
  %3494 = vmatpush1.msra.mxu0 %v3400
  %3495 = vmatprep.subr.mxu0 0.0
  %3496 = vmatpush1.msra.mxu0 %v3404
  %3497 = vmatprep.subr.mxu0 0.0
  %3498 = vmatpush1.msra.mxu0 %v3406
  %3499 = vmatprep.subr.mxu0 0.0
  %3500 = vmatpush1.msra.mxu0 %v3410
  %3501 = vmatprep.subr.mxu0 0.0
  %3502 = vmatpush1.msra.mxu0 %v3412
  %3503 = vmatprep.subr.mxu0 0.0
  %3504 = vmatpush1.msra.mxu0 %v3416
  %3505 = vmatprep.subr.mxu0 0.0
  %3506 = vmatpush1.msra.mxu0 %v3418
  %3507 = vmatprep.subr.mxu0 0.0
  %3508 = vmatpush1.msra.mxu0 %v3422
  %3509 = vmatprep.subr.mxu0 0.0
  %3510 = vmatpush1.msra.mxu0 %v3424
  %3511 = vmatprep.subr.mxu0 0.0
  %3512 = vmatpush1.msra.mxu0 %v3428
  %3513 = vmatprep.subr.mxu0 0.0
  %3514 = vmatpush1.msra.mxu0 %v3430
  %3515 = vmatprep.subr.mxu0 0.0
  %3516 = vmatpush1.msra.mxu0 %v3434
  %3517 = vmatprep.subr.mxu0 0.0
  %3518 = vmatpush1.msra.mxu0 %v3436
  %3519 = vmatprep.subr.mxu0 0.0
  %3520 = vmatpush1.msra.mxu0 %v3440
  %3521 = vmatprep.subr.mxu0 0.0
  %3522 = vmatpush1.msra.mxu0 %v3442
  %3523 = vmatprep.subr.mxu0 0.0
  %3524 = vmatpush1.msra.mxu0 %v3446
  %3525 = vmatprep.subr.mxu0 0.0
  %3526 = vmatpush1.msra.mxu0 %v3448
  %3527 = vmatprep.subr.mxu0 0.0
  %3528 = vmatpush1.msra.mxu0 %v3452
  %3529 = vmatprep.subr.mxu0 0.0
  %3530 = vmatpush1.msra.mxu0 %v3454
  %3531 = vmatprep.subr.mxu0 0.0
  %3532 = vmatpush1.msra.mxu0 %v3458
  %3533 = vmatprep.subr.mxu0 0.0
  %3534 = vmatpush1.msra.mxu0 %v3460
  %3535 = vmatprep.subr.mxu0 0.0
  %3536 = vmatpush1.msra.mxu0 %v3464
  %3537 = vmatprep.subr.mxu0 0.0
  %3538 = vmatpush1.msra.mxu0 %v3466
  %3539 = vmatprep.subr.mxu0 0.0
  %3540 = vmatpush1.msra.mxu0 %v3470
  %3541 = vmatprep.subr.mxu0 0.0
  %3542 = vmatpush1.msra.mxu0 %v3472
  %3543 = vmatprep.subr.mxu0 0.0
  %3544 = vmatpush1.msra.mxu0 %v3476
  %3545 = vmatprep.subr.mxu0 0.0
  %3546 = vmatpush1.msra.mxu0 %v3478
  %3547 = vmatprep.subr.mxu0 0.0
  %3548 = vmatpush1.msra.mxu0 %v3482
  %3549 = vmatprep.subr.mxu0 0.0
  %3550 = vmatpush1.msra.mxu0 %v3484
  %3551 = vmatprep.mubr.f32.mxu0 %v235
  %3552 = vmatmul.mubr.f32.gmra.mrb[0].mxu0 %v234
  %v3553 = vpop.f32.mrb[0].mxu0
  %v3554 = vadd.f32 %v1814, %v3553
  %v3555 = vpop.f32.mrb[0].mxu0
  %3556 = vmatprep.mubr.f32.mxu0 %v237
  %3557 = vmatmul.mubr.f32.gmra.mrb[0].mxu0 %v236
  %v3558 = vpop.f32.mrb[0].mxu0
  %v3559 = vadd.f32 %v1819, %v3558
  %v3560 = vpop.f32.mrb[0].mxu0
  %3561 = vmatprep.mubr.f32.mxu0 %v239
  %3562 = vmatmul.mubr.f32.gmra.mrb[0].mxu0 %v238
  %v3563 = vpop.f32.mrb[0].mxu0
  %v3564 = vadd.f32 %v1824, %v3563
  %v3565 = vpop.f32.mrb[0].mxu0
  %3566 = vmatprep.mubr.f32.mxu0 %v241
  %3567 = vmatmul.mubr.f32.gmra.mrb[0].mxu0 %v240
  %v3568 = vpop.f32.mrb[0].mxu0
  %v3569 = vadd.f32 %v1829, %v3568
  %v3570 = vpop.f32.mrb[0].mxu0
  %3571 = vmatprep.mubr.f32.mxu0 %v243
  %3572 = vmatmul.mubr.f32.gmra.mrb[0].mxu0 %v242
  %v3573 = vpop.f32.mrb[0].mxu0
  %v3574 = vadd.f32 %v1834, %v3573
  %v3575 = vpop.f32.mrb[0].mxu0
  %3576 = vmatprep.mubr.f32.mxu0 %v245
  %3577 = vmatmul.mubr.f32.gmra.mrb[0].mxu0 %v244
  %v3578 = vpop.f32.mrb[0].mxu0
  %v3579 = vadd.f32 %v1839, %v3578
  %v3580 = vpop.f32.mrb[0].mxu0
  %3581 = vmatprep.mubr.f32.mxu0 %v247
  %3582 = vmatmul.mubr.f32.gmra.mrb[0].mxu0 %v246
  %v3583 = vpop.f32.mrb[0].mxu0
  %v3584 = vadd.f32 %v1844, %v3583
  %v3585 = vpop.f32.mrb[0].mxu0
  %3586 = vmatprep.mubr.f32.mxu0 %v249
  %3587 = vmatmul.mubr.f32.gmra.mrb[0].mxu0 %v248
  %v3588 = vpop.f32.mrb[0].mxu0
  %v3589 = vadd.f32 %v1849, %v3588
  %v3590 = vpop.f32.mrb[0].mxu0
  %3591 = vmatprep.mubr.f32.mxu0 %v251
  %3592 = vmatmul.mubr.f32.gmra.mrb[0].mxu0 %v250
  %v3593 = vpop.f32.mrb[0].mxu0
  %v3594 = vadd.f32 %v1854, %v3593
  %v3595 = vpop.f32.mrb[0].mxu0
  %3596 = vmatprep.mubr.f32.mxu0 %v253
  %3597 = vmatmul.mubr.f32.gmra.mrb[0].mxu0 %v252
  %v3598 = vpop.f32.mrb[0].mxu0
  %v3599 = vadd.f32 %v1859, %v3598
  %v3600 = vpop.f32.mrb[0].mxu0
  %3601 = vmatprep.mubr.f32.mxu0 %v255
  %3602 = vmatmul.mubr.f32.gmra.mrb[0].mxu0 %v254
  %v3603 = vpop.f32.mrb[0].mxu0
  %v3604 = vadd.f32 %v1864, %v3603
  %v3605 = vpop.f32.mrb[0].mxu0
  %3606 = vmatprep.mubr.f32.mxu0 %v257
  %3607 = vmatmul.mubr.f32.gmra.mrb[0].mxu0 %v256
  %v3608 = vpop.f32.mrb[0].mxu0
  %v3609 = vadd.f32 %v1869, %v3608
  %v3610 = vpop.f32.mrb[0].mxu0
  %3611 = vmatprep.mubr.f32.mxu0 %v259
  %3612 = vmatmul.mubr.f32.gmra.mrb[0].mxu0 %v258
  %v3613 = vpop.f32.mrb[0].mxu0
  %v3614 = vadd.f32 %v1874, %v3613
  %v3615 = vpop.f32.mrb[0].mxu0
  %3616 = vmatprep.mubr.f32.mxu0 %v261
  %3617 = vmatmul.mubr.f32.gmra.mrb[0].mxu0 %v260
  %v3618 = vpop.f32.mrb[0].mxu0
  %v3619 = vadd.f32 %v1879, %v3618
  %v3620 = vpop.f32.mrb[0].mxu0
  %3621 = vmatprep.mubr.f32.mxu0 %v263
  %3622 = vmatmul.mubr.f32.gmra.mrb[0].mxu0 %v262
  %v3623 = vpop.f32.mrb[0].mxu0
  %v3624 = vadd.f32 %v1884, %v3623
  %v3625 = vpop.f32.mrb[0].mxu0
  %3626 = vdwg.mxu0
  %v3627 = vtanh.pop %v3554
  %v3628 = vtanh.pop %v3559
  %v3629 = vtanh.pop %v3564
  %v3630 = vtanh.pop %v3569
  %v3631 = vtanh.pop %v3574
  %v3632 = vtanh.pop %v3579
  %v3633 = vtanh.pop %v3584
  %v3634 = vtanh.pop %v3589
  %v3635 = vtanh.pop %v3594
  %v3636 = vtanh.pop %v3599
  %v3637 = vtanh.pop %v3604
  %v3638 = vtanh.pop %v3609
  %v3639 = vtanh.pop %v3614
  %v3640 = vtanh.pop %v3619
  %v3641 = vtanh.pop %v3624
  %3657 = vrot.lane.b32.xlu0 %v3627, 1
  %v3658 = vpop.permute.xlu0 %3657
  %3659 = vrot.lane.b32.xlu0 %v3628, 1
  %v3660 = vpop.permute.xlu0 %3659
  %3661 = vrot.lane.b32.xlu0 %v3629, 1
  %v3662 = vpop.permute.xlu0 %3661
  %3663 = vrot.lane.b32.xlu0 %v3630, 1
  %v3664 = vpop.permute.xlu0 %3663
  %3665 = vrot.lane.b32.xlu0 %v3631, 1
  %v3666 = vpop.permute.xlu0 %3665
  %3667 = vrot.lane.b32.xlu0 %v3632, 1
  %v3668 = vpop.permute.xlu0 %3667
  %3669 = vrot.lane.b32.xlu0 %v3633, 1
  %v3670 = vpop.permute.xlu0 %3669
  %3671 = vrot.lane.b32.xlu0 %v3634, 1
  %v3672 = vpop.permute.xlu0 %3671
  %3673 = vrot.lane.b32.xlu0 %v3635, 1
  %v3674 = vpop.permute.xlu0 %3673
  %3675 = vrot.lane.b32.xlu0 %v3636, 1
  %v3676 = vpop.permute.xlu0 %3675
  %3677 = vrot.lane.b32.xlu0 %v3637, 1
  %v3678 = vpop.permute.xlu0 %3677
  %3679 = vrot.lane.b32.xlu0 %v3638, 1
  %v3680 = vpop.permute.xlu0 %3679
  %3681 = vrot.lane.b32.xlu0 %v3639, 1
  %v3682 = vpop.permute.xlu0 %3681
  %3683 = vrot.lane.b32.xlu0 %v3640, 1
  %v3684 = vpop.permute.xlu0 %3683
  %3685 = vrot.lane.b32.xlu0 %v3641, 1
  %v3686 = vpop.permute.xlu0 %3685
  %vm3702 = vcmask 7168
  %v3703 = vsel %vm3702, %v2026, %v3658
  %v3704 = vsel %vm3702, %v2027, %v3660
  %v3705 = vsel %vm3702, %v2028, %v3662
  %v3706 = vsel %vm3702, %v2029, %v3664
  %v3707 = vsel %vm3702, %v2030, %v3666
  %v3708 = vsel %vm3702, %v2031, %v3668
  %v3709 = vsel %vm3702, %v2032, %v3670
  %v3710 = vsel %vm3702, %v2033, %v3672
  %v3711 = vsel %vm3702, %v2034, %v3674
  %v3712 = vsel %vm3702, %v2035, %v3676
  %v3713 = vsel %vm3702, %v2036, %v3678
  %v3714 = vsel %vm3702, %v2037, %v3680
  %v3715 = vsel %vm3702, %v2038, %v3682
  %v3716 = vsel %vm3702, %v2039, %v3684
  %v3717 = vsel %vm3702, %v2040, %v3686
  %3719 = vset.pattern.permute.xlu0 0
  %3720 = vperm.xlu0 %3719, %v290
  %v3721 = vpop.permute.xlu0 %3720
  %3724 = vset.pattern.permute.xlu0 0
  %3725 = vperm.xlu0 %3724, %v291
  %v3726 = vpop.permute.xlu0 %3725
  %3729 = vset.pattern.permute.xlu0 0
  %3730 = vperm.xlu0 %3729, %v292
  %v3731 = vpop.permute.xlu0 %3730
  %3734 = vset.pattern.permute.xlu0 0
  %3735 = vperm.xlu0 %3734, %v293
  %v3736 = vpop.permute.xlu0 %3735
  %3739 = vset.pattern.permute.xlu0 0
  %3740 = vperm.xlu0 %3739, %v294
  %v3741 = vpop.permute.xlu0 %3740
  %3744 = vset.pattern.permute.xlu0 0
  %3745 = vperm.xlu0 %3744, %v295
  %v3746 = vpop.permute.xlu0 %3745
  %3749 = vset.pattern.permute.xlu0 0
  %3750 = vperm.xlu0 %3749, %v296
  %v3751 = vpop.permute.xlu0 %3750
  %3754 = vset.pattern.permute.xlu0 0
  %3755 = vperm.xlu0 %3754, %v297
  %v3756 = vpop.permute.xlu0 %3755
  %3759 = vset.pattern.permute.xlu0 0
  %3760 = vperm.xlu0 %3759, %v298
  %v3761 = vpop.permute.xlu0 %3760
  %3764 = vset.pattern.permute.xlu0 0
  %3765 = vperm.xlu0 %3764, %v299
  %v3766 = vpop.permute.xlu0 %3765
  %3769 = vset.pattern.permute.xlu0 0
  %3770 = vperm.xlu0 %3769, %v300
  %v3771 = vpop.permute.xlu0 %3770
  %vm3773 = vcmask 982016
  %v3775 = vsel %vm3773, %v279, 0
  %v3778 = vsel %vm3773, %v280, 0
  %v3781 = vsel %vm3773, %v281, 0
  %v3784 = vsel %vm3773, %v282, 0
  %v3787 = vsel %vm3773, %v283, 0
  %v3790 = vsel %vm3773, %v284, 0
  %v3793 = vsel %vm3773, %v285, 0
  %v3796 = vsel %vm3773, %v286, 0
  %v3799 = vsel %vm3773, %v287, 0
  %v3802 = vsel %vm3773, %v288, 0
  %v3805 = vsel %vm3773, %v289, 0
  %3807 = vmatprep.subr.mxu0 0.0
  %3808 = vmatpush1.msra.mxu0 %v3703
  %3809 = vmatprep.subr.mxu0 0.0
  %3810 = vmatpush1.msra.mxu0 %v3704
  %3811 = vmatprep.subr.mxu0 0.0
  %3812 = vmatpush1.msra.mxu0 %v3705
  %3813 = vmatprep.subr.mxu0 0.0
  %3814 = vmatpush1.msra.mxu0 %v3706
  %3815 = vmatprep.subr.mxu0 0.0
  %3816 = vmatpush1.msra.mxu0 %v3707
  %3817 = vmatprep.subr.mxu0 0.0
  %3818 = vmatpush1.msra.mxu0 %v3708
  %3819 = vmatprep.subr.mxu0 0.0
  %3820 = vmatpush1.msra.mxu0 %v3709
  %3821 = vmatprep.subr.mxu0 0.0
  %3822 = vmatpush1.msra.mxu0 %v3710
  %3823 = vmatprep.subr.mxu0 0.0
  %3824 = vmatpush1.msra.mxu0 %v3711
  %3825 = vmatprep.subr.mxu0 0.0
  %3826 = vmatpush1.msra.mxu0 %v3712
  %3827 = vmatprep.subr.mxu0 0.0
  %3828 = vmatpush1.msra.mxu0 %v3713
  %3829 = vmatprep.subr.mxu0 0.0
  %3830 = vmatpush1.msra.mxu0 %v3714
  %3831 = vmatprep.subr.mxu0 0.0
  %3832 = vmatpush1.msra.mxu0 %v3715
  %3833 = vmatprep.subr.mxu0 0.0
  %3834 = vmatpush1.msra.mxu0 %v3716
  %3835 = vmatprep.subr.mxu0 0.0
  %3836 = vmatpush1.msra.mxu0 %v3717
  %3837 = vmatprep.subr.mxu0 0.0
  %3838 = vmatpush1.msra.mxu0 0.0
  %3839 = vmatprep.subr.mxu0 0.0
  %3840 = vmatpush1.msra.mxu0 0.0
  %3841 = vmatprep.subr.mxu0 0.0
  %3842 = vmatpush1.msra.mxu0 0.0
  %3843 = vmatprep.subr.mxu0 0.0
  %3844 = vmatpush1.msra.mxu0 0.0
  %3845 = vmatprep.subr.mxu0 0.0
  %3846 = vmatpush1.msra.mxu0 0.0
  %3847 = vmatprep.subr.mxu0 0.0
  %3848 = vmatpush1.msra.mxu0 0.0
  %3849 = vmatprep.subr.mxu0 0.0
  %3850 = vmatpush1.msra.mxu0 0.0
  %3851 = vmatprep.subr.mxu0 0.0
  %3852 = vmatpush1.msra.mxu0 0.0
  %3853 = vmatprep.subr.mxu0 0.0
  %3854 = vmatpush1.msra.mxu0 0.0
  %3855 = vmatprep.subr.mxu0 0.0
  %3856 = vmatpush1.msra.mxu0 0.0
  %3857 = vmatprep.subr.mxu0 0.0
  %3858 = vmatpush1.msra.mxu0 0.0
  %3859 = vmatprep.subr.mxu0 0.0
  %3860 = vmatpush1.msra.mxu0 0.0
  %3861 = vmatprep.subr.mxu0 0.0
  %3862 = vmatpush1.msra.mxu0 0.0
  %3863 = vmatprep.subr.mxu0 0.0
  %3864 = vmatpush1.msra.mxu0 0.0
  %3865 = vmatprep.subr.mxu0 0.0
  %3866 = vmatpush1.msra.mxu0 0.0
  %3867 = vmatprep.subr.mxu0 0.0
  %3868 = vmatpush1.msra.mxu0 0.0
  %3869 = vmatprep.subr.mxu0 0.0
  %3870 = vmatpush1.msra.mxu0 0.0
  %3871 = vmatprep.mubr.f32.mxu0 0.0
  %3872 = vmatmul.mubr.f32.gmra.mrb[0].mxu0 %v3775
  %v3873 = vpop.f32.mrb[0].mxu0
  %v3874 = vadd.f32 %v3721, %v3873
  %v3875 = vpop.f32.mrb[0].mxu0
  %3876 = vmatprep.mubr.f32.mxu0 0.0
  %3877 = vmatmul.mubr.f32.gmra.mrb[0].mxu0 %v3778
  %v3878 = vpop.f32.mrb[0].mxu0
  %v3879 = vadd.f32 %v3726, %v3878
  %v3880 = vpop.f32.mrb[0].mxu0
  %3881 = vmatprep.mubr.f32.mxu0 0.0
  %3882 = vmatmul.mubr.f32.gmra.mrb[0].mxu0 %v3781
  %v3883 = vpop.f32.mrb[0].mxu0
  %v3884 = vadd.f32 %v3731, %v3883
  %v3885 = vpop.f32.mrb[0].mxu0
  %3886 = vmatprep.mubr.f32.mxu0 0.0
  %3887 = vmatmul.mubr.f32.gmra.mrb[0].mxu0 %v3784
  %v3888 = vpop.f32.mrb[0].mxu0
  %v3889 = vadd.f32 %v3736, %v3888
  %v3890 = vpop.f32.mrb[0].mxu0
  %3891 = vmatprep.mubr.f32.mxu0 0.0
  %3892 = vmatmul.mubr.f32.gmra.mrb[0].mxu0 %v3787
  %v3893 = vpop.f32.mrb[0].mxu0
  %v3894 = vadd.f32 %v3741, %v3893
  %v3895 = vpop.f32.mrb[0].mxu0
  %3896 = vmatprep.mubr.f32.mxu0 0.0
  %3897 = vmatmul.mubr.f32.gmra.mrb[0].mxu0 %v3790
  %v3898 = vpop.f32.mrb[0].mxu0
  %v3899 = vadd.f32 %v3746, %v3898
  %v3900 = vpop.f32.mrb[0].mxu0
  %3901 = vmatprep.mubr.f32.mxu0 0.0
  %3902 = vmatmul.mubr.f32.gmra.mrb[0].mxu0 %v3793
  %v3903 = vpop.f32.mrb[0].mxu0
  %v3904 = vadd.f32 %v3751, %v3903
  %v3905 = vpop.f32.mrb[0].mxu0
  %3906 = vmatprep.mubr.f32.mxu0 0.0
  %3907 = vmatmul.mubr.f32.gmra.mrb[0].mxu0 %v3796
  %v3908 = vpop.f32.mrb[0].mxu0
  %v3909 = vadd.f32 %v3756, %v3908
  %v3910 = vpop.f32.mrb[0].mxu0
  %3911 = vmatprep.mubr.f32.mxu0 0.0
  %3912 = vmatmul.mubr.f32.gmra.mrb[0].mxu0 %v3799
  %v3913 = vpop.f32.mrb[0].mxu0
  %v3914 = vadd.f32 %v3761, %v3913
  %v3915 = vpop.f32.mrb[0].mxu0
  %3916 = vmatprep.mubr.f32.mxu0 0.0
  %3917 = vmatmul.mubr.f32.gmra.mrb[0].mxu0 %v3802
  %v3918 = vpop.f32.mrb[0].mxu0
  %v3919 = vadd.f32 %v3766, %v3918
  %v3920 = vpop.f32.mrb[0].mxu0
  %3921 = vmatprep.mubr.f32.mxu0 0.0
  %3922 = vmatmul.mubr.f32.gmra.mrb[0].mxu0 %v3805
  %v3923 = vpop.f32.mrb[0].mxu0
  %v3924 = vadd.f32 %v3771, %v3923
  %v3925 = vpop.f32.mrb[0].mxu0
  %3926 = vdwg.mxu0
  %v3927 = vtanh.pop %v3874
  %v3928 = vtanh.pop %v3879
  %v3929 = vtanh.pop %v3884
  %v3930 = vtanh.pop %v3889
  %v3931 = vtanh.pop %v3894
  %v3932 = vtanh.pop %v3899
  %v3933 = vtanh.pop %v3904
  %v3934 = vtanh.pop %v3909
  %v3935 = vtanh.pop %v3914
  %v3936 = vtanh.pop %v3919
  %v3937 = vtanh.pop %v3924
  %3939 = vset.pattern.permute.xlu0 0
  %3940 = vperm.xlu0 %3939, %v303
  %v3941 = vpop.permute.xlu0 %3940
  %3944 = vset.pattern.permute.xlu0 0
  %3945 = vperm.xlu0 %3944, %v304
  %v3946 = vpop.permute.xlu0 %3945
  %vm3948 = vcmask 687104
  %v3950 = vsel %vm3948, %v301, 0
  %v3953 = vsel %vm3948, %v302, 0
  %v3956 = vsel %vm718, %v3937, 0
  %3958 = vmatprep.subr.mxu0 0.0
  %3959 = vmatpush1.msra.mxu0 %v3927
  %3960 = vmatprep.subr.mxu0 0.0
  %3961 = vmatpush1.msra.mxu0 %v3928
  %3962 = vmatprep.subr.mxu0 0.0
  %3963 = vmatpush1.msra.mxu0 %v3929
  %3964 = vmatprep.subr.mxu0 0.0
  %3965 = vmatpush1.msra.mxu0 %v3930
  %3966 = vmatprep.subr.mxu0 0.0
  %3967 = vmatpush1.msra.mxu0 %v3931
  %3968 = vmatprep.subr.mxu0 0.0
  %3969 = vmatpush1.msra.mxu0 %v3932
  %3970 = vmatprep.subr.mxu0 0.0
  %3971 = vmatpush1.msra.mxu0 %v3933
  %3972 = vmatprep.subr.mxu0 0.0
  %3973 = vmatpush1.msra.mxu0 %v3934
  %3974 = vmatprep.subr.mxu0 0.0
  %3975 = vmatpush1.msra.mxu0 %v3935
  %3976 = vmatprep.subr.mxu0 0.0
  %3977 = vmatpush1.msra.mxu0 %v3936
  %3978 = vmatprep.subr.mxu0 0.0
  %3979 = vmatpush1.msra.mxu0 %v3956
  %3980 = vmatprep.subr.mxu0 0.0
  %3981 = vmatpush1.msra.mxu0 0.0
  %3982 = vmatprep.subr.mxu0 0.0
  %3983 = vmatpush1.msra.mxu0 0.0
  %3984 = vmatprep.subr.mxu0 0.0
  %3985 = vmatpush1.msra.mxu0 0.0
  %3986 = vmatprep.subr.mxu0 0.0
  %3987 = vmatpush1.msra.mxu0 0.0
  %3988 = vmatprep.subr.mxu0 0.0
  %3989 = vmatpush1.msra.mxu0 0.0
  %3990 = vmatprep.subr.mxu0 0.0
  %3991 = vmatpush1.msra.mxu0 0.0
  %3992 = vmatprep.subr.mxu0 0.0
  %3993 = vmatpush1.msra.mxu0 0.0
  %3994 = vmatprep.subr.mxu0 0.0
  %3995 = vmatpush1.msra.mxu0 0.0
  %3996 = vmatprep.subr.mxu0 0.0
  %3997 = vmatpush1.msra.mxu0 0.0
  %3998 = vmatprep.subr.mxu0 0.0
  %3999 = vmatpush1.msra.mxu0 0.0
  %4000 = vmatprep.subr.mxu0 0.0
  %4001 = vmatpush1.msra.mxu0 0.0
  %4002 = vmatprep.subr.mxu0 0.0
  %4003 = vmatpush1.msra.mxu0 0.0
  %4004 = vmatprep.subr.mxu0 0.0
  %4005 = vmatpush1.msra.mxu0 0.0
  %4006 = vmatprep.subr.mxu0 0.0
  %4007 = vmatpush1.msra.mxu0 0.0
  %4008 = vmatprep.subr.mxu0 0.0
  %4009 = vmatpush1.msra.mxu0 0.0
  %4010 = vmatprep.subr.mxu0 0.0
  %4011 = vmatpush1.msra.mxu0 0.0
  %4012 = vmatprep.subr.mxu0 0.0
  %4013 = vmatpush1.msra.mxu0 0.0
  %4014 = vmatprep.subr.mxu0 0.0
  %4015 = vmatpush1.msra.mxu0 0.0
  %4016 = vmatprep.subr.mxu0 0.0
  %4017 = vmatpush1.msra.mxu0 0.0
  %4018 = vmatprep.subr.mxu0 0.0
  %4019 = vmatpush1.msra.mxu0 0.0
  %4020 = vmatprep.subr.mxu0 0.0
  %4021 = vmatpush1.msra.mxu0 0.0
  %4022 = vmatprep.mubr.f32.mxu0 0.0
  %4023 = vmatmul.mubr.f32.gmra.mrb[0].mxu0 %v3950
  %v4024 = vpop.f32.mrb[0].mxu0
  %v4025 = vadd.f32 %v3941, %v4024
  %v4026 = vpop.f32.mrb[0].mxu0
  %4027 = vmatprep.mubr.f32.mxu0 0.0
  %4028 = vmatmul.mubr.f32.gmra.mrb[0].mxu0 %v3953
  %v4029 = vpop.f32.mrb[0].mxu0
  %v4030 = vadd.f32 %v3946, %v4029
  %v4031 = vpop.f32.mrb[0].mxu0
  %4032 = vdwg.mxu0
  %vm4033 = vcmask 15360
  %4034 = vst.msk [vmem:[%s13] sm:$0xff] %vm4033, %v4025
  %vm4035 = vcmask 9216
  %4036 = vst.msk [vmem:[%s13 + $0x8] sm:$0x3] %vm4035, %v4030
  // Predicated region
  $region54: #{lenet5_forward.1} parent=0 // pred_check
    _
  $region55: #{lenet5_forward.1} parent=0 // pred_check_branch
    %4038 = sbr.rel (0) target = $region57
  $region56: #{lenet5_forward.1} parent=0 // pred_region
    _
  $region57: #{lenet5_forward.1} parent=0 // pred_fallthru
    _
  // Predicated region
  $region58: #{lenet5_forward.1} parent=0 // pred_check
    _
  $region59: #{lenet5_forward.1} parent=0 // pred_check_branch
    %4040 = sbr.rel (0) target = $region61
  $region60: #{lenet5_forward.1} parent=0 // pred_region
    _
  $region61: #{lenet5_forward.1} parent=0 // pred_fallthru
    _

</llo_original>
